<compile_context>
chip_gen: v5e
topology: v5e:2x2
jax: 0.10.0
libtpu: 0.0.40
codegen_flags: <defaults>
</compile_context>

<pallas_src>
import jax
import jax.numpy as jnp
import numpy as np
from jax.experimental import pallas as pl
from jax.experimental.pallas import tpu as pltpu

D = 256            # embedding / hidden dim
K = 5              # number of nodes (kernel_size in the PyTorch forward)
NUM_ACTIONS = 20
EPS = 1e-5         # nn.LayerNorm default eps
_MAX_TILE_B = 32   # batch rows per grid step (keeps permute matmuls negligible)


def _pick_tile_b(B):
    """Batch rows per grid step. One tile for small B; otherwise a
    multiple-of-8 divisor so tiled (tb*K, D) blocks satisfy the (8,128) rule."""
    if B <= _MAX_TILE_B:
        return B
    for t in (32, 24, 16, 8):
        if B % t == 0:
            return t
    # TODO(synk): pad odd large batches instead of falling back to one big tile.
    return B


def _mlp_tail(h1_bf16, w2_ref, b2_ref, g_ref, bt_ref, w3_ref, b3_ref):
    """Linear -> LayerNorm -> Linear (shared tail of edge_mlp / node_mlp).

    Matmul operands are bf16 (MXU-native), accumulation + LayerNorm in f32.
    """
    h2 = jnp.dot(h1_bf16, w2_ref[...], preferred_element_type=jnp.float32) + b2_ref[...]
    mean = jnp.mean(h2, axis=-1, keepdims=True)
    var = jnp.mean(h2 * h2, axis=-1, keepdims=True) - mean * mean   # single pass
    ln = (h2 - mean) * jax.lax.rsqrt(var + EPS) * g_ref[...] + bt_ref[...]
    return jnp.dot(ln.astype(jnp.bfloat16), w3_ref[...],
                   preferred_element_type=jnp.float32) + b3_ref[...]


def transition_kernel(x_ref, a_ref, pm_ref, pmt_ref, tm_ref,
                      ew1a_ref, ew1b_ref, eb1_ref, ew2_ref, eb2_ref,
                      eg_ref, ebt_ref, ew3_ref, eb3_ref,
                      nw1a_ref, nw1b_ref, nw1c_ref, nb1_ref, nw2_ref, nb2_ref,
                      ng_ref, nbt_ref, nw3_ref, nb3_ref,
                      out_ref, h_ref):
    R = x_ref.shape[0]          # K * tb rows in this batch tile
    tb = R // K

    # Batch-major rows (b, i) -> node-major rows (i, b), done as an exact 0/1
    # f32 matmul on the MXU (no wrapper transpose, no vector reshape).
    xs = jnp.dot(pm_ref[...], x_ref[...], preferred_element_type=jnp.float32)
    xsb = xs.astype(jnp.bfloat16)

    # Edge MLP layer 1, hoisted: each concat-half weight hits every node once.
    p_src = jnp.dot(xsb, ew1a_ref[...], preferred_element_type=jnp.float32)
    q_tgt = jnp.dot(xsb, ew1b_ref[...], preferred_element_type=jnp.float32)
    b1e = eb1_ref[...]

    # Build all 20 ordered pairs (i, j != i) into one (20*tb, D) VMEM stack.
    # Shift-d block holds pairs (i, (i+d) % K): in node-major row order that is
    # a rotation by d*tb rows, expressed as two contiguous slices.
    for d in range(1, K):
        off = (d - 1) * R
        s = d * tb
        hi = jnp.maximum(p_src[:R - s, :] + q_tgt[s:, :] + b1e, 0.0)
        lo = jnp.maximum(p_src[R - s:, :] + q_tgt[:s, :] + b1e, 0.0)
        h_ref[pl.ds(off, R - s), :] = hi
        h_ref[pl.ds(off + R - s, s), :] = lo

    # Edge tail on the full (20*tb, D) stack (big-M matmuls), then reduce the
    # 4 shift blocks into sigma -- stays in VMEM, never written to HBM.
    edges = _mlp_tail(h_ref[...].astype(jnp.bfloat16),
                      ew2_ref, eb2_ref, eg_ref, ebt_ref, ew3_ref, eb3_ref)
    sigma = (edges[0:R, :] + edges[R:2 * R, :]
             + edges[2 * R:3 * R, :] + edges[3 * R:4 * R, :])

    # Node MLP: action-embedding matmul hoisted to a single (tb, D) matmul and
    # replicated across the K nodes with an exact 0/1 tile matrix.
    aeh = jnp.dot(a_ref[...].astype(jnp.bfloat16), nw1b_ref[...],
                  preferred_element_type=jnp.float32)
    ae_tiled = jnp.dot(tm_ref[...], aeh, preferred_element_type=jnp.float32)
    h1 = jnp.dot(xsb, nw1a_ref[...], preferred_element_type=jnp.float32)
    h1 = h1 + jnp.dot(sigma.astype(jnp.bfloat16), nw1c_ref[...],
                      preferred_element_type=jnp.float32)
    h1 = jnp.maximum(h1 + ae_tiled + nb1_ref[...], 0.0)
    node = _mlp_tail(h1.astype(jnp.bfloat16),
                     nw2_ref, nb2_ref, ng_ref, nbt_ref, nw3_ref, nb3_ref)

    # Node-major -> batch-major (exact f32 permutation) and store lane-dense.
    out_ref[...] = jnp.dot(pmt_ref[...], node, preferred_element_type=jnp.float32)


def transition_forward(params, x, action):
    """x: (B, K, D) float32, action: (B,) int32 -> (B, K, D) float32."""
    B = x.shape[0]
    assert x.shape[1:] == (K, D)
    tb = _pick_tile_b(B)
    nb = B // tb
    R = K * tb

    # nn.Embedding row gather: tiny data-dependent gather, left to XLA glue.
    act_emb = params["emb"][action]                        # (B, D)

    # (B, K, D) -> (B*K, D) is a free row-major reshape (no transpose).
    x_flat = x.reshape(B * K, D).astype(jnp.float32)

    # Trace-time constant 0/1 matrices:
    #   pm  : batch-major rows (b, i) -> node-major rows (i, b)
    #   pmt : node-major rows  (i, b) -> batch-major rows (b, i)
    #   tm  : tiles the (tb, D) action-embedding hidden across the K nodes
    rows = np.arange(R)
    i_idx, b_idx = rows // tb, rows % tb
    pm = np.zeros((R, R), np.float32)
    pm[rows, b_idx * K + i_idx] = 1.0
    pmt = np.ascontiguousarray(pm.T)
    tm = np.zeros((R, tb), np.float32)
    tm[rows, b_idx] = 1.0
    pm, pmt, tm = jnp.asarray(pm), jnp.asarray(pmt), jnp.asarray(tm)

    e, n = params["edge"], params["node"]
    wb = lambda a: a.astype(jnp.bfloat16)                  # MXU-native weights
    edge_args = (wb(e["w1a"]), wb(e["w1b"]), e["b1"], wb(e["w2"]), e["b2"],
                 e["gamma"], e["beta"], wb(e["w3"]), e["b3"])
    node_args = (wb(n["w1a"]), wb(n["w1b"]), wb(n["w1c"]), n["b1"], wb(n["w2"]),
                 n["b2"], n["gamma"], n["beta"], wb(n["w3"]), n["b3"])

    def full2d(a):
        return pl.BlockSpec(a.shape, lambda g: (0, 0))

    in_specs = ([pl.BlockSpec((R, D), lambda g: (g, 0)),   # x rows of this tile
                 pl.BlockSpec((tb, D), lambda g: (g, 0)),  # action embedding
                 full2d(pm), full2d(pmt), full2d(tm)]
                + [full2d(a) for a in edge_args]
                + [full2d(a) for a in node_args])

    out_flat = pl.pallas_call(
        transition_kernel,
        out_shape=jax.ShapeDtypeStruct((B * K, D), jnp.float32),
        grid_spec=pltpu.PrefetchScalarGridSpec(
            num_scalar_prefetch=0,
            grid=(nb,),
            in_specs=in_specs,
            out_specs=pl.BlockSpec((R, D), lambda g: (g, 0)),
            scratch_shapes=[pltpu.VMEM(((K - 1) * R, D), jnp.float32)]),
        compiler_params=pltpu.CompilerParams(
            dimension_semantics=("parallel",),             # batch tiles -> megacore
            vmem_limit_bytes=32 * 1024 * 1024),
    )(x_flat, act_emb, pm, pmt, tm, *edge_args, *node_args)

    return out_flat.reshape(B, K, D)


def init_params(key):
    ks = iter(jax.random.split(key, 20))

    def w(shape, scale=0.05):
        return jax.random.normal(next(ks), shape, jnp.float32) * scale

    def mlp(n_in_parts):
        p = {}
        for name in ("w1a", "w1b", "w1c")[:n_in_parts]:
            p[name] = w((D, D))
        p["b1"] = w((1, D), 0.02)
        p["w2"] = w((D, D))
        p["b2"] = w((1, D), 0.02)
        p["gamma"] = jnp.ones((1, D), jnp.float32)     # LayerNorm defaults
        p["beta"] = jnp.zeros((1, D), jnp.float32)
        p["w3"] = w((D, D))
        p["b3"] = w((1, D), 0.02)
        return p

    return {
        "emb": jax.random.normal(next(ks), (NUM_ACTIONS, D), jnp.float32),
        "edge": mlp(2),    # edge_mlp first Linear takes 2*D inputs
        "node": mlp(3),    # node_mlp first Linear takes 3*D inputs
    }


def ref_forward(params, x, action, matmul_dtype=jnp.float32):
    """Pure-JAX reference mirroring the PyTorch forward loop structure.

    matmul_dtype=bfloat16 reproduces the kernel's MXU operand precision
    (f32 accumulation) for a tight, precision-matched comparison.
    """
    e, n = params["edge"], params["node"]

    def dot(a, wm):
        return jnp.dot(a.astype(matmul_dtype), wm.astype(matmul_dtype),
                       preferred_element_type=jnp.float32)

    def tail(p, h1):
        h1 = jnp.maximum(h1, 0.0)
        h2 = dot(h1, p["w2"]) + p["b2"]
        mean = h2.mean(-1, keepdims=True)
        var = ((h2 - mean) ** 2).mean(-1, keepdims=True)
        ln = (h2 - mean) / jnp.sqrt(var + EPS) * p["gamma"] + p["beta"]
        return dot(ln, p["w3"]) + p["b3"]

    emb = params["emb"][action]                      # (B, D)

    sigma = []
    for i in range(K):
        acc = 0.0
        for j in range(K):
            if i != j:
                h1 = dot(x[:, i], e["w1a"]) + dot(x[:, j], e["w1b"]) + e["b1"]
                acc = acc + tail(e, h1)
        sigma.append(acc)
    sigma = jnp.stack(sigma, axis=1)                 # (B, K, D)

    outs = []
    for i in range(K):
        h1 = (dot(x[:, i], n["w1a"]) + dot(emb, n["w1b"])
              + dot(sigma[:, i], n["w1c"]) + n["b1"])
        outs.append(tail(n, h1))
    return jnp.stack(outs, axis=1)                   # (B, K, D)


if __name__ == "__main__":
    key = jax.random.PRNGKey(0)
    kp, kx, ka = jax.random.split(key, 3)

    params = init_params(kp)
    B = 2
    x = jax.random.normal(kx, (B, K, D), jnp.float32)
    action = jax.random.randint(ka, (B,), 0, NUM_ACTIONS)

    fwd = jax.jit(transition_forward)
    out = jax.block_until_ready(fwd(params, x, action))
    assert out.shape == (B, K, D)

    # Precision-matched check: reference with the same bf16 MXU operands.
    ref_matched = ref_forward(params, x, action, matmul_dtype=jnp.bfloat16)
    np.testing.assert_allclose(np.asarray(out), np.asarray(ref_matched),
                               rtol=5e-3, atol=5e-3)

    # Loose sanity bound against the pure-f32 reference (bf16 matmul rounding).
    ref_f32 = ref_forward(params, x, action)
    np.testing.assert_allclose(np.asarray(out), np.asarray(ref_f32),
                               rtol=1e-1, atol=1e-1)

    print("KERNEL_OK")
</pallas_src>

<mosaic_0001>
module attributes {stable_mosaic.version = 11 : i64} {
  func.func @transition_kernel(%arg0: i32, %arg1: memref<10x256xf32, #tpu.memory_space<vmem>>, %arg2: memref<2x256xf32, #tpu.memory_space<vmem>>, %arg3: memref<10x10xf32, #tpu.memory_space<vmem>>, %arg4: memref<10x10xf32, #tpu.memory_space<vmem>>, %arg5: memref<10x2xf32, #tpu.memory_space<vmem>>, %arg6: memref<256x256xbf16, #tpu.memory_space<vmem>>, %arg7: memref<256x256xbf16, #tpu.memory_space<vmem>>, %arg8: memref<1x256xf32, #tpu.memory_space<vmem>>, %arg9: memref<256x256xbf16, #tpu.memory_space<vmem>>, %arg10: memref<1x256xf32, #tpu.memory_space<vmem>>, %arg11: memref<1x256xf32, #tpu.memory_space<vmem>>, %arg12: memref<1x256xf32, #tpu.memory_space<vmem>>, %arg13: memref<256x256xbf16, #tpu.memory_space<vmem>>, %arg14: memref<1x256xf32, #tpu.memory_space<vmem>>, %arg15: memref<256x256xbf16, #tpu.memory_space<vmem>>, %arg16: memref<256x256xbf16, #tpu.memory_space<vmem>>, %arg17: memref<256x256xbf16, #tpu.memory_space<vmem>>, %arg18: memref<1x256xf32, #tpu.memory_space<vmem>>, %arg19: memref<256x256xbf16, #tpu.memory_space<vmem>>, %arg20: memref<1x256xf32, #tpu.memory_space<vmem>>, %arg21: memref<1x256xf32, #tpu.memory_space<vmem>>, %arg22: memref<1x256xf32, #tpu.memory_space<vmem>>, %arg23: memref<256x256xbf16, #tpu.memory_space<vmem>>, %arg24: memref<1x256xf32, #tpu.memory_space<vmem>>, %arg25: memref<10x256xf32, #tpu.memory_space<vmem>>, %arg26: memref<40x256xf32, #tpu.memory_space<vmem>>) attributes {dimension_semantics = [#tpu.dimension_semantics<parallel>], iteration_bounds = array<i64: 1>, scalar_prefetch = 0 : i64, scratch_operands = 1 : i64, tpu.core_type = #tpu.core_type<tc>, window_params = [{transform_indices = @transform_0, window_bounds = array<i64: 10, 256>}, {transform_indices = @transform_1, window_bounds = array<i64: 2, 256>}, {pipeline_mode = #tpu.pipeline_mode<synchronous>, transform_indices = @transform_2, window_bounds = array<i64: 10, 10>}, {pipeline_mode = #tpu.pipeline_mode<synchronous>, transform_indices = @transform_3, window_bounds = array<i64: 10, 10>}, {pipeline_mode = #tpu.pipeline_mode<synchronous>, transform_indices = @transform_4, window_bounds = array<i64: 10, 2>}, {pipeline_mode = #tpu.pipeline_mode<synchronous>, transform_indices = @transform_5, window_bounds = array<i64: 256, 256>}, {pipeline_mode = #tpu.pipeline_mode<synchronous>, transform_indices = @transform_6, window_bounds = array<i64: 256, 256>}, {pipeline_mode = #tpu.pipeline_mode<synchronous>, transform_indices = @transform_7, window_bounds = array<i64: 1, 256>}, {pipeline_mode = #tpu.pipeline_mode<synchronous>, transform_indices = @transform_8, window_bounds = array<i64: 256, 256>}, {pipeline_mode = #tpu.pipeline_mode<synchronous>, transform_indices = @transform_9, window_bounds = array<i64: 1, 256>}, {pipeline_mode = #tpu.pipeline_mode<synchronous>, transform_indices = @transform_10, window_bounds = array<i64: 1, 256>}, {pipeline_mode = #tpu.pipeline_mode<synchronous>, transform_indices = @transform_11, window_bounds = array<i64: 1, 256>}, {pipeline_mode = #tpu.pipeline_mode<synchronous>, transform_indices = @transform_12, window_bounds = array<i64: 256, 256>}, {pipeline_mode = #tpu.pipeline_mode<synchronous>, transform_indices = @transform_13, window_bounds = array<i64: 1, 256>}, {pipeline_mode = #tpu.pipeline_mode<synchronous>, transform_indices = @transform_14, window_bounds = array<i64: 256, 256>}, {pipeline_mode = #tpu.pipeline_mode<synchronous>, transform_indices = @transform_15, window_bounds = array<i64: 256, 256>}, {pipeline_mode = #tpu.pipeline_mode<synchronous>, transform_indices = @transform_16, window_bounds = array<i64: 256, 256>}, {pipeline_mode = #tpu.pipeline_mode<synchronous>, transform_indices = @transform_17, window_bounds = array<i64: 1, 256>}, {pipeline_mode = #tpu.pipeline_mode<synchronous>, transform_indices = @transform_18, window_bounds = array<i64: 256, 256>}, {pipeline_mode = #tpu.pipeline_mode<synchronous>, transform_indices = @transform_19, window_bounds = array<i64: 1, 256>}, {pipeline_mode = #tpu.pipeline_mode<synchronous>, transform_indices = @transform_20, window_bounds = array<i64: 1, 256>}, {pipeline_mode = #tpu.pipeline_mode<synchronous>, transform_indices = @transform_21, window_bounds = array<i64: 1, 256>}, {pipeline_mode = #tpu.pipeline_mode<synchronous>, transform_indices = @transform_22, window_bounds = array<i64: 256, 256>}, {pipeline_mode = #tpu.pipeline_mode<synchronous>, transform_indices = @transform_23, window_bounds = array<i64: 1, 256>}, {transform_indices = @transform_24, window_bounds = array<i64: 10, 256>}]} {
    %c0 = arith.constant 0 : index
    %c0_0 = arith.constant 0 : index
    %0 = vector.load %arg3[%c0, %c0_0] : memref<10x10xf32, #tpu.memory_space<vmem>>, vector<10x10xf32>
    %c0_1 = arith.constant 0 : index
    %c0_2 = arith.constant 0 : index
    %1 = vector.load %arg1[%c0_1, %c0_2] : memref<10x256xf32, #tpu.memory_space<vmem>>, vector<10x256xf32>
    %cst = arith.constant dense<0.000000e+00> : vector<10x256xf32>
    %2 = tpu.matmul %0, %1, %cst {dimension_numbers = #tpu.dot_dimension_numbers<[1], [0], [0], [1], [0, 0, 1, 1], [], []>} : vector<10x10xf32>, vector<10x256xf32>, vector<10x256xf32> -> vector<10x256xf32>
    %3 = arith.truncf %2 : vector<10x256xf32> to vector<10x256xbf16>
    %c0_3 = arith.constant 0 : index
    %c0_4 = arith.constant 0 : index
    %4 = vector.load %arg6[%c0_3, %c0_4] : memref<256x256xbf16, #tpu.memory_space<vmem>>, vector<256x256xbf16>
    %cst_5 = arith.constant dense<0.000000e+00> : vector<10x256xf32>
    %5 = tpu.matmul %3, %4, %cst_5 {dimension_numbers = #tpu.dot_dimension_numbers<[1], [0], [0], [1], [0, 0, 1, 1], [], []>} : vector<10x256xbf16>, vector<256x256xbf16>, vector<10x256xf32> -> vector<10x256xf32>
    %c0_6 = arith.constant 0 : index
    %c0_7 = arith.constant 0 : index
    %6 = vector.load %arg7[%c0_6, %c0_7] : memref<256x256xbf16, #tpu.memory_space<vmem>>, vector<256x256xbf16>
    %cst_8 = arith.constant dense<0.000000e+00> : vector<10x256xf32>
    %7 = tpu.matmul %3, %6, %cst_8 {dimension_numbers = #tpu.dot_dimension_numbers<[1], [0], [0], [1], [0, 0, 1, 1], [], []>} : vector<10x256xbf16>, vector<256x256xbf16>, vector<10x256xf32> -> vector<10x256xf32>
    %c0_9 = arith.constant 0 : index
    %c0_10 = arith.constant 0 : index
    %8 = vector.load %arg8[%c0_9, %c0_10] : memref<1x256xf32, #tpu.memory_space<vmem>>, vector<1x256xf32>
    %9 = vector.extract_strided_slice %5 {offsets = [0, 0], sizes = [8, 256], strides = [1, 1]} : vector<10x256xf32> to vector<8x256xf32>
    %10 = vector.extract_strided_slice %7 {offsets = [2, 0], sizes = [8, 256], strides = [1, 1]} : vector<10x256xf32> to vector<8x256xf32>
    %11 = arith.addf %9, %10 : vector<8x256xf32>
    %12 = vector.broadcast %8 : vector<1x256xf32> to vector<8x256xf32>
    %13 = arith.addf %11, %12 : vector<8x256xf32>
    %cst_11 = arith.constant 0.000000e+00 : f32
    %14 = vector.broadcast %cst_11 : f32 to vector<8x256xf32>
    %15 = arith.maximumf %13, %14 : vector<8x256xf32>
    %16 = vector.extract_strided_slice %5 {offsets = [8, 0], sizes = [2, 256], strides = [1, 1]} : vector<10x256xf32> to vector<2x256xf32>
    %17 = vector.extract_strided_slice %7 {offsets = [0, 0], sizes = [2, 256], strides = [1, 1]} : vector<10x256xf32> to vector<2x256xf32>
    %18 = arith.addf %16, %17 : vector<2x256xf32>
    %19 = vector.broadcast %8 : vector<1x256xf32> to vector<2x256xf32>
    %20 = arith.addf %18, %19 : vector<2x256xf32>
    %cst_12 = arith.constant 0.000000e+00 : f32
    %21 = vector.broadcast %cst_12 : f32 to vector<2x256xf32>
    %22 = arith.maximumf %20, %21 : vector<2x256xf32>
    %c0_13 = arith.constant 0 : index
    %c0_14 = arith.constant 0 : index
    %23 = vector.load %arg26[%c0_13, %c0_14] : memref<40x256xf32, #tpu.memory_space<vmem>>, vector<8x256xf32>
    tpu.vector_store %arg26[%c0_13, %c0_14], %15 {strides = array<i32>} : memref<40x256xf32, #tpu.memory_space<vmem>>, vector<8x256xf32>,
    %c8 = arith.constant 8 : index
    %c0_15 = arith.constant 0 : index
    %24 = vector.load %arg26[%c8, %c0_15] : memref<40x256xf32, #tpu.memory_space<vmem>>, vector<2x256xf32>
    tpu.vector_store %arg26[%c8, %c0_15], %22 {strides = array<i32>} : memref<40x256xf32, #tpu.memory_space<vmem>>, vector<2x256xf32>,
    %25 = vector.extract_strided_slice %5 {offsets = [0, 0], sizes = [6, 256], strides = [1, 1]} : vector<10x256xf32> to vector<6x256xf32>
    %26 = vector.extract_strided_slice %7 {offsets = [4, 0], sizes = [6, 256], strides = [1, 1]} : vector<10x256xf32> to vector<6x256xf32>
    %27 = arith.addf %25, %26 : vector<6x256xf32>
    %28 = vector.broadcast %8 : vector<1x256xf32> to vector<6x256xf32>
    %29 = arith.addf %27, %28 : vector<6x256xf32>
    %cst_16 = arith.constant 0.000000e+00 : f32
    %30 = vector.broadcast %cst_16 : f32 to vector<6x256xf32>
    %31 = arith.maximumf %29, %30 : vector<6x256xf32>
    %32 = vector.extract_strided_slice %5 {offsets = [6, 0], sizes = [4, 256], strides = [1, 1]} : vector<10x256xf32> to vector<4x256xf32>
    %33 = vector.extract_strided_slice %7 {offsets = [0, 0], sizes = [4, 256], strides = [1, 1]} : vector<10x256xf32> to vector<4x256xf32>
    %34 = arith.addf %32, %33 : vector<4x256xf32>
    %35 = vector.broadcast %8 : vector<1x256xf32> to vector<4x256xf32>
    %36 = arith.addf %34, %35 : vector<4x256xf32>
    %cst_17 = arith.constant 0.000000e+00 : f32
    %37 = vector.broadcast %cst_17 : f32 to vector<4x256xf32>
    %38 = arith.maximumf %36, %37 : vector<4x256xf32>
    %c10 = arith.constant 10 : index
    %c0_18 = arith.constant 0 : index
    %39 = vector.load %arg26[%c10, %c0_18] : memref<40x256xf32, #tpu.memory_space<vmem>>, vector<6x256xf32>
    tpu.vector_store %arg26[%c10, %c0_18], %31 {strides = array<i32>} : memref<40x256xf32, #tpu.memory_space<vmem>>, vector<6x256xf32>,
    %c16 = arith.constant 16 : index
    %c0_19 = arith.constant 0 : index
    %40 = vector.load %arg26[%c16, %c0_19] : memref<40x256xf32, #tpu.memory_space<vmem>>, vector<4x256xf32>
    tpu.vector_store %arg26[%c16, %c0_19], %38 {strides = array<i32>} : memref<40x256xf32, #tpu.memory_space<vmem>>, vector<4x256xf32>,
    %41 = vector.extract_strided_slice %5 {offsets = [0, 0], sizes = [4, 256], strides = [1, 1]} : vector<10x256xf32> to vector<4x256xf32>
    %42 = vector.extract_strided_slice %7 {offsets = [6, 0], sizes = [4, 256], strides = [1, 1]} : vector<10x256xf32> to vector<4x256xf32>
    %43 = arith.addf %41, %42 : vector<4x256xf32>
    %44 = vector.broadcast %8 : vector<1x256xf32> to vector<4x256xf32>
    %45 = arith.addf %43, %44 : vector<4x256xf32>
    %cst_20 = arith.constant 0.000000e+00 : f32
    %46 = vector.broadcast %cst_20 : f32 to vector<4x256xf32>
    %47 = arith.maximumf %45, %46 : vector<4x256xf32>
    %48 = vector.extract_strided_slice %5 {offsets = [4, 0], sizes = [6, 256], strides = [1, 1]} : vector<10x256xf32> to vector<6x256xf32>
    %49 = vector.extract_strided_slice %7 {offsets = [0, 0], sizes = [6, 256], strides = [1, 1]} : vector<10x256xf32> to vector<6x256xf32>
    %50 = arith.addf %48, %49 : vector<6x256xf32>
    %51 = vector.broadcast %8 : vector<1x256xf32> to vector<6x256xf32>
    %52 = arith.addf %50, %51 : vector<6x256xf32>
    %cst_21 = arith.constant 0.000000e+00 : f32
    %53 = vector.broadcast %cst_21 : f32 to vector<6x256xf32>
    %54 = arith.maximumf %52, %53 : vector<6x256xf32>
    %c20 = arith.constant 20 : index
    %c0_22 = arith.constant 0 : index
    %55 = vector.load %arg26[%c20, %c0_22] : memref<40x256xf32, #tpu.memory_space<vmem>>, vector<4x256xf32>
    tpu.vector_store %arg26[%c20, %c0_22], %47 {strides = array<i32>} : memref<40x256xf32, #tpu.memory_space<vmem>>, vector<4x256xf32>,
    %c24 = arith.constant 24 : index
    %c0_23 = arith.constant 0 : index
    %56 = vector.load %arg26[%c24, %c0_23] : memref<40x256xf32, #tpu.memory_space<vmem>>, vector<6x256xf32>
    tpu.vector_store %arg26[%c24, %c0_23], %54 {strides = array<i32>} : memref<40x256xf32, #tpu.memory_space<vmem>>, vector<6x256xf32>,
    %57 = vector.extract_strided_slice %5 {offsets = [0, 0], sizes = [2, 256], strides = [1, 1]} : vector<10x256xf32> to vector<2x256xf32>
    %58 = vector.extract_strided_slice %7 {offsets = [8, 0], sizes = [2, 256], strides = [1, 1]} : vector<10x256xf32> to vector<2x256xf32>
    %59 = arith.addf %57, %58 : vector<2x256xf32>
    %60 = vector.broadcast %8 : vector<1x256xf32> to vector<2x256xf32>
    %61 = arith.addf %59, %60 : vector<2x256xf32>
    %cst_24 = arith.constant 0.000000e+00 : f32
    %62 = vector.broadcast %cst_24 : f32 to vector<2x256xf32>
    %63 = arith.maximumf %61, %62 : vector<2x256xf32>
    %64 = vector.extract_strided_slice %5 {offsets = [2, 0], sizes = [8, 256], strides = [1, 1]} : vector<10x256xf32> to vector<8x256xf32>
    %65 = vector.extract_strided_slice %7 {offsets = [0, 0], sizes = [8, 256], strides = [1, 1]} : vector<10x256xf32> to vector<8x256xf32>
    %66 = arith.addf %64, %65 : vector<8x256xf32>
    %67 = vector.broadcast %8 : vector<1x256xf32> to vector<8x256xf32>
    %68 = arith.addf %66, %67 : vector<8x256xf32>
    %cst_25 = arith.constant 0.000000e+00 : f32
    %69 = vector.broadcast %cst_25 : f32 to vector<8x256xf32>
    %70 = arith.maximumf %68, %69 : vector<8x256xf32>
    %c30 = arith.constant 30 : index
    %c0_26 = arith.constant 0 : index
    %71 = vector.load %arg26[%c30, %c0_26] : memref<40x256xf32, #tpu.memory_space<vmem>>, vector<2x256xf32>
    tpu.vector_store %arg26[%c30, %c0_26], %63 {strides = array<i32>} : memref<40x256xf32, #tpu.memory_space<vmem>>, vector<2x256xf32>,
    %c32 = arith.constant 32 : index
    %c0_27 = arith.constant 0 : index
    %72 = vector.load %arg26[%c32, %c0_27] : memref<40x256xf32, #tpu.memory_space<vmem>>, vector<8x256xf32>
    tpu.vector_store %arg26[%c32, %c0_27], %70 {strides = array<i32>} : memref<40x256xf32, #tpu.memory_space<vmem>>, vector<8x256xf32>,
    %c0_28 = arith.constant 0 : index
    %c0_29 = arith.constant 0 : index
    %73 = vector.load %arg26[%c0_28, %c0_29] : memref<40x256xf32, #tpu.memory_space<vmem>>, vector<40x256xf32>
    %74 = arith.truncf %73 : vector<40x256xf32> to vector<40x256xbf16>
    %c0_30 = arith.constant 0 : index
    %c0_31 = arith.constant 0 : index
    %75 = vector.load %arg9[%c0_30, %c0_31] : memref<256x256xbf16, #tpu.memory_space<vmem>>, vector<256x256xbf16>
    %cst_32 = arith.constant dense<0.000000e+00> : vector<40x256xf32>
    %76 = tpu.matmul %74, %75, %cst_32 {dimension_numbers = #tpu.dot_dimension_numbers<[1], [0], [0], [1], [0, 0, 1, 1], [], []>} : vector<40x256xbf16>, vector<256x256xbf16>, vector<40x256xf32> -> vector<40x256xf32>
    %c0_33 = arith.constant 0 : index
    %c0_34 = arith.constant 0 : index
    %77 = vector.load %arg10[%c0_33, %c0_34] : memref<1x256xf32, #tpu.memory_space<vmem>>, vector<1x256xf32>
    %78 = vector.broadcast %77 : vector<1x256xf32> to vector<40x256xf32>
    %79 = arith.addf %76, %78 : vector<40x256xf32>
    %cst_35 = arith.constant dense<0.000000e+00> : vector<40xf32>
    %80 = vector.multi_reduction <add>, %79, %cst_35 [1] : vector<40x256xf32> to vector<40xf32>
    %81 = vector.shape_cast %80 : vector<40xf32> to vector<40x1xf32>
    %cst_36 = arith.constant 2.560000e+02 : f32
    %82 = vector.broadcast %cst_36 : f32 to vector<40x1xf32>
    %83 = arith.divf %81, %82 : vector<40x1xf32>
    %84 = arith.mulf %79, %79 : vector<40x256xf32>
    %cst_37 = arith.constant dense<0.000000e+00> : vector<40xf32>
    %85 = vector.multi_reduction <add>, %84, %cst_37 [1] : vector<40x256xf32> to vector<40xf32>
    %86 = vector.shape_cast %85 : vector<40xf32> to vector<40x1xf32>
    %cst_38 = arith.constant 2.560000e+02 : f32
    %87 = vector.broadcast %cst_38 : f32 to vector<40x1xf32>
    %88 = arith.divf %86, %87 : vector<40x1xf32>
    %89 = arith.mulf %83, %83 : vector<40x1xf32>
    %90 = arith.subf %88, %89 : vector<40x1xf32>
    %91 = vector.broadcast %83 : vector<40x1xf32> to vector<40x256xf32>
    %92 = arith.subf %79, %91 : vector<40x256xf32>
    %cst_39 = arith.constant 9.99999974E-6 : f32
    %93 = vector.broadcast %cst_39 : f32 to vector<40x1xf32>
    %94 = arith.addf %90, %93 : vector<40x1xf32>
    %95 = math.rsqrt %94 : vector<40x1xf32>
    %96 = vector.broadcast %95 : vector<40x1xf32> to vector<40x256xf32>
    %97 = arith.mulf %92, %96 : vector<40x256xf32>
    %c0_40 = arith.constant 0 : index
    %c0_41 = arith.constant 0 : index
    %98 = vector.load %arg11[%c0_40, %c0_41] : memref<1x256xf32, #tpu.memory_space<vmem>>, vector<1x256xf32>
    %99 = vector.broadcast %98 : vector<1x256xf32> to vector<40x256xf32>
    %100 = arith.mulf %97, %99 : vector<40x256xf32>
    %c0_42 = arith.constant 0 : index
    %c0_43 = arith.constant 0 : index
    %101 = vector.load %arg12[%c0_42, %c0_43] : memref<1x256xf32, #tpu.memory_space<vmem>>, vector<1x256xf32>
    %102 = vector.broadcast %101 : vector<1x256xf32> to vector<40x256xf32>
    %103 = arith.addf %100, %102 : vector<40x256xf32>
    %104 = arith.truncf %103 : vector<40x256xf32> to vector<40x256xbf16>
    %c0_44 = arith.constant 0 : index
    %c0_45 = arith.constant 0 : index
    %105 = vector.load %arg13[%c0_44, %c0_45] : memref<256x256xbf16, #tpu.memory_space<vmem>>, vector<256x256xbf16>
    %cst_46 = arith.constant dense<0.000000e+00> : vector<40x256xf32>
    %106 = tpu.matmul %104, %105, %cst_46 {dimension_numbers = #tpu.dot_dimension_numbers<[1], [0], [0], [1], [0, 0, 1, 1], [], []>} : vector<40x256xbf16>, vector<256x256xbf16>, vector<40x256xf32> -> vector<40x256xf32>
    %c0_47 = arith.constant 0 : index
    %c0_48 = arith.constant 0 : index
    %107 = vector.load %arg14[%c0_47, %c0_48] : memref<1x256xf32, #tpu.memory_space<vmem>>, vector<1x256xf32>
    %108 = vector.broadcast %107 : vector<1x256xf32> to vector<40x256xf32>
    %109 = arith.addf %106, %108 : vector<40x256xf32>
    %110 = vector.extract_strided_slice %109 {offsets = [0, 0], sizes = [10, 256], strides = [1, 1]} : vector<40x256xf32> to vector<10x256xf32>
    %111 = vector.extract_strided_slice %109 {offsets = [10, 0], sizes = [10, 256], strides = [1, 1]} : vector<40x256xf32> to vector<10x256xf32>
    %112 = arith.addf %110, %111 : vector<10x256xf32>
    %113 = vector.extract_strided_slice %109 {offsets = [20, 0], sizes = [10, 256], strides = [1, 1]} : vector<40x256xf32> to vector<10x256xf32>
    %114 = arith.addf %112, %113 : vector<10x256xf32>
    %115 = vector.extract_strided_slice %109 {offsets = [30, 0], sizes = [10, 256], strides = [1, 1]} : vector<40x256xf32> to vector<10x256xf32>
    %116 = arith.addf %114, %115 : vector<10x256xf32>
    %c0_49 = arith.constant 0 : index
    %c0_50 = arith.constant 0 : index
    %117 = vector.load %arg2[%c0_49, %c0_50] : memref<2x256xf32, #tpu.memory_space<vmem>>, vector<2x256xf32>
    %118 = arith.truncf %117 : vector<2x256xf32> to vector<2x256xbf16>
    %c0_51 = arith.constant 0 : index
    %c0_52 = arith.constant 0 : index
    %119 = vector.load %arg16[%c0_51, %c0_52] : memref<256x256xbf16, #tpu.memory_space<vmem>>, vector<256x256xbf16>
    %cst_53 = arith.constant dense<0.000000e+00> : vector<2x256xf32>
    %120 = tpu.matmul %118, %119, %cst_53 {dimension_numbers = #tpu.dot_dimension_numbers<[1], [0], [0], [1], [0, 0, 1, 1], [], []>} : vector<2x256xbf16>, vector<256x256xbf16>, vector<2x256xf32> -> vector<2x256xf32>
    %c0_54 = arith.constant 0 : index
    %c0_55 = arith.constant 0 : index
    %121 = vector.load %arg5[%c0_54, %c0_55] : memref<10x2xf32, #tpu.memory_space<vmem>>, vector<10x2xf32>
    %cst_56 = arith.constant dense<0.000000e+00> : vector<10x256xf32>
    %122 = tpu.matmul %121, %120, %cst_56 {dimension_numbers = #tpu.dot_dimension_numbers<[1], [0], [0], [1], [0, 0, 1, 1], [], []>} : vector<10x2xf32>, vector<2x256xf32>, vector<10x256xf32> -> vector<10x256xf32>
    %c0_57 = arith.constant 0 : index
    %c0_58 = arith.constant 0 : index
    %123 = vector.load %arg15[%c0_57, %c0_58] : memref<256x256xbf16, #tpu.memory_space<vmem>>, vector<256x256xbf16>
    %cst_59 = arith.constant dense<0.000000e+00> : vector<10x256xf32>
    %124 = tpu.matmul %3, %123, %cst_59 {dimension_numbers = #tpu.dot_dimension_numbers<[1], [0], [0], [1], [0, 0, 1, 1], [], []>} : vector<10x256xbf16>, vector<256x256xbf16>, vector<10x256xf32> -> vector<10x256xf32>
    %125 = arith.truncf %116 : vector<10x256xf32> to vector<10x256xbf16>
    %c0_60 = arith.constant 0 : index
    %c0_61 = arith.constant 0 : index
    %126 = vector.load %arg17[%c0_60, %c0_61] : memref<256x256xbf16, #tpu.memory_space<vmem>>, vector<256x256xbf16>
    %cst_62 = arith.constant dense<0.000000e+00> : vector<10x256xf32>
    %127 = tpu.matmul %125, %126, %cst_62 {dimension_numbers = #tpu.dot_dimension_numbers<[1], [0], [0], [1], [0, 0, 1, 1], [], []>} : vector<10x256xbf16>, vector<256x256xbf16>, vector<10x256xf32> -> vector<10x256xf32>
    %128 = arith.addf %124, %127 : vector<10x256xf32>
    %129 = arith.addf %128, %122 : vector<10x256xf32>
    %c0_63 = arith.constant 0 : index
    %c0_64 = arith.constant 0 : index
    %130 = vector.load %arg18[%c0_63, %c0_64] : memref<1x256xf32, #tpu.memory_space<vmem>>, vector<1x256xf32>
    %131 = vector.broadcast %130 : vector<1x256xf32> to vector<10x256xf32>
    %132 = arith.addf %129, %131 : vector<10x256xf32>
    %cst_65 = arith.constant 0.000000e+00 : f32
    %133 = vector.broadcast %cst_65 : f32 to vector<10x256xf32>
    %134 = arith.maximumf %132, %133 : vector<10x256xf32>
    %135 = arith.truncf %134 : vector<10x256xf32> to vector<10x256xbf16>
    %c0_66 = arith.constant 0 : index
    %c0_67 = arith.constant 0 : index
    %136 = vector.load %arg19[%c0_66, %c0_67] : memref<256x256xbf16, #tpu.memory_space<vmem>>, vector<256x256xbf16>
    %cst_68 = arith.constant dense<0.000000e+00> : vector<10x256xf32>
    %137 = tpu.matmul %135, %136, %cst_68 {dimension_numbers = #tpu.dot_dimension_numbers<[1], [0], [0], [1], [0, 0, 1, 1], [], []>} : vector<10x256xbf16>, vector<256x256xbf16>, vector<10x256xf32> -> vector<10x256xf32>
    %c0_69 = arith.constant 0 : index
    %c0_70 = arith.constant 0 : index
    %138 = vector.load %arg20[%c0_69, %c0_70] : memref<1x256xf32, #tpu.memory_space<vmem>>, vector<1x256xf32>
    %139 = vector.broadcast %138 : vector<1x256xf32> to vector<10x256xf32>
    %140 = arith.addf %137, %139 : vector<10x256xf32>
    %cst_71 = arith.constant dense<0.000000e+00> : vector<10xf32>
    %141 = vector.multi_reduction <add>, %140, %cst_71 [1] : vector<10x256xf32> to vector<10xf32>
    %142 = vector.shape_cast %141 : vector<10xf32> to vector<10x1xf32>
    %cst_72 = arith.constant 2.560000e+02 : f32
    %143 = vector.broadcast %cst_72 : f32 to vector<10x1xf32>
    %144 = arith.divf %142, %143 : vector<10x1xf32>
    %145 = arith.mulf %140, %140 : vector<10x256xf32>
    %cst_73 = arith.constant dense<0.000000e+00> : vector<10xf32>
    %146 = vector.multi_reduction <add>, %145, %cst_73 [1] : vector<10x256xf32> to vector<10xf32>
    %147 = vector.shape_cast %146 : vector<10xf32> to vector<10x1xf32>
    %cst_74 = arith.constant 2.560000e+02 : f32
    %148 = vector.broadcast %cst_74 : f32 to vector<10x1xf32>
    %149 = arith.divf %147, %148 : vector<10x1xf32>
    %150 = arith.mulf %144, %144 : vector<10x1xf32>
    %151 = arith.subf %149, %150 : vector<10x1xf32>
    %152 = vector.broadcast %144 : vector<10x1xf32> to vector<10x256xf32>
    %153 = arith.subf %140, %152 : vector<10x256xf32>
    %cst_75 = arith.constant 9.99999974E-6 : f32
    %154 = vector.broadcast %cst_75 : f32 to vector<10x1xf32>
    %155 = arith.addf %151, %154 : vector<10x1xf32>
    %156 = math.rsqrt %155 : vector<10x1xf32>
    %157 = vector.broadcast %156 : vector<10x1xf32> to vector<10x256xf32>
    %158 = arith.mulf %153, %157 : vector<10x256xf32>
    %c0_76 = arith.constant 0 : index
    %c0_77 = arith.constant 0 : index
    %159 = vector.load %arg21[%c0_76, %c0_77] : memref<1x256xf32, #tpu.memory_space<vmem>>, vector<1x256xf32>
    %160 = vector.broadcast %159 : vector<1x256xf32> to vector<10x256xf32>
    %161 = arith.mulf %158, %160 : vector<10x256xf32>
    %c0_78 = arith.constant 0 : index
    %c0_79 = arith.constant 0 : index
    %162 = vector.load %arg22[%c0_78, %c0_79] : memref<1x256xf32, #tpu.memory_space<vmem>>, vector<1x256xf32>
    %163 = vector.broadcast %162 : vector<1x256xf32> to vector<10x256xf32>
    %164 = arith.addf %161, %163 : vector<10x256xf32>
    %165 = arith.truncf %164 : vector<10x256xf32> to vector<10x256xbf16>
    %c0_80 = arith.constant 0 : index
    %c0_81 = arith.constant 0 : index
    %166 = vector.load %arg23[%c0_80, %c0_81] : memref<256x256xbf16, #tpu.memory_space<vmem>>, vector<256x256xbf16>
    %cst_82 = arith.constant dense<0.000000e+00> : vector<10x256xf32>
    %167 = tpu.matmul %165, %166, %cst_82 {dimension_numbers = #tpu.dot_dimension_numbers<[1], [0], [0], [1], [0, 0, 1, 1], [], []>} : vector<10x256xbf16>, vector<256x256xbf16>, vector<10x256xf32> -> vector<10x256xf32>
    %c0_83 = arith.constant 0 : index
    %c0_84 = arith.constant 0 : index
    %168 = vector.load %arg24[%c0_83, %c0_84] : memref<1x256xf32, #tpu.memory_space<vmem>>, vector<1x256xf32>
    %169 = vector.broadcast %168 : vector<1x256xf32> to vector<10x256xf32>
    %170 = arith.addf %167, %169 : vector<10x256xf32>
    %c0_85 = arith.constant 0 : index
    %c0_86 = arith.constant 0 : index
    %171 = vector.load %arg4[%c0_85, %c0_86] : memref<10x10xf32, #tpu.memory_space<vmem>>, vector<10x10xf32>
    %cst_87 = arith.constant dense<0.000000e+00> : vector<10x256xf32>
    %172 = tpu.matmul %171, %170, %cst_87 {dimension_numbers = #tpu.dot_dimension_numbers<[1], [0], [0], [1], [0, 0, 1, 1], [], []>} : vector<10x10xf32>, vector<10x256xf32>, vector<10x256xf32> -> vector<10x256xf32>
    %c0_88 = arith.constant 0 : index
    %c0_89 = arith.constant 0 : index
    %173 = vector.load %arg25[%c0_88, %c0_89] : memref<10x256xf32, #tpu.memory_space<vmem>>, vector<10x256xf32>
    tpu.vector_store %arg25[%c0_88, %c0_89], %172 {strides = array<i32>} : memref<10x256xf32, #tpu.memory_space<vmem>>, vector<10x256xf32>,
    return
  }
  func.func @transform_0(%arg0: i32) -> (i32, i32) {
    %c0_i32 = arith.constant 0 : i32
    %c0_i32_0 = arith.constant 0 : i32
    return %arg0, %c0_i32 : i32, i32
  }
  func.func @transform_1(%arg0: i32) -> (i32, i32) {
    %c0_i32 = arith.constant 0 : i32
    %c0_i32_0 = arith.constant 0 : i32
    return %arg0, %c0_i32 : i32, i32
  }
  func.func @transform_2(%arg0: i32) -> (i32, i32) {
    %c0_i32 = arith.constant 0 : i32
    %c0_i32_0 = arith.constant 0 : i32
    %c0_i32_1 = arith.constant 0 : i32
    return %c0_i32, %c0_i32_0 : i32, i32
  }
  func.func @transform_3(%arg0: i32) -> (i32, i32) {
    %c0_i32 = arith.constant 0 : i32
    %c0_i32_0 = arith.constant 0 : i32
    %c0_i32_1 = arith.constant 0 : i32
    return %c0_i32, %c0_i32_0 : i32, i32
  }
  func.func @transform_4(%arg0: i32) -> (i32, i32) {
    %c0_i32 = arith.constant 0 : i32
    %c0_i32_0 = arith.constant 0 : i32
    %c0_i32_1 = arith.constant 0 : i32
    return %c0_i32, %c0_i32_0 : i32, i32
  }
  func.func @transform_5(%arg0: i32) -> (i32, i32) {
    %c0_i32 = arith.constant 0 : i32
    %c0_i32_0 = arith.constant 0 : i32
    %c0_i32_1 = arith.constant 0 : i32
    return %c0_i32, %c0_i32_0 : i32, i32
  }
  func.func @transform_6(%arg0: i32) -> (i32, i32) {
    %c0_i32 = arith.constant 0 : i32
    %c0_i32_0 = arith.constant 0 : i32
    %c0_i32_1 = arith.constant 0 : i32
    return %c0_i32, %c0_i32_0 : i32, i32
  }
  func.func @transform_7(%arg0: i32) -> (i32, i32) {
    %c0_i32 = arith.constant 0 : i32
    %c0_i32_0 = arith.constant 0 : i32
    %c0_i32_1 = arith.constant 0 : i32
    return %c0_i32, %c0_i32_0 : i32, i32
  }
  func.func @transform_8(%arg0: i32) -> (i32, i32) {
    %c0_i32 = arith.constant 0 : i32
    %c0_i32_0 = arith.constant 0 : i32
    %c0_i32_1 = arith.constant 0 : i32
    return %c0_i32, %c0_i32_0 : i32, i32
  }
  func.func @transform_9(%arg0: i32) -> (i32, i32) {
    %c0_i32 = arith.constant 0 : i32
    %c0_i32_0 = arith.constant 0 : i32
    %c0_i32_1 = arith.constant 0 : i32
    return %c0_i32, %c0_i32_0 : i32, i32
  }
  func.func @transform_10(%arg0: i32) -> (i32, i32) {
    %c0_i32 = arith.constant 0 : i32
    %c0_i32_0 = arith.constant 0 : i32
    %c0_i32_1 = arith.constant 0 : i32
    return %c0_i32, %c0_i32_0 : i32, i32
  }
  func.func @transform_11(%arg0: i32) -> (i32, i32) {
    %c0_i32 = arith.constant 0 : i32
    %c0_i32_0 = arith.constant 0 : i32
    %c0_i32_1 = arith.constant 0 : i32
    return %c0_i32, %c0_i32_0 : i32, i32
  }
  func.func @transform_12(%arg0: i32) -> (i32, i32) {
    %c0_i32 = arith.constant 0 : i32
    %c0_i32_0 = arith.constant 0 : i32
    %c0_i32_1 = arith.constant 0 : i32
    return %c0_i32, %c0_i32_0 : i32, i32
  }
  func.func @transform_13(%arg0: i32) -> (i32, i32) {
    %c0_i32 = arith.constant 0 : i32
    %c0_i32_0 = arith.constant 0 : i32
    %c0_i32_1 = arith.constant 0 : i32
    return %c0_i32, %c0_i32_0 : i32, i32
  }
  func.func @transform_14(%arg0: i32) -> (i32, i32) {
    %c0_i32 = arith.constant 0 : i32
    %c0_i32_0 = arith.constant 0 : i32
    %c0_i32_1 = arith.constant 0 : i32
    return %c0_i32, %c0_i32_0 : i32, i32
  }
  func.func @transform_15(%arg0: i32) -> (i32, i32) {
    %c0_i32 = arith.constant 0 : i32
    %c0_i32_0 = arith.constant 0 : i32
    %c0_i32_1 = arith.constant 0 : i32
    return %c0_i32, %c0_i32_0 : i32, i32
  }
  func.func @transform_16(%arg0: i32) -> (i32, i32) {
    %c0_i32 = arith.constant 0 : i32
    %c0_i32_0 = arith.constant 0 : i32
    %c0_i32_1 = arith.constant 0 : i32
    return %c0_i32, %c0_i32_0 : i32, i32
  }
  func.func @transform_17(%arg0: i32) -> (i32, i32) {
    %c0_i32 = arith.constant 0 : i32
    %c0_i32_0 = arith.constant 0 : i32
    %c0_i32_1 = arith.constant 0 : i32
    return %c0_i32, %c0_i32_0 : i32, i32
  }
  func.func @transform_18(%arg0: i32) -> (i32, i32) {
    %c0_i32 = arith.constant 0 : i32
    %c0_i32_0 = arith.constant 0 : i32
    %c0_i32_1 = arith.constant 0 : i32
    return %c0_i32, %c0_i32_0 : i32, i32
  }
  func.func @transform_19(%arg0: i32) -> (i32, i32) {
    %c0_i32 = arith.constant 0 : i32
    %c0_i32_0 = arith.constant 0 : i32
    %c0_i32_1 = arith.constant 0 : i32
    return %c0_i32, %c0_i32_0 : i32, i32
  }
  func.func @transform_20(%arg0: i32) -> (i32, i32) {
    %c0_i32 = arith.constant 0 : i32
    %c0_i32_0 = arith.constant 0 : i32
    %c0_i32_1 = arith.constant 0 : i32
    return %c0_i32, %c0_i32_0 : i32, i32
  }
  func.func @transform_21(%arg0: i32) -> (i32, i32) {
    %c0_i32 = arith.constant 0 : i32
    %c0_i32_0 = arith.constant 0 : i32
    %c0_i32_1 = arith.constant 0 : i32
    return %c0_i32, %c0_i32_0 : i32, i32
  }
  func.func @transform_22(%arg0: i32) -> (i32, i32) {
    %c0_i32 = arith.constant 0 : i32
    %c0_i32_0 = arith.constant 0 : i32
    %c0_i32_1 = arith.constant 0 : i32
    return %c0_i32, %c0_i32_0 : i32, i32
  }
  func.func @transform_23(%arg0: i32) -> (i32, i32) {
    %c0_i32 = arith.constant 0 : i32
    %c0_i32_0 = arith.constant 0 : i32
    %c0_i32_1 = arith.constant 0 : i32
    return %c0_i32, %c0_i32_0 : i32, i32
  }
  func.func @transform_24(%arg0: i32) -> (i32, i32) {
    %c0_i32 = arith.constant 0 : i32
    %c0_i32_0 = arith.constant 0 : i32
    return %arg0, %c0_i32 : i32, i32
  }
}

</mosaic_0001>

<llo_original>
// kernel: transition_forward.1
$region0: #{transition_forward.1}
  #allocation0 [shape = 'u32[]', space=smem, size = 0x4, offset = 0x4, fixed_abs, tag = 'smem constant byte address 0x4 - core index']
  #allocation1 [shape = 'u32[72,128]{1,0:T(1,128)}', space=vmem, size = 0x9000, scoped, tag = 'internal scratch']
  #allocation2 [shape = 'f32[40,256]{1,0:T(8,128)}', space=vmem, size = 0xa000, scoped, tag = 'scratch operand']
  %s0 = inlined_call_operand.vmem [shape: f32[10,256], index: 0, kind: input, shape index: {}]
  %s1 = inlined_call_operand.vmem [shape: f32[2,256], index: 1, kind: input, shape index: {}]
  %s2 = inlined_call_operand.vmem [shape: f32[10,10], index: 2, kind: input, shape index: {}]
  %s3 = inlined_call_operand.vmem [shape: f32[10,10], index: 3, kind: input, shape index: {}]
  %s4 = inlined_call_operand.vmem [shape: f32[10,2], index: 4, kind: input, shape index: {}]
  %s5 = inlined_call_operand.vmem [shape: bf16[256,256], index: 5, kind: input, shape index: {}]
  %s6 = inlined_call_operand.vmem [shape: bf16[256,256], index: 6, kind: input, shape index: {}]
  %s7 = inlined_call_operand.vmem [shape: f32[1,256], index: 7, kind: input, shape index: {}]
  %s8 = inlined_call_operand.vmem [shape: bf16[256,256], index: 8, kind: input, shape index: {}]
  %s9 = inlined_call_operand.vmem [shape: f32[1,256], index: 9, kind: input, shape index: {}]
  %s10 = inlined_call_operand.vmem [shape: f32[1,256], index: 10, kind: input, shape index: {}]
  %s11 = inlined_call_operand.vmem [shape: f32[1,256], index: 11, kind: input, shape index: {}]
  %s12 = inlined_call_operand.vmem [shape: bf16[256,256], index: 12, kind: input, shape index: {}]
  %s13 = inlined_call_operand.vmem [shape: f32[1,256], index: 13, kind: input, shape index: {}]
  %s14 = inlined_call_operand.vmem [shape: bf16[256,256], index: 14, kind: input, shape index: {}]
  %s15 = inlined_call_operand.vmem [shape: bf16[256,256], index: 15, kind: input, shape index: {}]
  %s16 = inlined_call_operand.vmem [shape: bf16[256,256], index: 16, kind: input, shape index: {}]
  %s17 = inlined_call_operand.vmem [shape: f32[1,256], index: 17, kind: input, shape index: {}]
  %s18 = inlined_call_operand.vmem [shape: bf16[256,256], index: 18, kind: input, shape index: {}]
  %s19 = inlined_call_operand.vmem [shape: f32[1,256], index: 19, kind: input, shape index: {}]
  %s20 = inlined_call_operand.vmem [shape: f32[1,256], index: 20, kind: input, shape index: {}]
  %s21 = inlined_call_operand.vmem [shape: f32[1,256], index: 21, kind: input, shape index: {}]
  %s22 = inlined_call_operand.vmem [shape: bf16[256,256], index: 22, kind: input, shape index: {}]
  %s23 = inlined_call_operand.vmem [shape: f32[1,256], index: 23, kind: input, shape index: {}]
  %s24 = inlined_call_operand.vmem [shape: f32[10,256], index: 24, kind: output, shape index: {}]
  %s25 = sld [smem:[#allocation0]]
  $region106: #{transition_forward.1} parent=0
    _
  %s27 = ssub.s32 1, %s25
  %s28 = scalar_select 0, %s27, %s25
  // Predicated region
  $region2: #{transition_forward.1} parent=0 // pred_check
    _
  $region3: #{transition_forward.1} parent=0 // pred_check_branch
    %30 = sbr.rel (0) target = $region5
  $region4: #{transition_forward.1} parent=0 // pred_region
    _
  $region5: #{transition_forward.1} parent=0 // pred_fallthru
    _
  // Predicated region
  $region6: #{transition_forward.1} parent=0 // pred_check
    _
  $region7: #{transition_forward.1} parent=0 // pred_check_branch
    %32 = sbr.rel (0) target = $region9
  $region8: #{transition_forward.1} parent=0 // pred_region
    _
  $region9: #{transition_forward.1} parent=0 // pred_fallthru
    _
  // Predicated region
  $region10: #{transition_forward.1} parent=0 // pred_check
    _
  $region11: #{transition_forward.1} parent=0 // pred_check_branch
    %34 = sbr.rel (0) target = $region13
  $region12: #{transition_forward.1} parent=0 // pred_region
    _
  $region13: #{transition_forward.1} parent=0 // pred_fallthru
    _
  // Predicated region
  $region14: #{transition_forward.1} parent=0 // pred_check
    _
  $region15: #{transition_forward.1} parent=0 // pred_check_branch
    %36 = sbr.rel (0) target = $region17
  $region16: #{transition_forward.1} parent=0 // pred_region
    _
  $region17: #{transition_forward.1} parent=0 // pred_fallthru
    _
  // Predicated region
  $region18: #{transition_forward.1} parent=0 // pred_check
    _
  $region19: #{transition_forward.1} parent=0 // pred_check_branch
    %38 = sbr.rel (0) target = $region21
  $region20: #{transition_forward.1} parent=0 // pred_region
    _
  $region21: #{transition_forward.1} parent=0 // pred_fallthru
    _
  // Predicated region
  $region22: #{transition_forward.1} parent=0 // pred_check
    _
  $region23: #{transition_forward.1} parent=0 // pred_check_branch
    %40 = sbr.rel (0) target = $region25
  $region24: #{transition_forward.1} parent=0 // pred_region
    _
  $region25: #{transition_forward.1} parent=0 // pred_fallthru
    _
  // Predicated region
  $region26: #{transition_forward.1} parent=0 // pred_check
    _
  $region27: #{transition_forward.1} parent=0 // pred_check_branch
    %42 = sbr.rel (0) target = $region29
  $region28: #{transition_forward.1} parent=0 // pred_region
    _
  $region29: #{transition_forward.1} parent=0 // pred_fallthru
    _
  // Predicated region
  $region30: #{transition_forward.1} parent=0 // pred_check
    _
  $region31: #{transition_forward.1} parent=0 // pred_check_branch
    %44 = sbr.rel (0) target = $region33
  $region32: #{transition_forward.1} parent=0 // pred_region
    _
  $region33: #{transition_forward.1} parent=0 // pred_fallthru
    _
  // Predicated region
  $region34: #{transition_forward.1} parent=0 // pred_check
    _
  $region35: #{transition_forward.1} parent=0 // pred_check_branch
    %46 = sbr.rel (0) target = $region37
  $region36: #{transition_forward.1} parent=0 // pred_region
    _
  $region37: #{transition_forward.1} parent=0 // pred_fallthru
    _
  // Predicated region
  $region38: #{transition_forward.1} parent=0 // pred_check
    _
  $region39: #{transition_forward.1} parent=0 // pred_check_branch
    %48 = sbr.rel (0) target = $region41
  $region40: #{transition_forward.1} parent=0 // pred_region
    _
  $region41: #{transition_forward.1} parent=0 // pred_fallthru
    _
  // Predicated region
  $region42: #{transition_forward.1} parent=0 // pred_check
    _
  $region43: #{transition_forward.1} parent=0 // pred_check_branch
    %50 = sbr.rel (0) target = $region45
  $region44: #{transition_forward.1} parent=0 // pred_region
    _
  $region45: #{transition_forward.1} parent=0 // pred_fallthru
    _
  // Predicated region
  $region46: #{transition_forward.1} parent=0 // pred_check
    _
  $region47: #{transition_forward.1} parent=0 // pred_check_branch
    %52 = sbr.rel (0) target = $region49
  $region48: #{transition_forward.1} parent=0 // pred_region
    _
  $region49: #{transition_forward.1} parent=0 // pred_fallthru
    _
  // Predicated region
  $region50: #{transition_forward.1} parent=0 // pred_check
    _
  $region51: #{transition_forward.1} parent=0 // pred_check_branch
    %54 = sbr.rel (0) target = $region53
  $region52: #{transition_forward.1} parent=0 // pred_region
    _
  $region53: #{transition_forward.1} parent=0 // pred_fallthru
    _
  // Predicated region
  $region54: #{transition_forward.1} parent=0 // pred_check
    _
  $region55: #{transition_forward.1} parent=0 // pred_check_branch
    %56 = sbr.rel (0) target = $region57
  $region56: #{transition_forward.1} parent=0 // pred_region
    _
  $region57: #{transition_forward.1} parent=0 // pred_fallthru
    _
  // Predicated region
  $region58: #{transition_forward.1} parent=0 // pred_check
    _
  $region59: #{transition_forward.1} parent=0 // pred_check_branch
    %58 = sbr.rel (0) target = $region61
  $region60: #{transition_forward.1} parent=0 // pred_region
    _
  $region61: #{transition_forward.1} parent=0 // pred_fallthru
    _
  // Predicated region
  $region62: #{transition_forward.1} parent=0 // pred_check
    _
  $region63: #{transition_forward.1} parent=0 // pred_check_branch
    %60 = sbr.rel (0) target = $region65
  $region64: #{transition_forward.1} parent=0 // pred_region
    _
  $region65: #{transition_forward.1} parent=0 // pred_fallthru
    _
  // Predicated region
  $region66: #{transition_forward.1} parent=0 // pred_check
    _
  $region67: #{transition_forward.1} parent=0 // pred_check_branch
    %62 = sbr.rel (0) target = $region69
  $region68: #{transition_forward.1} parent=0 // pred_region
    _
  $region69: #{transition_forward.1} parent=0 // pred_fallthru
    _
  // Predicated region
  $region70: #{transition_forward.1} parent=0 // pred_check
    _
  $region71: #{transition_forward.1} parent=0 // pred_check_branch
    %64 = sbr.rel (0) target = $region73
  $region72: #{transition_forward.1} parent=0 // pred_region
    _
  $region73: #{transition_forward.1} parent=0 // pred_fallthru
    _
  // Predicated region
  $region74: #{transition_forward.1} parent=0 // pred_check
    _
  $region75: #{transition_forward.1} parent=0 // pred_check_branch
    %66 = sbr.rel (0) target = $region77
  $region76: #{transition_forward.1} parent=0 // pred_region
    _
  $region77: #{transition_forward.1} parent=0 // pred_fallthru
    _
  // Predicated region
  $region78: #{transition_forward.1} parent=0 // pred_check
    _
  $region79: #{transition_forward.1} parent=0 // pred_check_branch
    %68 = sbr.rel (0) target = $region81
  $region80: #{transition_forward.1} parent=0 // pred_region
    _
  $region81: #{transition_forward.1} parent=0 // pred_fallthru
    _
  // Predicated region
  $region82: #{transition_forward.1} parent=0 // pred_check
    _
  $region83: #{transition_forward.1} parent=0 // pred_check_branch
    %70 = sbr.rel (0) target = $region85
  $region84: #{transition_forward.1} parent=0 // pred_region
    _
  $region85: #{transition_forward.1} parent=0 // pred_fallthru
    _
  // Predicated region
  $region86: #{transition_forward.1} parent=0 // pred_check
    _
  $region87: #{transition_forward.1} parent=0 // pred_check_branch
    %72 = sbr.rel (0) target = $region89
  $region88: #{transition_forward.1} parent=0 // pred_region
    _
  $region89: #{transition_forward.1} parent=0 // pred_fallthru
    _
  // Predicated region
  $region90: #{transition_forward.1} parent=0 // pred_check
    _
  $region91: #{transition_forward.1} parent=0 // pred_check_branch
    %74 = sbr.rel (0) target = $region93
  $region92: #{transition_forward.1} parent=0 // pred_region
    _
  $region93: #{transition_forward.1} parent=0 // pred_fallthru
    _
  // Predicated region
  $region94: #{transition_forward.1} parent=0 // pred_check
    _
  $region95: #{transition_forward.1} parent=0 // pred_check_branch
    %76 = sbr.rel (0) target = $region97
  $region96: #{transition_forward.1} parent=0 // pred_region
    _
  $region97: #{transition_forward.1} parent=0 // pred_fallthru
    _
  %v77 = vld [vmem:[%s2] sm:$0xff]
  %v78 = vld [vmem:[%s2 + $0x8] sm:$0x3]
  %v79 = vld [vmem:[%s0] sm:$0xff]
  %v80 = vld [vmem:[%s0 + $0x8] sm:$0xff]
  %v81 = vld [vmem:[%s0 + $0x10] sm:$0x3]
  %v82 = vld [vmem:[%s0 + $0x18] sm:$0x3]
  %vm83 = vcmask 80896
  %v85 = vsel %vm83, %v77, 0
  %v88 = vsel %vm83, %v78, 0
  %vm90 = vcmask 1041408
  %v92 = vsel %vm90, %v81, 0
  %v95 = vsel %vm90, %v82, 0
  %97 = vmatpush.msra.mxu0 0.0
  %98 = vmatpush.msra.mxu0 0.0
  %99 = vmatpush.msra.mxu0 0.0
  %100 = vmatpush.msra.mxu0 0.0
  %101 = vmatpush.msra.mxu0 0.0
  %102 = vmatpush.msra.mxu0 0.0
  %103 = vmatpush.msra.mxu0 0.0
  %104 = vmatpush.msra.mxu0 0.0
  %105 = vmatpush.msra.mxu0 0.0
  %106 = vmatpush.msra.mxu0 0.0
  %107 = vmatpush.msra.mxu0 0.0
  %108 = vmatpush.msra.mxu0 0.0
  %109 = vmatpush.msra.mxu0 0.0
  %110 = vmatpush.msra.mxu0 0.0
  %111 = vmatpush.msra.mxu0 %v92
  %112 = vmatpush.msra.mxu0 %v79
  %113 = vmatmul.f32.gmra.mxu0 %v85
  %v114 = vpop.f32.mrf.mxu0
  %v115 = vadd.f32 0.0, %v114
  %116 = vmatmul.f32.gmra.mxu0 %v88
  %v117 = vpop.f32.mrf.mxu0
  %v118 = vadd.f32 0.0, %v117
  %119 = vdwg.mxu0
  %120 = vmatpush.msra.mxu0 0.0
  %121 = vmatpush.msra.mxu0 0.0
  %122 = vmatpush.msra.mxu0 0.0
  %123 = vmatpush.msra.mxu0 0.0
  %124 = vmatpush.msra.mxu0 0.0
  %125 = vmatpush.msra.mxu0 0.0
  %126 = vmatpush.msra.mxu0 0.0
  %127 = vmatpush.msra.mxu0 0.0
  %128 = vmatpush.msra.mxu0 0.0
  %129 = vmatpush.msra.mxu0 0.0
  %130 = vmatpush.msra.mxu0 0.0
  %131 = vmatpush.msra.mxu0 0.0
  %132 = vmatpush.msra.mxu0 0.0
  %133 = vmatpush.msra.mxu0 0.0
  %134 = vmatpush.msra.mxu0 %v95
  %135 = vmatpush.msra.mxu0 %v80
  %136 = vmatmul.f32.gmra.mxu0 %v85
  %v137 = vpop.f32.mrf.mxu0
  %v138 = vadd.f32 0.0, %v137
  %139 = vmatmul.f32.gmra.mxu0 %v88
  %v140 = vpop.f32.mrf.mxu0
  %v141 = vadd.f32 0.0, %v140
  %142 = vdwg.mxu0
  %v143 = vpack.c.bf16 %v118, %v115
  %v144 = vpack.c.bf16 %v141, %v138
  %v145 = vld [vmem:[%s5] sm:$0xff]
  %v146 = vld [vmem:[%s5 + $0x8] sm:$0xff]
  %v147 = vld [vmem:[%s5 + $0x10] sm:$0xff]
  %v148 = vld [vmem:[%s5 + $0x18] sm:$0xff]
  %v149 = vld [vmem:[%s5 + $0x20] sm:$0xff]
  %v150 = vld [vmem:[%s5 + $0x28] sm:$0xff]
  %v151 = vld [vmem:[%s5 + $0x30] sm:$0xff]
  %v152 = vld [vmem:[%s5 + $0x38] sm:$0xff]
  %v153 = vld [vmem:[%s5 + $0x40] sm:$0xff]
  %v154 = vld [vmem:[%s5 + $0x48] sm:$0xff]
  %v155 = vld [vmem:[%s5 + $0x50] sm:$0xff]
  %v156 = vld [vmem:[%s5 + $0x58] sm:$0xff]
  %v157 = vld [vmem:[%s5 + $0x60] sm:$0xff]
  %v158 = vld [vmem:[%s5 + $0x68] sm:$0xff]
  %v159 = vld [vmem:[%s5 + $0x70] sm:$0xff]
  %v160 = vld [vmem:[%s5 + $0x78] sm:$0xff]
  %v161 = vld [vmem:[%s5 + $0x80] sm:$0xff]
  %v162 = vld [vmem:[%s5 + $0x88] sm:$0xff]
  %v163 = vld [vmem:[%s5 + $0x90] sm:$0xff]
  %v164 = vld [vmem:[%s5 + $0x98] sm:$0xff]
  %v165 = vld [vmem:[%s5 + $0xa0] sm:$0xff]
  %v166 = vld [vmem:[%s5 + $0xa8] sm:$0xff]
  %v167 = vld [vmem:[%s5 + $0xb0] sm:$0xff]
  %v168 = vld [vmem:[%s5 + $0xb8] sm:$0xff]
  %v169 = vld [vmem:[%s5 + $0xc0] sm:$0xff]
  %v170 = vld [vmem:[%s5 + $0xc8] sm:$0xff]
  %v171 = vld [vmem:[%s5 + $0xd0] sm:$0xff]
  %v172 = vld [vmem:[%s5 + $0xd8] sm:$0xff]
  %v173 = vld [vmem:[%s5 + $0xe0] sm:$0xff]
  %v174 = vld [vmem:[%s5 + $0xe8] sm:$0xff]
  %v175 = vld [vmem:[%s5 + $0xf0] sm:$0xff]
  %v176 = vld [vmem:[%s5 + $0xf8] sm:$0xff]
  %v209 = vunpack.c.l.b16 %v145
  %v210 = vunpack.c.h.b16 %v145
  %v211 = vunpack.c.l.b16 %v146
  %v212 = vunpack.c.h.b16 %v146
  %v213 = vunpack.c.l.b16 %v147
  %v214 = vunpack.c.h.b16 %v147
  %v215 = vunpack.c.l.b16 %v148
  %v216 = vunpack.c.h.b16 %v148
  %v217 = vunpack.c.l.b16 %v149
  %v218 = vunpack.c.h.b16 %v149
  %v219 = vunpack.c.l.b16 %v150
  %v220 = vunpack.c.h.b16 %v150
  %v221 = vunpack.c.l.b16 %v151
  %v222 = vunpack.c.h.b16 %v151
  %v223 = vunpack.c.l.b16 %v152
  %v224 = vunpack.c.h.b16 %v152
  %v225 = vunpack.c.l.b16 %v153
  %v226 = vunpack.c.h.b16 %v153
  %v227 = vunpack.c.l.b16 %v154
  %v228 = vunpack.c.h.b16 %v154
  %v229 = vunpack.c.l.b16 %v155
  %v230 = vunpack.c.h.b16 %v155
  %v231 = vunpack.c.l.b16 %v156
  %v232 = vunpack.c.h.b16 %v156
  %v233 = vunpack.c.l.b16 %v157
  %v234 = vunpack.c.h.b16 %v157
  %v235 = vunpack.c.l.b16 %v158
  %v236 = vunpack.c.h.b16 %v158
  %v237 = vunpack.c.l.b16 %v159
  %v238 = vunpack.c.h.b16 %v159
  %v239 = vunpack.c.l.b16 %v160
  %v240 = vunpack.c.h.b16 %v160
  %v241 = vunpack.c.l.b16 %v161
  %v242 = vunpack.c.h.b16 %v161
  %v243 = vunpack.c.l.b16 %v162
  %v244 = vunpack.c.h.b16 %v162
  %v245 = vunpack.c.l.b16 %v163
  %v246 = vunpack.c.h.b16 %v163
  %v247 = vunpack.c.l.b16 %v164
  %v248 = vunpack.c.h.b16 %v164
  %v249 = vunpack.c.l.b16 %v165
  %v250 = vunpack.c.h.b16 %v165
  %v251 = vunpack.c.l.b16 %v166
  %v252 = vunpack.c.h.b16 %v166
  %v253 = vunpack.c.l.b16 %v167
  %v254 = vunpack.c.h.b16 %v167
  %v255 = vunpack.c.l.b16 %v168
  %v256 = vunpack.c.h.b16 %v168
  %v257 = vunpack.c.l.b16 %v169
  %v258 = vunpack.c.h.b16 %v169
  %v259 = vunpack.c.l.b16 %v170
  %v260 = vunpack.c.h.b16 %v170
  %v261 = vunpack.c.l.b16 %v171
  %v262 = vunpack.c.h.b16 %v171
  %v263 = vunpack.c.l.b16 %v172
  %v264 = vunpack.c.h.b16 %v172
  %v265 = vunpack.c.l.b16 %v173
  %v266 = vunpack.c.h.b16 %v173
  %v267 = vunpack.c.l.b16 %v174
  %v268 = vunpack.c.h.b16 %v174
  %v269 = vunpack.c.l.b16 %v175
  %v270 = vunpack.c.h.b16 %v175
  %v271 = vunpack.c.l.b16 %v176
  %v272 = vunpack.c.h.b16 %v176
  %v273 = vpack.c.b16 %v211, %v209
  %v274 = vpack.c.b16 %v212, %v210
  %v275 = vpack.c.b16 %v215, %v213
  %v276 = vpack.c.b16 %v216, %v214
  %v277 = vpack.c.b16 %v219, %v217
  %v278 = vpack.c.b16 %v220, %v218
  %v279 = vpack.c.b16 %v223, %v221
  %v280 = vpack.c.b16 %v224, %v222
  %v281 = vpack.c.b16 %v227, %v225
  %v282 = vpack.c.b16 %v228, %v226
  %v283 = vpack.c.b16 %v231, %v229
  %v284 = vpack.c.b16 %v232, %v230
  %v285 = vpack.c.b16 %v235, %v233
  %v286 = vpack.c.b16 %v236, %v234
  %v287 = vpack.c.b16 %v239, %v237
  %v288 = vpack.c.b16 %v240, %v238
  %v289 = vpack.c.b16 %v243, %v241
  %v290 = vpack.c.b16 %v244, %v242
  %v291 = vpack.c.b16 %v247, %v245
  %v292 = vpack.c.b16 %v248, %v246
  %v293 = vpack.c.b16 %v251, %v249
  %v294 = vpack.c.b16 %v252, %v250
  %v295 = vpack.c.b16 %v255, %v253
  %v296 = vpack.c.b16 %v256, %v254
  %v297 = vpack.c.b16 %v259, %v257
  %v298 = vpack.c.b16 %v260, %v258
  %v299 = vpack.c.b16 %v263, %v261
  %v300 = vpack.c.b16 %v264, %v262
  %v301 = vpack.c.b16 %v267, %v265
  %v302 = vpack.c.b16 %v268, %v266
  %v303 = vpack.c.b16 %v271, %v269
  %v304 = vpack.c.b16 %v272, %v270
  %337 = vmatpush.bf16.msra.mxu0 %v287
  %338 = vmatpush.bf16.msra.mxu0 %v285
  %339 = vmatpush.bf16.msra.mxu0 %v283
  %340 = vmatpush.bf16.msra.mxu0 %v281
  %341 = vmatpush.bf16.msra.mxu0 %v279
  %342 = vmatpush.bf16.msra.mxu0 %v277
  %343 = vmatpush.bf16.msra.mxu0 %v275
  %344 = vmatpush.bf16.msra.mxu0 %v273
  %345 = vmatmul.bf16.gmra.mxu0 %v143
  %v346 = vpop.f32.mrf.mxu0
  %v347 = vadd.f32 0.0, %v346
  %v348 = vpop.f32.mrf.mxu0
  %v349 = vadd.f32 0.0, %v348
  %350 = vdwg.mxu0
  %351 = vmatpush.bf16.msra.mxu0 %v303
  %352 = vmatpush.bf16.msra.mxu0 %v301
  %353 = vmatpush.bf16.msra.mxu0 %v299
  %354 = vmatpush.bf16.msra.mxu0 %v297
  %355 = vmatpush.bf16.msra.mxu0 %v295
  %356 = vmatpush.bf16.msra.mxu0 %v293
  %357 = vmatpush.bf16.msra.mxu0 %v291
  %358 = vmatpush.bf16.msra.mxu0 %v289
  %359 = vmatmul.bf16.gmra.mxu0 %v144
  %v360 = vpop.f32.mrf.mxu0
  %v361 = vadd.f32 %v347, %v360
  %v362 = vpop.f32.mrf.mxu0
  %v363 = vadd.f32 %v349, %v362
  %364 = vdwg.mxu0
  %365 = vmatpush.bf16.msra.mxu0 %v288
  %366 = vmatpush.bf16.msra.mxu0 %v286
  %367 = vmatpush.bf16.msra.mxu0 %v284
  %368 = vmatpush.bf16.msra.mxu0 %v282
  %369 = vmatpush.bf16.msra.mxu0 %v280
  %370 = vmatpush.bf16.msra.mxu0 %v278
  %371 = vmatpush.bf16.msra.mxu0 %v276
  %372 = vmatpush.bf16.msra.mxu0 %v274
  %373 = vmatmul.bf16.gmra.mxu0 %v143
  %v374 = vpop.f32.mrf.mxu0
  %v375 = vadd.f32 0.0, %v374
  %v376 = vpop.f32.mrf.mxu0
  %v377 = vadd.f32 0.0, %v376
  %378 = vdwg.mxu0
  %379 = vmatpush.bf16.msra.mxu0 %v304
  %380 = vmatpush.bf16.msra.mxu0 %v302
  %381 = vmatpush.bf16.msra.mxu0 %v300
  %382 = vmatpush.bf16.msra.mxu0 %v298
  %383 = vmatpush.bf16.msra.mxu0 %v296
  %384 = vmatpush.bf16.msra.mxu0 %v294
  %385 = vmatpush.bf16.msra.mxu0 %v292
  %386 = vmatpush.bf16.msra.mxu0 %v290
  %387 = vmatmul.bf16.gmra.mxu0 %v144
  %v388 = vpop.f32.mrf.mxu0
  %v389 = vadd.f32 %v375, %v388
  %v390 = vpop.f32.mrf.mxu0
  %v391 = vadd.f32 %v377, %v390
  %392 = vdwg.mxu0
  %v393 = vld [vmem:[%s6] sm:$0xff]
  %v394 = vld [vmem:[%s6 + $0x8] sm:$0xff]
  %v395 = vld [vmem:[%s6 + $0x10] sm:$0xff]
  %v396 = vld [vmem:[%s6 + $0x18] sm:$0xff]
  %v397 = vld [vmem:[%s6 + $0x20] sm:$0xff]
  %v398 = vld [vmem:[%s6 + $0x28] sm:$0xff]
  %v399 = vld [vmem:[%s6 + $0x30] sm:$0xff]
  %v400 = vld [vmem:[%s6 + $0x38] sm:$0xff]
  %v401 = vld [vmem:[%s6 + $0x40] sm:$0xff]
  %v402 = vld [vmem:[%s6 + $0x48] sm:$0xff]
  %v403 = vld [vmem:[%s6 + $0x50] sm:$0xff]
  %v404 = vld [vmem:[%s6 + $0x58] sm:$0xff]
  %v405 = vld [vmem:[%s6 + $0x60] sm:$0xff]
  %v406 = vld [vmem:[%s6 + $0x68] sm:$0xff]
  %v407 = vld [vmem:[%s6 + $0x70] sm:$0xff]
  %v408 = vld [vmem:[%s6 + $0x78] sm:$0xff]
  %v409 = vld [vmem:[%s6 + $0x80] sm:$0xff]
  %v410 = vld [vmem:[%s6 + $0x88] sm:$0xff]
  %v411 = vld [vmem:[%s6 + $0x90] sm:$0xff]
  %v412 = vld [vmem:[%s6 + $0x98] sm:$0xff]
  %v413 = vld [vmem:[%s6 + $0xa0] sm:$0xff]
  %v414 = vld [vmem:[%s6 + $0xa8] sm:$0xff]
  %v415 = vld [vmem:[%s6 + $0xb0] sm:$0xff]
  %v416 = vld [vmem:[%s6 + $0xb8] sm:$0xff]
  %v417 = vld [vmem:[%s6 + $0xc0] sm:$0xff]
  %v418 = vld [vmem:[%s6 + $0xc8] sm:$0xff]
  %v419 = vld [vmem:[%s6 + $0xd0] sm:$0xff]
  %v420 = vld [vmem:[%s6 + $0xd8] sm:$0xff]
  %v421 = vld [vmem:[%s6 + $0xe0] sm:$0xff]
  %v422 = vld [vmem:[%s6 + $0xe8] sm:$0xff]
  %v423 = vld [vmem:[%s6 + $0xf0] sm:$0xff]
  %v424 = vld [vmem:[%s6 + $0xf8] sm:$0xff]
  %v457 = vunpack.c.l.b16 %v393
  %v458 = vunpack.c.h.b16 %v393
  %v459 = vunpack.c.l.b16 %v394
  %v460 = vunpack.c.h.b16 %v394
  %v461 = vunpack.c.l.b16 %v395
  %v462 = vunpack.c.h.b16 %v395
  %v463 = vunpack.c.l.b16 %v396
  %v464 = vunpack.c.h.b16 %v396
  %v465 = vunpack.c.l.b16 %v397
  %v466 = vunpack.c.h.b16 %v397
  %v467 = vunpack.c.l.b16 %v398
  %v468 = vunpack.c.h.b16 %v398
  %v469 = vunpack.c.l.b16 %v399
  %v470 = vunpack.c.h.b16 %v399
  %v471 = vunpack.c.l.b16 %v400
  %v472 = vunpack.c.h.b16 %v400
  %v473 = vunpack.c.l.b16 %v401
  %v474 = vunpack.c.h.b16 %v401
  %v475 = vunpack.c.l.b16 %v402
  %v476 = vunpack.c.h.b16 %v402
  %v477 = vunpack.c.l.b16 %v403
  %v478 = vunpack.c.h.b16 %v403
  %v479 = vunpack.c.l.b16 %v404
  %v480 = vunpack.c.h.b16 %v404
  %v481 = vunpack.c.l.b16 %v405
  %v482 = vunpack.c.h.b16 %v405
  %v483 = vunpack.c.l.b16 %v406
  %v484 = vunpack.c.h.b16 %v406
  %v485 = vunpack.c.l.b16 %v407
  %v486 = vunpack.c.h.b16 %v407
  %v487 = vunpack.c.l.b16 %v408
  %v488 = vunpack.c.h.b16 %v408
  %v489 = vunpack.c.l.b16 %v409
  %v490 = vunpack.c.h.b16 %v409
  %v491 = vunpack.c.l.b16 %v410
  %v492 = vunpack.c.h.b16 %v410
  %v493 = vunpack.c.l.b16 %v411
  %v494 = vunpack.c.h.b16 %v411
  %v495 = vunpack.c.l.b16 %v412
  %v496 = vunpack.c.h.b16 %v412
  %v497 = vunpack.c.l.b16 %v413
  %v498 = vunpack.c.h.b16 %v413
  %v499 = vunpack.c.l.b16 %v414
  %v500 = vunpack.c.h.b16 %v414
  %v501 = vunpack.c.l.b16 %v415
  %v502 = vunpack.c.h.b16 %v415
  %v503 = vunpack.c.l.b16 %v416
  %v504 = vunpack.c.h.b16 %v416
  %v505 = vunpack.c.l.b16 %v417
  %v506 = vunpack.c.h.b16 %v417
  %v507 = vunpack.c.l.b16 %v418
  %v508 = vunpack.c.h.b16 %v418
  %v509 = vunpack.c.l.b16 %v419
  %v510 = vunpack.c.h.b16 %v419
  %v511 = vunpack.c.l.b16 %v420
  %v512 = vunpack.c.h.b16 %v420
  %v513 = vunpack.c.l.b16 %v421
  %v514 = vunpack.c.h.b16 %v421
  %v515 = vunpack.c.l.b16 %v422
  %v516 = vunpack.c.h.b16 %v422
  %v517 = vunpack.c.l.b16 %v423
  %v518 = vunpack.c.h.b16 %v423
  %v519 = vunpack.c.l.b16 %v424
  %v520 = vunpack.c.h.b16 %v424
  %v521 = vpack.c.b16 %v459, %v457
  %v522 = vpack.c.b16 %v460, %v458
  %v523 = vpack.c.b16 %v463, %v461
  %v524 = vpack.c.b16 %v464, %v462
  %v525 = vpack.c.b16 %v467, %v465
  %v526 = vpack.c.b16 %v468, %v466
  %v527 = vpack.c.b16 %v471, %v469
  %v528 = vpack.c.b16 %v472, %v470
  %v529 = vpack.c.b16 %v475, %v473
  %v530 = vpack.c.b16 %v476, %v474
  %v531 = vpack.c.b16 %v479, %v477
  %v532 = vpack.c.b16 %v480, %v478
  %v533 = vpack.c.b16 %v483, %v481
  %v534 = vpack.c.b16 %v484, %v482
  %v535 = vpack.c.b16 %v487, %v485
  %v536 = vpack.c.b16 %v488, %v486
  %v537 = vpack.c.b16 %v491, %v489
  %v538 = vpack.c.b16 %v492, %v490
  %v539 = vpack.c.b16 %v495, %v493
  %v540 = vpack.c.b16 %v496, %v494
  %v541 = vpack.c.b16 %v499, %v497
  %v542 = vpack.c.b16 %v500, %v498
  %v543 = vpack.c.b16 %v503, %v501
  %v544 = vpack.c.b16 %v504, %v502
  %v545 = vpack.c.b16 %v507, %v505
  %v546 = vpack.c.b16 %v508, %v506
  %v547 = vpack.c.b16 %v511, %v509
  %v548 = vpack.c.b16 %v512, %v510
  %v549 = vpack.c.b16 %v515, %v513
  %v550 = vpack.c.b16 %v516, %v514
  %v551 = vpack.c.b16 %v519, %v517
  %v552 = vpack.c.b16 %v520, %v518
  %585 = vmatpush.bf16.msra.mxu0 %v535
  %586 = vmatpush.bf16.msra.mxu0 %v533
  %587 = vmatpush.bf16.msra.mxu0 %v531
  %588 = vmatpush.bf16.msra.mxu0 %v529
  %589 = vmatpush.bf16.msra.mxu0 %v527
  %590 = vmatpush.bf16.msra.mxu0 %v525
  %591 = vmatpush.bf16.msra.mxu0 %v523
  %592 = vmatpush.bf16.msra.mxu0 %v521
  %593 = vmatmul.bf16.gmra.mxu0 %v143
  %v594 = vpop.f32.mrf.mxu0
  %v595 = vadd.f32 0.0, %v594
  %v596 = vpop.f32.mrf.mxu0
  %v597 = vadd.f32 0.0, %v596
  %598 = vdwg.mxu0
  %599 = vmatpush.bf16.msra.mxu0 %v551
  %600 = vmatpush.bf16.msra.mxu0 %v549
  %601 = vmatpush.bf16.msra.mxu0 %v547
  %602 = vmatpush.bf16.msra.mxu0 %v545
  %603 = vmatpush.bf16.msra.mxu0 %v543
  %604 = vmatpush.bf16.msra.mxu0 %v541
  %605 = vmatpush.bf16.msra.mxu0 %v539
  %606 = vmatpush.bf16.msra.mxu0 %v537
  %607 = vmatmul.bf16.gmra.mxu0 %v144
  %v608 = vpop.f32.mrf.mxu0
  %v609 = vadd.f32 %v595, %v608
  %v610 = vpop.f32.mrf.mxu0
  %v611 = vadd.f32 %v597, %v610
  %612 = vdwg.mxu0
  %613 = vmatpush.bf16.msra.mxu0 %v536
  %614 = vmatpush.bf16.msra.mxu0 %v534
  %615 = vmatpush.bf16.msra.mxu0 %v532
  %616 = vmatpush.bf16.msra.mxu0 %v530
  %617 = vmatpush.bf16.msra.mxu0 %v528
  %618 = vmatpush.bf16.msra.mxu0 %v526
  %619 = vmatpush.bf16.msra.mxu0 %v524
  %620 = vmatpush.bf16.msra.mxu0 %v522
  %621 = vmatmul.bf16.gmra.mxu0 %v143
  %v622 = vpop.f32.mrf.mxu0
  %v623 = vadd.f32 0.0, %v622
  %v624 = vpop.f32.mrf.mxu0
  %v625 = vadd.f32 0.0, %v624
  %626 = vdwg.mxu0
  %627 = vmatpush.bf16.msra.mxu0 %v552
  %628 = vmatpush.bf16.msra.mxu0 %v550
  %629 = vmatpush.bf16.msra.mxu0 %v548
  %630 = vmatpush.bf16.msra.mxu0 %v546
  %631 = vmatpush.bf16.msra.mxu0 %v544
  %632 = vmatpush.bf16.msra.mxu0 %v542
  %633 = vmatpush.bf16.msra.mxu0 %v540
  %634 = vmatpush.bf16.msra.mxu0 %v538
  %635 = vmatmul.bf16.gmra.mxu0 %v144
  %v636 = vpop.f32.mrf.mxu0
  %v637 = vadd.f32 %v623, %v636
  %v638 = vpop.f32.mrf.mxu0
  %v639 = vadd.f32 %v625, %v638
  %640 = vdwg.mxu0
  %v641 = vld [vmem:[%s7] sm:$0x3]
  %vm646 = vcmask 1045504
  %v647 = vrot.slane %v609, 2
  %v648 = vrot.slane %v611, 2
  %v649 = vsel %vm646, %v647, %v648
  %v650 = vrot.slane %v637, 2
  %v651 = vrot.slane %v639, 2
  %v652 = vsel %vm646, %v650, %v651
  %v655 = vadd.f32 %v361, %v649
  %v656 = vadd.f32 %v389, %v652
  %v658 = vperm.slane %v641, 0
  %v659 = vperm.slane %v641, 1
  %v662 = vadd.f32 %v655, %v658
  %v663 = vadd.f32 %v656, %v659
  %v664 = vmax.f32 %v662, 0.0
  %v665 = vmax.f32 %v663, 0.0
  %v666 = vadd.f32 %v363, %v609
  %v667 = vadd.f32 %v391, %v637
  %v668 = vadd.f32 %v666, %v658
  %v669 = vadd.f32 %v667, %v659
  %v670 = vmax.f32 %v668, 0.0
  %v671 = vmax.f32 %v669, 0.0
  %672 = vst [vmem:[#allocation2] sm:$0xff] %v664
  %673 = vst [vmem:[#allocation2 + $0x8] sm:$0xff] %v665
  %674 = vst [vmem:[#allocation2 + $0x10] sm:$0x3] %v670
  %675 = vst [vmem:[#allocation2 + $0x18] sm:$0x3] %v671
  %vm676 = vcmask 1043456
  %v677 = vrot.slane %v609, 4
  %v678 = vrot.slane %v611, 4
  %v679 = vsel %vm676, %v677, %v678
  %v680 = vrot.slane %v637, 4
  %v681 = vrot.slane %v639, 4
  %v682 = vsel %vm676, %v680, %v681
  %v685 = vadd.f32 %v361, %v679
  %v686 = vadd.f32 %v389, %v682
  %v687 = vadd.f32 %v685, %v658
  %v688 = vadd.f32 %v686, %v659
  %v689 = vmax.f32 %v687, 0.0
  %v690 = vmax.f32 %v688, 0.0
  %v693 = vadd.f32 %v361, %v647
  %v694 = vadd.f32 %v389, %v650
  %v695 = vadd.f32 %v363, %v647
  %v696 = vadd.f32 %v391, %v650
  %v697 = vadd.f32 %v693, %v658
  %v698 = vadd.f32 %v694, %v659
  %v699 = vadd.f32 %v695, %v658
  %v700 = vadd.f32 %v696, %v659
  %v701 = vmax.f32 %v697, 0.0
  %v702 = vmax.f32 %v698, 0.0
  %v703 = vmax.f32 %v699, 0.0
  %v704 = vmax.f32 %v700, 0.0
  %v707 = vrot.slane %v689, 6
  %v708 = vrot.slane %v690, 6
  %711 = vst [vmem:[#allocation2 + $0x10] sm:$0xfc] %v707
  %712 = vst [vmem:[#allocation2 + $0x18] sm:$0xfc] %v708
  %v717 = vrot.slane %v701, 6
  %v718 = vrot.slane %v703, 6
  %v719 = vsel %vm90, %v717, %v718
  %v720 = vrot.slane %v702, 6
  %v721 = vrot.slane %v704, 6
  %v722 = vsel %vm90, %v720, %v721
  %725 = vst [vmem:[#allocation2 + $0x20] sm:$0xf] %v719
  %726 = vst [vmem:[#allocation2 + $0x28] sm:$0xf] %v722
  %v727 = vrot.slane %v609, 6
  %v728 = vrot.slane %v611, 6
  %v729 = vsel %vm90, %v727, %v728
  %v730 = vrot.slane %v637, 6
  %v731 = vrot.slane %v639, 6
  %v732 = vsel %vm90, %v730, %v731
  %v735 = vadd.f32 %v361, %v729
  %v736 = vadd.f32 %v389, %v732
  %v737 = vadd.f32 %v735, %v658
  %v738 = vadd.f32 %v736, %v659
  %v739 = vmax.f32 %v737, 0.0
  %v740 = vmax.f32 %v738, 0.0
  %v743 = vadd.f32 %v361, %v677
  %v744 = vadd.f32 %v389, %v680
  %v745 = vadd.f32 %v363, %v677
  %v746 = vadd.f32 %v391, %v680
  %v747 = vadd.f32 %v743, %v658
  %v748 = vadd.f32 %v744, %v659
  %v749 = vadd.f32 %v745, %v658
  %v750 = vadd.f32 %v746, %v659
  %v751 = vmax.f32 %v747, 0.0
  %v752 = vmax.f32 %v748, 0.0
  %v753 = vmax.f32 %v749, 0.0
  %v754 = vmax.f32 %v750, 0.0
  %v757 = vrot.slane %v739, 4
  %v758 = vrot.slane %v740, 4
  %761 = vst [vmem:[#allocation2 + $0x20] sm:$0xf0] %v757
  %762 = vst [vmem:[#allocation2 + $0x28] sm:$0xf0] %v758
  %v767 = vrot.slane %v751, 4
  %v768 = vrot.slane %v753, 4
  %v769 = vsel %vm676, %v767, %v768
  %v770 = vrot.slane %v752, 4
  %v771 = vrot.slane %v754, 4
  %v772 = vsel %vm676, %v770, %v771
  %775 = vst [vmem:[#allocation2 + $0x30] sm:$0x3f] %v769
  %776 = vst [vmem:[#allocation2 + $0x38] sm:$0x3f] %v772
  %v777 = vadd.f32 %v361, %v611
  %v778 = vadd.f32 %v389, %v639
  %v779 = vadd.f32 %v777, %v658
  %v780 = vadd.f32 %v778, %v659
  %v781 = vmax.f32 %v779, 0.0
  %v782 = vmax.f32 %v780, 0.0
  %v785 = vadd.f32 %v361, %v727
  %v786 = vadd.f32 %v389, %v730
  %v787 = vadd.f32 %v363, %v727
  %v788 = vadd.f32 %v391, %v730
  %v789 = vadd.f32 %v785, %v658
  %v790 = vadd.f32 %v786, %v659
  %v791 = vadd.f32 %v787, %v658
  %v792 = vadd.f32 %v788, %v659
  %v793 = vmax.f32 %v789, 0.0
  %v794 = vmax.f32 %v790, 0.0
  %v795 = vmax.f32 %v791, 0.0
  %v796 = vmax.f32 %v792, 0.0
  %v799 = vrot.slane %v781, 2
  %v800 = vrot.slane %v782, 2
  %803 = vst [vmem:[#allocation2 + $0x30] sm:$0xc0] %v799
  %804 = vst [vmem:[#allocation2 + $0x38] sm:$0xc0] %v800
  %v809 = vrot.slane %v793, 2
  %v810 = vrot.slane %v795, 2
  %v811 = vsel %vm646, %v809, %v810
  %v812 = vrot.slane %v794, 2
  %v813 = vrot.slane %v796, 2
  %v814 = vsel %vm646, %v812, %v813
  %817 = vst [vmem:[#allocation2 + $0x40] sm:$0xff] %v811
  %818 = vst [vmem:[#allocation2 + $0x48] sm:$0xff] %v814
  %v819 = vld [vmem:[#allocation2] sm:$0xff]
  %v820 = vld [vmem:[#allocation2 + $0x8] sm:$0xff]
  %v821 = vld [vmem:[#allocation2 + $0x10] sm:$0xff]
  %v822 = vld [vmem:[#allocation2 + $0x18] sm:$0xff]
  %v823 = vld [vmem:[#allocation2 + $0x20] sm:$0xff]
  %v824 = vld [vmem:[#allocation2 + $0x28] sm:$0xff]
  %v825 = vld [vmem:[#allocation2 + $0x30] sm:$0xff]
  %v826 = vld [vmem:[#allocation2 + $0x38] sm:$0xff]
  %v827 = vld [vmem:[#allocation2 + $0x40] sm:$0xff]
  %v828 = vld [vmem:[#allocation2 + $0x48] sm:$0xff]
  %v829 = vpack.c.bf16 %v821, %v819
  %v830 = vpack.c.bf16 %v822, %v820
  %v831 = vpack.c.bf16 %v825, %v823
  %v832 = vpack.c.bf16 %v826, %v824
  %v833 = vpack.c.bf16 %v827, %v827
  %v834 = vpack.c.bf16 %v828, %v828
  %v835 = vld [vmem:[%s8] sm:$0xff]
  %v836 = vld [vmem:[%s8 + $0x8] sm:$0xff]
  %v837 = vld [vmem:[%s8 + $0x10] sm:$0xff]
  %v838 = vld [vmem:[%s8 + $0x18] sm:$0xff]
  %v839 = vld [vmem:[%s8 + $0x20] sm:$0xff]
  %v840 = vld [vmem:[%s8 + $0x28] sm:$0xff]
  %v841 = vld [vmem:[%s8 + $0x30] sm:$0xff]
  %v842 = vld [vmem:[%s8 + $0x38] sm:$0xff]
  %v843 = vld [vmem:[%s8 + $0x40] sm:$0xff]
  %v844 = vld [vmem:[%s8 + $0x48] sm:$0xff]
  %v845 = vld [vmem:[%s8 + $0x50] sm:$0xff]
  %v846 = vld [vmem:[%s8 + $0x58] sm:$0xff]
  %v847 = vld [vmem:[%s8 + $0x60] sm:$0xff]
  %v848 = vld [vmem:[%s8 + $0x68] sm:$0xff]
  %v849 = vld [vmem:[%s8 + $0x70] sm:$0xff]
  %v850 = vld [vmem:[%s8 + $0x78] sm:$0xff]
  %v851 = vld [vmem:[%s8 + $0x80] sm:$0xff]
  %v852 = vld [vmem:[%s8 + $0x88] sm:$0xff]
  %v853 = vld [vmem:[%s8 + $0x90] sm:$0xff]
  %v854 = vld [vmem:[%s8 + $0x98] sm:$0xff]
  %v855 = vld [vmem:[%s8 + $0xa0] sm:$0xff]
  %v856 = vld [vmem:[%s8 + $0xa8] sm:$0xff]
  %v857 = vld [vmem:[%s8 + $0xb0] sm:$0xff]
  %v858 = vld [vmem:[%s8 + $0xb8] sm:$0xff]
  %v859 = vld [vmem:[%s8 + $0xc0] sm:$0xff]
  %v860 = vld [vmem:[%s8 + $0xc8] sm:$0xff]
  %v861 = vld [vmem:[%s8 + $0xd0] sm:$0xff]
  %v862 = vld [vmem:[%s8 + $0xd8] sm:$0xff]
  %v863 = vld [vmem:[%s8 + $0xe0] sm:$0xff]
  %v864 = vld [vmem:[%s8 + $0xe8] sm:$0xff]
  %v865 = vld [vmem:[%s8 + $0xf0] sm:$0xff]
  %v866 = vld [vmem:[%s8 + $0xf8] sm:$0xff]
  %v867 = vld [vmem:[%s9] sm:$0x3]
  %v869 = vperm.slane %v867, 0
  %v870 = vperm.slane %v867, 1
  %v905 = vunpack.c.l.b16 %v835
  %v906 = vunpack.c.h.b16 %v835
  %v907 = vunpack.c.l.b16 %v836
  %v908 = vunpack.c.h.b16 %v836
  %v909 = vunpack.c.l.b16 %v837
  %v910 = vunpack.c.h.b16 %v837
  %v911 = vunpack.c.l.b16 %v838
  %v912 = vunpack.c.h.b16 %v838
  %v913 = vunpack.c.l.b16 %v839
  %v914 = vunpack.c.h.b16 %v839
  %v915 = vunpack.c.l.b16 %v840
  %v916 = vunpack.c.h.b16 %v840
  %v917 = vunpack.c.l.b16 %v841
  %v918 = vunpack.c.h.b16 %v841
  %v919 = vunpack.c.l.b16 %v842
  %v920 = vunpack.c.h.b16 %v842
  %v921 = vunpack.c.l.b16 %v843
  %v922 = vunpack.c.h.b16 %v843
  %v923 = vunpack.c.l.b16 %v844
  %v924 = vunpack.c.h.b16 %v844
  %v925 = vunpack.c.l.b16 %v845
  %v926 = vunpack.c.h.b16 %v845
  %v927 = vunpack.c.l.b16 %v846
  %v928 = vunpack.c.h.b16 %v846
  %v929 = vunpack.c.l.b16 %v847
  %v930 = vunpack.c.h.b16 %v847
  %v931 = vunpack.c.l.b16 %v848
  %v932 = vunpack.c.h.b16 %v848
  %v933 = vunpack.c.l.b16 %v849
  %v934 = vunpack.c.h.b16 %v849
  %v935 = vunpack.c.l.b16 %v850
  %v936 = vunpack.c.h.b16 %v850
  %v937 = vunpack.c.l.b16 %v851
  %v938 = vunpack.c.h.b16 %v851
  %v939 = vunpack.c.l.b16 %v852
  %v940 = vunpack.c.h.b16 %v852
  %v941 = vunpack.c.l.b16 %v853
  %v942 = vunpack.c.h.b16 %v853
  %v943 = vunpack.c.l.b16 %v854
  %v944 = vunpack.c.h.b16 %v854
  %v945 = vunpack.c.l.b16 %v855
  %v946 = vunpack.c.h.b16 %v855
  %v947 = vunpack.c.l.b16 %v856
  %v948 = vunpack.c.h.b16 %v856
  %v949 = vunpack.c.l.b16 %v857
  %v950 = vunpack.c.h.b16 %v857
  %v951 = vunpack.c.l.b16 %v858
  %v952 = vunpack.c.h.b16 %v858
  %v953 = vunpack.c.l.b16 %v859
  %v954 = vunpack.c.h.b16 %v859
  %v955 = vunpack.c.l.b16 %v860
  %v956 = vunpack.c.h.b16 %v860
  %v957 = vunpack.c.l.b16 %v861
  %v958 = vunpack.c.h.b16 %v861
  %v959 = vunpack.c.l.b16 %v862
  %v960 = vunpack.c.h.b16 %v862
  %v961 = vunpack.c.l.b16 %v863
  %v962 = vunpack.c.h.b16 %v863
  %v963 = vunpack.c.l.b16 %v864
  %v964 = vunpack.c.h.b16 %v864
  %v965 = vunpack.c.l.b16 %v865
  %v966 = vunpack.c.h.b16 %v865
  %v967 = vunpack.c.l.b16 %v866
  %v968 = vunpack.c.h.b16 %v866
  %v969 = vpack.c.b16 %v907, %v905
  %v970 = vpack.c.b16 %v908, %v906
  %v971 = vpack.c.b16 %v911, %v909
  %v972 = vpack.c.b16 %v912, %v910
  %v973 = vpack.c.b16 %v915, %v913
  %v974 = vpack.c.b16 %v916, %v914
  %v975 = vpack.c.b16 %v919, %v917
  %v976 = vpack.c.b16 %v920, %v918
  %v977 = vpack.c.b16 %v923, %v921
  %v978 = vpack.c.b16 %v924, %v922
  %v979 = vpack.c.b16 %v927, %v925
  %v980 = vpack.c.b16 %v928, %v926
  %v981 = vpack.c.b16 %v931, %v929
  %v982 = vpack.c.b16 %v932, %v930
  %v983 = vpack.c.b16 %v935, %v933
  %v984 = vpack.c.b16 %v936, %v934
  %v985 = vpack.c.b16 %v939, %v937
  %v986 = vpack.c.b16 %v940, %v938
  %v987 = vpack.c.b16 %v943, %v941
  %v988 = vpack.c.b16 %v944, %v942
  %v989 = vpack.c.b16 %v947, %v945
  %v990 = vpack.c.b16 %v948, %v946
  %v991 = vpack.c.b16 %v951, %v949
  %v992 = vpack.c.b16 %v952, %v950
  %v993 = vpack.c.b16 %v955, %v953
  %v994 = vpack.c.b16 %v956, %v954
  %v995 = vpack.c.b16 %v959, %v957
  %v996 = vpack.c.b16 %v960, %v958
  %v997 = vpack.c.b16 %v963, %v961
  %v998 = vpack.c.b16 %v964, %v962
  %v999 = vpack.c.b16 %v967, %v965
  %v1000 = vpack.c.b16 %v968, %v966
  %1033 = vmatpush.bf16.msra.mxu0 %v983
  %1034 = vmatpush.bf16.msra.mxu0 %v981
  %1035 = vmatpush.bf16.msra.mxu0 %v979
  %1036 = vmatpush.bf16.msra.mxu0 %v977
  %1037 = vmatpush.bf16.msra.mxu0 %v975
  %1038 = vmatpush.bf16.msra.mxu0 %v973
  %1039 = vmatpush.bf16.msra.mxu0 %v971
  %1040 = vmatpush.bf16.msra.mxu0 %v969
  %1041 = vmatmul.bf16.gmra.mxu0 %v829
  %v1042 = vpop.f32.mrf.mxu0
  %v1043 = vadd.f32 %v869, %v1042
  %v1044 = vpop.f32.mrf.mxu0
  %v1045 = vadd.f32 %v869, %v1044
  %1046 = vmatmul.bf16.gmra.mxu0 %v831
  %v1047 = vpop.f32.mrf.mxu0
  %v1048 = vadd.f32 %v869, %v1047
  %v1049 = vpop.f32.mrf.mxu0
  %v1050 = vadd.f32 %v869, %v1049
  %1051 = vmatmul.bf16.gmra.mxu0 %v833
  %v1052 = vpop.f32.mrf.mxu0
  %v1053 = vadd.f32 %v869, %v1052
  %v1054 = vpop.f32.mrf.mxu0
  %1055 = vdwg.mxu0
  %1056 = vmatpush.bf16.msra.mxu0 %v999
  %1057 = vmatpush.bf16.msra.mxu0 %v997
  %1058 = vmatpush.bf16.msra.mxu0 %v995
  %1059 = vmatpush.bf16.msra.mxu0 %v993
  %1060 = vmatpush.bf16.msra.mxu0 %v991
  %1061 = vmatpush.bf16.msra.mxu0 %v989
  %1062 = vmatpush.bf16.msra.mxu0 %v987
  %1063 = vmatpush.bf16.msra.mxu0 %v985
  %1064 = vmatmul.bf16.gmra.mxu0 %v830
  %v1065 = vpop.f32.mrf.mxu0
  %v1066 = vadd.f32 %v1043, %v1065
  %v1067 = vpop.f32.mrf.mxu0
  %v1068 = vadd.f32 %v1045, %v1067
  %1069 = vmatmul.bf16.gmra.mxu0 %v832
  %v1070 = vpop.f32.mrf.mxu0
  %v1071 = vadd.f32 %v1048, %v1070
  %v1072 = vpop.f32.mrf.mxu0
  %v1073 = vadd.f32 %v1050, %v1072
  %1074 = vmatmul.bf16.gmra.mxu0 %v834
  %v1075 = vpop.f32.mrf.mxu0
  %v1076 = vadd.f32 %v1053, %v1075
  %v1077 = vpop.f32.mrf.mxu0
  %1078 = vdwg.mxu0
  %1079 = vmatpush.bf16.msra.mxu0 %v984
  %1080 = vmatpush.bf16.msra.mxu0 %v982
  %1081 = vmatpush.bf16.msra.mxu0 %v980
  %1082 = vmatpush.bf16.msra.mxu0 %v978
  %1083 = vmatpush.bf16.msra.mxu0 %v976
  %1084 = vmatpush.bf16.msra.mxu0 %v974
  %1085 = vmatpush.bf16.msra.mxu0 %v972
  %1086 = vmatpush.bf16.msra.mxu0 %v970
  %1087 = vmatmul.bf16.gmra.mxu0 %v829
  %v1088 = vpop.f32.mrf.mxu0
  %v1089 = vadd.f32 %v870, %v1088
  %v1090 = vpop.f32.mrf.mxu0
  %v1091 = vadd.f32 %v870, %v1090
  %1092 = vmatmul.bf16.gmra.mxu0 %v831
  %v1093 = vpop.f32.mrf.mxu0
  %v1094 = vadd.f32 %v870, %v1093
  %v1095 = vpop.f32.mrf.mxu0
  %v1096 = vadd.f32 %v870, %v1095
  %1097 = vmatmul.bf16.gmra.mxu0 %v833
  %v1098 = vpop.f32.mrf.mxu0
  %v1099 = vadd.f32 %v870, %v1098
  %v1100 = vpop.f32.mrf.mxu0
  %1101 = vdwg.mxu0
  %1102 = vmatpush.bf16.msra.mxu0 %v1000
  %1103 = vmatpush.bf16.msra.mxu0 %v998
  %1104 = vmatpush.bf16.msra.mxu0 %v996
  %1105 = vmatpush.bf16.msra.mxu0 %v994
  %1106 = vmatpush.bf16.msra.mxu0 %v992
  %1107 = vmatpush.bf16.msra.mxu0 %v990
  %1108 = vmatpush.bf16.msra.mxu0 %v988
  %1109 = vmatpush.bf16.msra.mxu0 %v986
  %1110 = vmatmul.bf16.gmra.mxu0 %v830
  %v1111 = vpop.f32.mrf.mxu0
  %v1112 = vadd.f32 %v1089, %v1111
  %v1113 = vpop.f32.mrf.mxu0
  %v1114 = vadd.f32 %v1091, %v1113
  %1115 = vmatmul.bf16.gmra.mxu0 %v832
  %v1116 = vpop.f32.mrf.mxu0
  %v1117 = vadd.f32 %v1094, %v1116
  %v1118 = vpop.f32.mrf.mxu0
  %v1119 = vadd.f32 %v1096, %v1118
  %1120 = vmatmul.bf16.gmra.mxu0 %v834
  %v1121 = vpop.f32.mrf.mxu0
  %v1122 = vadd.f32 %v1099, %v1121
  %v1123 = vpop.f32.mrf.mxu0
  %1124 = vdwg.mxu0
  %v1125 = vadd.f32 %v1066, %v1112
  %1126 = vadd.xlane.f32.xlu0 %v1125
  %v1127 = vpop.xlane.xlu0 %1126
  %v1128 = vadd.f32 %v1068, %v1114
  %1129 = vadd.xlane.f32.xlu0 %v1128
  %v1130 = vpop.xlane.xlu0 %1129
  %v1131 = vadd.f32 %v1071, %v1117
  %1132 = vadd.xlane.f32.xlu0 %v1131
  %v1133 = vpop.xlane.xlu0 %1132
  %v1134 = vadd.f32 %v1073, %v1119
  %1135 = vadd.xlane.f32.xlu0 %v1134
  %v1136 = vpop.xlane.xlu0 %1135
  %v1137 = vadd.f32 %v1076, %v1122
  %1138 = vadd.xlane.f32.xlu0 %v1137
  %v1139 = vpop.xlane.xlu0 %1138
  %v1140 = vrcp.pop 256.0
  %v1141 = vmul.f32 256.0, %v1140
  %v1142 = vsub.f32 1.0, %v1141
  %v1143 = vmul.f32 %v1140, %v1142
  %v1144 = vadd.f32 %v1140, %v1143
  %vm1145 = vweird.f32 %v1140
  %v1146 = vsel %vm1145, %v1140, %v1144
  %v1147 = vmul.f32 %v1127, %v1146
  %v1148 = vmul.f32 %v1130, %v1146
  %v1149 = vmul.f32 %v1133, %v1146
  %v1150 = vmul.f32 %v1136, %v1146
  %v1151 = vmul.f32 %v1139, %v1146
  %v1152 = vmul.f32 %v1066, %v1066
  %v1153 = vmul.f32 %v1112, %v1112
  %v1154 = vmul.f32 %v1068, %v1068
  %v1155 = vmul.f32 %v1114, %v1114
  %v1156 = vmul.f32 %v1071, %v1071
  %v1157 = vmul.f32 %v1117, %v1117
  %v1158 = vmul.f32 %v1073, %v1073
  %v1159 = vmul.f32 %v1119, %v1119
  %v1160 = vmul.f32 %v1076, %v1076
  %v1161 = vmul.f32 %v1122, %v1122
  %v1162 = vadd.f32 %v1152, %v1153
  %1163 = vadd.xlane.f32.xlu0 %v1162
  %v1164 = vpop.xlane.xlu0 %1163
  %v1165 = vadd.f32 %v1154, %v1155
  %1166 = vadd.xlane.f32.xlu0 %v1165
  %v1167 = vpop.xlane.xlu0 %1166
  %v1168 = vadd.f32 %v1156, %v1157
  %1169 = vadd.xlane.f32.xlu0 %v1168
  %v1170 = vpop.xlane.xlu0 %1169
  %v1171 = vadd.f32 %v1158, %v1159
  %1172 = vadd.xlane.f32.xlu0 %v1171
  %v1173 = vpop.xlane.xlu0 %1172
  %v1174 = vadd.f32 %v1160, %v1161
  %1175 = vadd.xlane.f32.xlu0 %v1174
  %v1176 = vpop.xlane.xlu0 %1175
  %v1177 = vmul.f32 %v1164, %v1146
  %v1178 = vmul.f32 %v1167, %v1146
  %v1179 = vmul.f32 %v1170, %v1146
  %v1180 = vmul.f32 %v1173, %v1146
  %v1181 = vmul.f32 %v1176, %v1146
  %v1182 = vmul.f32 %v1147, %v1147
  %v1183 = vmul.f32 %v1148, %v1148
  %v1184 = vmul.f32 %v1149, %v1149
  %v1185 = vmul.f32 %v1150, %v1150
  %v1186 = vmul.f32 %v1151, %v1151
  %v1187 = vsub.f32 %v1177, %v1182
  %v1188 = vsub.f32 %v1178, %v1183
  %v1189 = vsub.f32 %v1179, %v1184
  %v1190 = vsub.f32 %v1180, %v1185
  %v1191 = vsub.f32 %v1181, %v1186
  %v1192 = vsub.f32 %v1066, %v1147
  %v1193 = vsub.f32 %v1112, %v1147
  %v1194 = vsub.f32 %v1068, %v1148
  %v1195 = vsub.f32 %v1114, %v1148
  %v1196 = vsub.f32 %v1071, %v1149
  %v1197 = vsub.f32 %v1117, %v1149
  %v1198 = vsub.f32 %v1073, %v1150
  %v1199 = vsub.f32 %v1119, %v1150
  %v1200 = vsub.f32 %v1076, %v1151
  %v1201 = vsub.f32 %v1122, %v1151
  %v1202 = vadd.f32 %v1187, 1e-05
  %v1203 = vadd.f32 %v1188, 1e-05
  %v1204 = vadd.f32 %v1189, 1e-05
  %v1205 = vadd.f32 %v1190, 1e-05
  %v1206 = vadd.f32 %v1191, 1e-05
  %v1207 = vrsqrt.pop %v1202
  %v1208 = vmul.f32 %v1207, %v1202
  %v1209 = vmul.f32 %v1208, %v1207
  %v1210 = vmul.f32 0.5, %v1209
  %v1211 = vsub.f32 1.5, %v1210
  %v1212 = vmul.f32 %v1207, %v1211
  %vm1213 = vweird.f32 %v1202
  %vm1214 = vweird.f32 %v1207
  %vm1215 = vmor %vm1213, %vm1214
  %v1216 = vsel %vm1215, %v1207, %v1212
  %v1217 = vrsqrt.pop %v1203
  %v1218 = vmul.f32 %v1217, %v1203
  %v1219 = vmul.f32 %v1218, %v1217
  %v1220 = vmul.f32 0.5, %v1219
  %v1221 = vsub.f32 1.5, %v1220
  %v1222 = vmul.f32 %v1217, %v1221
  %vm1223 = vweird.f32 %v1203
  %vm1224 = vweird.f32 %v1217
  %vm1225 = vmor %vm1223, %vm1224
  %v1226 = vsel %vm1225, %v1217, %v1222
  %v1227 = vrsqrt.pop %v1204
  %v1228 = vmul.f32 %v1227, %v1204
  %v1229 = vmul.f32 %v1228, %v1227
  %v1230 = vmul.f32 0.5, %v1229
  %v1231 = vsub.f32 1.5, %v1230
  %v1232 = vmul.f32 %v1227, %v1231
  %vm1233 = vweird.f32 %v1204
  %vm1234 = vweird.f32 %v1227
  %vm1235 = vmor %vm1233, %vm1234
  %v1236 = vsel %vm1235, %v1227, %v1232
  %v1237 = vrsqrt.pop %v1205
  %v1238 = vmul.f32 %v1237, %v1205
  %v1239 = vmul.f32 %v1238, %v1237
  %v1240 = vmul.f32 0.5, %v1239
  %v1241 = vsub.f32 1.5, %v1240
  %v1242 = vmul.f32 %v1237, %v1241
  %vm1243 = vweird.f32 %v1205
  %vm1244 = vweird.f32 %v1237
  %vm1245 = vmor %vm1243, %vm1244
  %v1246 = vsel %vm1245, %v1237, %v1242
  %v1247 = vrsqrt.pop %v1206
  %v1248 = vmul.f32 %v1247, %v1206
  %v1249 = vmul.f32 %v1248, %v1247
  %v1250 = vmul.f32 0.5, %v1249
  %v1251 = vsub.f32 1.5, %v1250
  %v1252 = vmul.f32 %v1247, %v1251
  %vm1253 = vweird.f32 %v1206
  %vm1254 = vweird.f32 %v1247
  %vm1255 = vmor %vm1253, %vm1254
  %v1256 = vsel %vm1255, %v1247, %v1252
  %v1257 = vmul.f32 %v1192, %v1216
  %v1258 = vmul.f32 %v1193, %v1216
  %v1259 = vmul.f32 %v1194, %v1226
  %v1260 = vmul.f32 %v1195, %v1226
  %v1261 = vmul.f32 %v1196, %v1236
  %v1262 = vmul.f32 %v1197, %v1236
  %v1263 = vmul.f32 %v1198, %v1246
  %v1264 = vmul.f32 %v1199, %v1246
  %v1265 = vmul.f32 %v1200, %v1256
  %v1266 = vmul.f32 %v1201, %v1256
  %v1267 = vld [vmem:[%s10] sm:$0x3]
  %v1269 = vperm.slane %v1267, 0
  %v1270 = vperm.slane %v1267, 1
  %v1273 = vmul.f32 %v1257, %v1269
  %v1274 = vmul.f32 %v1258, %v1270
  %v1275 = vmul.f32 %v1259, %v1269
  %v1276 = vmul.f32 %v1260, %v1270
  %v1277 = vmul.f32 %v1261, %v1269
  %v1278 = vmul.f32 %v1262, %v1270
  %v1279 = vmul.f32 %v1263, %v1269
  %v1280 = vmul.f32 %v1264, %v1270
  %v1281 = vmul.f32 %v1265, %v1269
  %v1282 = vmul.f32 %v1266, %v1270
  %v1283 = vld [vmem:[%s11] sm:$0x3]
  %v1285 = vperm.slane %v1283, 0
  %v1286 = vperm.slane %v1283, 1
  %v1289 = vadd.f32 %v1273, %v1285
  %v1290 = vadd.f32 %v1274, %v1286
  %v1291 = vadd.f32 %v1275, %v1285
  %v1292 = vadd.f32 %v1276, %v1286
  %v1293 = vadd.f32 %v1277, %v1285
  %v1294 = vadd.f32 %v1278, %v1286
  %v1295 = vadd.f32 %v1279, %v1285
  %v1296 = vadd.f32 %v1280, %v1286
  %v1297 = vadd.f32 %v1281, %v1285
  %v1298 = vadd.f32 %v1282, %v1286
  %v1299 = vpack.c.bf16 %v1291, %v1289
  %v1300 = vpack.c.bf16 %v1292, %v1290
  %v1301 = vpack.c.bf16 %v1295, %v1293
  %v1302 = vpack.c.bf16 %v1296, %v1294
  %v1303 = vpack.c.bf16 %v1297, %v1297
  %v1304 = vpack.c.bf16 %v1298, %v1298
  %v1305 = vld [vmem:[%s12] sm:$0xff]
  %v1306 = vld [vmem:[%s12 + $0x8] sm:$0xff]
  %v1307 = vld [vmem:[%s12 + $0x10] sm:$0xff]
  %v1308 = vld [vmem:[%s12 + $0x18] sm:$0xff]
  %v1309 = vld [vmem:[%s12 + $0x20] sm:$0xff]
  %v1310 = vld [vmem:[%s12 + $0x28] sm:$0xff]
  %v1311 = vld [vmem:[%s12 + $0x30] sm:$0xff]
  %v1312 = vld [vmem:[%s12 + $0x38] sm:$0xff]
  %v1313 = vld [vmem:[%s12 + $0x40] sm:$0xff]
  %v1314 = vld [vmem:[%s12 + $0x48] sm:$0xff]
  %v1315 = vld [vmem:[%s12 + $0x50] sm:$0xff]
  %v1316 = vld [vmem:[%s12 + $0x58] sm:$0xff]
  %v1317 = vld [vmem:[%s12 + $0x60] sm:$0xff]
  %v1318 = vld [vmem:[%s12 + $0x68] sm:$0xff]
  %v1319 = vld [vmem:[%s12 + $0x70] sm:$0xff]
  %v1320 = vld [vmem:[%s12 + $0x78] sm:$0xff]
  %v1321 = vld [vmem:[%s12 + $0x80] sm:$0xff]
  %v1322 = vld [vmem:[%s12 + $0x88] sm:$0xff]
  %v1323 = vld [vmem:[%s12 + $0x90] sm:$0xff]
  %v1324 = vld [vmem:[%s12 + $0x98] sm:$0xff]
  %v1325 = vld [vmem:[%s12 + $0xa0] sm:$0xff]
  %v1326 = vld [vmem:[%s12 + $0xa8] sm:$0xff]
  %v1327 = vld [vmem:[%s12 + $0xb0] sm:$0xff]
  %v1328 = vld [vmem:[%s12 + $0xb8] sm:$0xff]
  %v1329 = vld [vmem:[%s12 + $0xc0] sm:$0xff]
  %v1330 = vld [vmem:[%s12 + $0xc8] sm:$0xff]
  %v1331 = vld [vmem:[%s12 + $0xd0] sm:$0xff]
  %v1332 = vld [vmem:[%s12 + $0xd8] sm:$0xff]
  %v1333 = vld [vmem:[%s12 + $0xe0] sm:$0xff]
  %v1334 = vld [vmem:[%s12 + $0xe8] sm:$0xff]
  %v1335 = vld [vmem:[%s12 + $0xf0] sm:$0xff]
  %v1336 = vld [vmem:[%s12 + $0xf8] sm:$0xff]
  %v1337 = vld [vmem:[%s13] sm:$0x3]
  %v1339 = vperm.slane %v1337, 0
  %v1340 = vperm.slane %v1337, 1
  %v1375 = vunpack.c.l.b16 %v1305
  %v1376 = vunpack.c.h.b16 %v1305
  %v1377 = vunpack.c.l.b16 %v1306
  %v1378 = vunpack.c.h.b16 %v1306
  %v1379 = vunpack.c.l.b16 %v1307
  %v1380 = vunpack.c.h.b16 %v1307
  %v1381 = vunpack.c.l.b16 %v1308
  %v1382 = vunpack.c.h.b16 %v1308
  %v1383 = vunpack.c.l.b16 %v1309
  %v1384 = vunpack.c.h.b16 %v1309
  %v1385 = vunpack.c.l.b16 %v1310
  %v1386 = vunpack.c.h.b16 %v1310
  %v1387 = vunpack.c.l.b16 %v1311
  %v1388 = vunpack.c.h.b16 %v1311
  %v1389 = vunpack.c.l.b16 %v1312
  %v1390 = vunpack.c.h.b16 %v1312
  %v1391 = vunpack.c.l.b16 %v1313
  %v1392 = vunpack.c.h.b16 %v1313
  %v1393 = vunpack.c.l.b16 %v1314
  %v1394 = vunpack.c.h.b16 %v1314
  %v1395 = vunpack.c.l.b16 %v1315
  %v1396 = vunpack.c.h.b16 %v1315
  %v1397 = vunpack.c.l.b16 %v1316
  %v1398 = vunpack.c.h.b16 %v1316
  %v1399 = vunpack.c.l.b16 %v1317
  %v1400 = vunpack.c.h.b16 %v1317
  %v1401 = vunpack.c.l.b16 %v1318
  %v1402 = vunpack.c.h.b16 %v1318
  %v1403 = vunpack.c.l.b16 %v1319
  %v1404 = vunpack.c.h.b16 %v1319
  %v1405 = vunpack.c.l.b16 %v1320
  %v1406 = vunpack.c.h.b16 %v1320
  %v1407 = vunpack.c.l.b16 %v1321
  %v1408 = vunpack.c.h.b16 %v1321
  %v1409 = vunpack.c.l.b16 %v1322
  %v1410 = vunpack.c.h.b16 %v1322
  %v1411 = vunpack.c.l.b16 %v1323
  %v1412 = vunpack.c.h.b16 %v1323
  %v1413 = vunpack.c.l.b16 %v1324
  %v1414 = vunpack.c.h.b16 %v1324
  %v1415 = vunpack.c.l.b16 %v1325
  %v1416 = vunpack.c.h.b16 %v1325
  %v1417 = vunpack.c.l.b16 %v1326
  %v1418 = vunpack.c.h.b16 %v1326
  %v1419 = vunpack.c.l.b16 %v1327
  %v1420 = vunpack.c.h.b16 %v1327
  %v1421 = vunpack.c.l.b16 %v1328
  %v1422 = vunpack.c.h.b16 %v1328
  %v1423 = vunpack.c.l.b16 %v1329
  %v1424 = vunpack.c.h.b16 %v1329
  %v1425 = vunpack.c.l.b16 %v1330
  %v1426 = vunpack.c.h.b16 %v1330
  %v1427 = vunpack.c.l.b16 %v1331
  %v1428 = vunpack.c.h.b16 %v1331
  %v1429 = vunpack.c.l.b16 %v1332
  %v1430 = vunpack.c.h.b16 %v1332
  %v1431 = vunpack.c.l.b16 %v1333
  %v1432 = vunpack.c.h.b16 %v1333
  %v1433 = vunpack.c.l.b16 %v1334
  %v1434 = vunpack.c.h.b16 %v1334
  %v1435 = vunpack.c.l.b16 %v1335
  %v1436 = vunpack.c.h.b16 %v1335
  %v1437 = vunpack.c.l.b16 %v1336
  %v1438 = vunpack.c.h.b16 %v1336
  %v1439 = vpack.c.b16 %v1377, %v1375
  %v1440 = vpack.c.b16 %v1378, %v1376
  %v1441 = vpack.c.b16 %v1381, %v1379
  %v1442 = vpack.c.b16 %v1382, %v1380
  %v1443 = vpack.c.b16 %v1385, %v1383
  %v1444 = vpack.c.b16 %v1386, %v1384
  %v1445 = vpack.c.b16 %v1389, %v1387
  %v1446 = vpack.c.b16 %v1390, %v1388
  %v1447 = vpack.c.b16 %v1393, %v1391
  %v1448 = vpack.c.b16 %v1394, %v1392
  %v1449 = vpack.c.b16 %v1397, %v1395
  %v1450 = vpack.c.b16 %v1398, %v1396
  %v1451 = vpack.c.b16 %v1401, %v1399
  %v1452 = vpack.c.b16 %v1402, %v1400
  %v1453 = vpack.c.b16 %v1405, %v1403
  %v1454 = vpack.c.b16 %v1406, %v1404
  %v1455 = vpack.c.b16 %v1409, %v1407
  %v1456 = vpack.c.b16 %v1410, %v1408
  %v1457 = vpack.c.b16 %v1413, %v1411
  %v1458 = vpack.c.b16 %v1414, %v1412
  %v1459 = vpack.c.b16 %v1417, %v1415
  %v1460 = vpack.c.b16 %v1418, %v1416
  %v1461 = vpack.c.b16 %v1421, %v1419
  %v1462 = vpack.c.b16 %v1422, %v1420
  %v1463 = vpack.c.b16 %v1425, %v1423
  %v1464 = vpack.c.b16 %v1426, %v1424
  %v1465 = vpack.c.b16 %v1429, %v1427
  %v1466 = vpack.c.b16 %v1430, %v1428
  %v1467 = vpack.c.b16 %v1433, %v1431
  %v1468 = vpack.c.b16 %v1434, %v1432
  %v1469 = vpack.c.b16 %v1437, %v1435
  %v1470 = vpack.c.b16 %v1438, %v1436
  %1503 = vmatpush.bf16.msra.mxu0 %v1453
  %1504 = vmatpush.bf16.msra.mxu0 %v1451
  %1505 = vmatpush.bf16.msra.mxu0 %v1449
  %1506 = vmatpush.bf16.msra.mxu0 %v1447
  %1507 = vmatpush.bf16.msra.mxu0 %v1445
  %1508 = vmatpush.bf16.msra.mxu0 %v1443
  %1509 = vmatpush.bf16.msra.mxu0 %v1441
  %1510 = vmatpush.bf16.msra.mxu0 %v1439
  %1511 = vmatmul.bf16.gmra.mxu0 %v1299
  %v1512 = vpop.f32.mrf.mxu0
  %v1513 = vadd.f32 %v1339, %v1512
  %v1514 = vpop.f32.mrf.mxu0
  %v1515 = vadd.f32 %v1339, %v1514
  %1516 = vmatmul.bf16.gmra.mxu0 %v1301
  %v1517 = vpop.f32.mrf.mxu0
  %v1518 = vadd.f32 %v1339, %v1517
  %v1519 = vpop.f32.mrf.mxu0
  %v1520 = vadd.f32 %v1339, %v1519
  %1521 = vmatmul.bf16.gmra.mxu0 %v1303
  %v1522 = vpop.f32.mrf.mxu0
  %v1523 = vadd.f32 %v1339, %v1522
  %v1524 = vpop.f32.mrf.mxu0
  %1525 = vdwg.mxu0
  %1526 = vmatpush.bf16.msra.mxu0 %v1469
  %1527 = vmatpush.bf16.msra.mxu0 %v1467
  %1528 = vmatpush.bf16.msra.mxu0 %v1465
  %1529 = vmatpush.bf16.msra.mxu0 %v1463
  %1530 = vmatpush.bf16.msra.mxu0 %v1461
  %1531 = vmatpush.bf16.msra.mxu0 %v1459
  %1532 = vmatpush.bf16.msra.mxu0 %v1457
  %1533 = vmatpush.bf16.msra.mxu0 %v1455
  %1534 = vmatmul.bf16.gmra.mxu0 %v1300
  %v1535 = vpop.f32.mrf.mxu0
  %v1536 = vadd.f32 %v1513, %v1535
  %v1537 = vpop.f32.mrf.mxu0
  %v1538 = vadd.f32 %v1515, %v1537
  %1539 = vmatmul.bf16.gmra.mxu0 %v1302
  %v1540 = vpop.f32.mrf.mxu0
  %v1541 = vadd.f32 %v1518, %v1540
  %v1542 = vpop.f32.mrf.mxu0
  %v1543 = vadd.f32 %v1520, %v1542
  %1544 = vmatmul.bf16.gmra.mxu0 %v1304
  %v1545 = vpop.f32.mrf.mxu0
  %v1546 = vadd.f32 %v1523, %v1545
  %v1547 = vpop.f32.mrf.mxu0
  %1548 = vdwg.mxu0
  %1549 = vmatpush.bf16.msra.mxu0 %v1454
  %1550 = vmatpush.bf16.msra.mxu0 %v1452
  %1551 = vmatpush.bf16.msra.mxu0 %v1450
  %1552 = vmatpush.bf16.msra.mxu0 %v1448
  %1553 = vmatpush.bf16.msra.mxu0 %v1446
  %1554 = vmatpush.bf16.msra.mxu0 %v1444
  %1555 = vmatpush.bf16.msra.mxu0 %v1442
  %1556 = vmatpush.bf16.msra.mxu0 %v1440
  %1557 = vmatmul.bf16.gmra.mxu0 %v1299
  %v1558 = vpop.f32.mrf.mxu0
  %v1559 = vadd.f32 %v1340, %v1558
  %v1560 = vpop.f32.mrf.mxu0
  %v1561 = vadd.f32 %v1340, %v1560
  %1562 = vmatmul.bf16.gmra.mxu0 %v1301
  %v1563 = vpop.f32.mrf.mxu0
  %v1564 = vadd.f32 %v1340, %v1563
  %v1565 = vpop.f32.mrf.mxu0
  %v1566 = vadd.f32 %v1340, %v1565
  %1567 = vmatmul.bf16.gmra.mxu0 %v1303
  %v1568 = vpop.f32.mrf.mxu0
  %v1569 = vadd.f32 %v1340, %v1568
  %v1570 = vpop.f32.mrf.mxu0
  %1571 = vdwg.mxu0
  %1572 = vmatpush.bf16.msra.mxu0 %v1470
  %1573 = vmatpush.bf16.msra.mxu0 %v1468
  %1574 = vmatpush.bf16.msra.mxu0 %v1466
  %1575 = vmatpush.bf16.msra.mxu0 %v1464
  %1576 = vmatpush.bf16.msra.mxu0 %v1462
  %1577 = vmatpush.bf16.msra.mxu0 %v1460
  %1578 = vmatpush.bf16.msra.mxu0 %v1458
  %1579 = vmatpush.bf16.msra.mxu0 %v1456
  %1580 = vmatmul.bf16.gmra.mxu0 %v1300
  %v1581 = vpop.f32.mrf.mxu0
  %v1582 = vadd.f32 %v1559, %v1581
  %v1583 = vpop.f32.mrf.mxu0
  %v1584 = vadd.f32 %v1561, %v1583
  %1585 = vmatmul.bf16.gmra.mxu0 %v1302
  %v1586 = vpop.f32.mrf.mxu0
  %v1587 = vadd.f32 %v1564, %v1586
  %v1588 = vpop.f32.mrf.mxu0
  %v1589 = vadd.f32 %v1566, %v1588
  %1590 = vmatmul.bf16.gmra.mxu0 %v1304
  %v1591 = vpop.f32.mrf.mxu0
  %v1592 = vadd.f32 %v1569, %v1591
  %v1593 = vpop.f32.mrf.mxu0
  %1594 = vdwg.mxu0
  %v1599 = vrot.slane %v1538, 2
  %v1600 = vrot.slane %v1541, 2
  %v1601 = vsel %vm646, %v1599, %v1600
  %v1602 = vrot.slane %v1584, 2
  %v1603 = vrot.slane %v1587, 2
  %v1604 = vsel %vm646, %v1602, %v1603
  %v1609 = vadd.f32 %v1536, %v1601
  %v1610 = vadd.f32 %v1582, %v1604
  %v1611 = vadd.f32 %v1538, %v1600
  %v1612 = vadd.f32 %v1584, %v1603
  %v1615 = vrot.slane %v1541, 4
  %v1616 = vrot.slane %v1543, 4
  %v1617 = vsel %vm676, %v1615, %v1616
  %v1618 = vrot.slane %v1587, 4
  %v1619 = vrot.slane %v1589, 4
  %v1620 = vsel %vm676, %v1618, %v1619
  %v1625 = vadd.f32 %v1609, %v1617
  %v1626 = vadd.f32 %v1610, %v1620
  %v1627 = vadd.f32 %v1611, %v1616
  %v1628 = vadd.f32 %v1612, %v1619
  %v1631 = vrot.slane %v1543, 6
  %v1632 = vrot.slane %v1546, 6
  %v1633 = vsel %vm90, %v1631, %v1632
  %v1634 = vrot.slane %v1589, 6
  %v1635 = vrot.slane %v1592, 6
  %v1636 = vsel %vm90, %v1634, %v1635
  %v1641 = vadd.f32 %v1625, %v1633
  %v1642 = vadd.f32 %v1626, %v1636
  %v1643 = vadd.f32 %v1627, %v1632
  %v1644 = vadd.f32 %v1628, %v1635
  %v1645 = vld [vmem:[%s1] sm:$0xf]
  %1647 = vst [vmem:[#allocation1] ss:$4 sm:$0xff] %v1645
  %v1648 = vld.sshfl [vmem:[#allocation1] sm:$0xff pattern:$0x73625140]
  %v1649 = vld.sshfl [vmem:[#allocation1 + $0x8] sm:$0xff pattern:$0x73625140]
  %v1652 = vpack.c.bf16 %v1648, %v1648
  %v1653 = vpack.c.bf16 %v1649, %v1649
  %v1654 = vld [vmem:[%s15] sm:$0xff]
  %v1655 = vld [vmem:[%s15 + $0x8] sm:$0xff]
  %v1656 = vld [vmem:[%s15 + $0x10] sm:$0xff]
  %v1657 = vld [vmem:[%s15 + $0x18] sm:$0xff]
  %v1658 = vld [vmem:[%s15 + $0x20] sm:$0xff]
  %v1659 = vld [vmem:[%s15 + $0x28] sm:$0xff]
  %v1660 = vld [vmem:[%s15 + $0x30] sm:$0xff]
  %v1661 = vld [vmem:[%s15 + $0x38] sm:$0xff]
  %v1662 = vld [vmem:[%s15 + $0x40] sm:$0xff]
  %v1663 = vld [vmem:[%s15 + $0x48] sm:$0xff]
  %v1664 = vld [vmem:[%s15 + $0x50] sm:$0xff]
  %v1665 = vld [vmem:[%s15 + $0x58] sm:$0xff]
  %v1666 = vld [vmem:[%s15 + $0x60] sm:$0xff]
  %v1667 = vld [vmem:[%s15 + $0x68] sm:$0xff]
  %v1668 = vld [vmem:[%s15 + $0x70] sm:$0xff]
  %v1669 = vld [vmem:[%s15 + $0x78] sm:$0xff]
  %v1670 = vld [vmem:[%s15 + $0x80] sm:$0xff]
  %v1671 = vld [vmem:[%s15 + $0x88] sm:$0xff]
  %v1672 = vld [vmem:[%s15 + $0x90] sm:$0xff]
  %v1673 = vld [vmem:[%s15 + $0x98] sm:$0xff]
  %v1674 = vld [vmem:[%s15 + $0xa0] sm:$0xff]
  %v1675 = vld [vmem:[%s15 + $0xa8] sm:$0xff]
  %v1676 = vld [vmem:[%s15 + $0xb0] sm:$0xff]
  %v1677 = vld [vmem:[%s15 + $0xb8] sm:$0xff]
  %v1678 = vld [vmem:[%s15 + $0xc0] sm:$0xff]
  %v1679 = vld [vmem:[%s15 + $0xc8] sm:$0xff]
  %v1680 = vld [vmem:[%s15 + $0xd0] sm:$0xff]
  %v1681 = vld [vmem:[%s15 + $0xd8] sm:$0xff]
  %v1682 = vld [vmem:[%s15 + $0xe0] sm:$0xff]
  %v1683 = vld [vmem:[%s15 + $0xe8] sm:$0xff]
  %v1684 = vld [vmem:[%s15 + $0xf0] sm:$0xff]
  %v1685 = vld [vmem:[%s15 + $0xf8] sm:$0xff]
  %v1718 = vunpack.c.l.b16 %v1654
  %v1719 = vunpack.c.h.b16 %v1654
  %v1720 = vunpack.c.l.b16 %v1655
  %v1721 = vunpack.c.h.b16 %v1655
  %v1722 = vunpack.c.l.b16 %v1656
  %v1723 = vunpack.c.h.b16 %v1656
  %v1724 = vunpack.c.l.b16 %v1657
  %v1725 = vunpack.c.h.b16 %v1657
  %v1726 = vunpack.c.l.b16 %v1658
  %v1727 = vunpack.c.h.b16 %v1658
  %v1728 = vunpack.c.l.b16 %v1659
  %v1729 = vunpack.c.h.b16 %v1659
  %v1730 = vunpack.c.l.b16 %v1660
  %v1731 = vunpack.c.h.b16 %v1660
  %v1732 = vunpack.c.l.b16 %v1661
  %v1733 = vunpack.c.h.b16 %v1661
  %v1734 = vunpack.c.l.b16 %v1662
  %v1735 = vunpack.c.h.b16 %v1662
  %v1736 = vunpack.c.l.b16 %v1663
  %v1737 = vunpack.c.h.b16 %v1663
  %v1738 = vunpack.c.l.b16 %v1664
  %v1739 = vunpack.c.h.b16 %v1664
  %v1740 = vunpack.c.l.b16 %v1665
  %v1741 = vunpack.c.h.b16 %v1665
  %v1742 = vunpack.c.l.b16 %v1666
  %v1743 = vunpack.c.h.b16 %v1666
  %v1744 = vunpack.c.l.b16 %v1667
  %v1745 = vunpack.c.h.b16 %v1667
  %v1746 = vunpack.c.l.b16 %v1668
  %v1747 = vunpack.c.h.b16 %v1668
  %v1748 = vunpack.c.l.b16 %v1669
  %v1749 = vunpack.c.h.b16 %v1669
  %v1750 = vunpack.c.l.b16 %v1670
  %v1751 = vunpack.c.h.b16 %v1670
  %v1752 = vunpack.c.l.b16 %v1671
  %v1753 = vunpack.c.h.b16 %v1671
  %v1754 = vunpack.c.l.b16 %v1672
  %v1755 = vunpack.c.h.b16 %v1672
  %v1756 = vunpack.c.l.b16 %v1673
  %v1757 = vunpack.c.h.b16 %v1673
  %v1758 = vunpack.c.l.b16 %v1674
  %v1759 = vunpack.c.h.b16 %v1674
  %v1760 = vunpack.c.l.b16 %v1675
  %v1761 = vunpack.c.h.b16 %v1675
  %v1762 = vunpack.c.l.b16 %v1676
  %v1763 = vunpack.c.h.b16 %v1676
  %v1764 = vunpack.c.l.b16 %v1677
  %v1765 = vunpack.c.h.b16 %v1677
  %v1766 = vunpack.c.l.b16 %v1678
  %v1767 = vunpack.c.h.b16 %v1678
  %v1768 = vunpack.c.l.b16 %v1679
  %v1769 = vunpack.c.h.b16 %v1679
  %v1770 = vunpack.c.l.b16 %v1680
  %v1771 = vunpack.c.h.b16 %v1680
  %v1772 = vunpack.c.l.b16 %v1681
  %v1773 = vunpack.c.h.b16 %v1681
  %v1774 = vunpack.c.l.b16 %v1682
  %v1775 = vunpack.c.h.b16 %v1682
  %v1776 = vunpack.c.l.b16 %v1683
  %v1777 = vunpack.c.h.b16 %v1683
  %v1778 = vunpack.c.l.b16 %v1684
  %v1779 = vunpack.c.h.b16 %v1684
  %v1780 = vunpack.c.l.b16 %v1685
  %v1781 = vunpack.c.h.b16 %v1685
  %v1782 = vpack.c.b16 %v1720, %v1718
  %v1783 = vpack.c.b16 %v1721, %v1719
  %v1784 = vpack.c.b16 %v1724, %v1722
  %v1785 = vpack.c.b16 %v1725, %v1723
  %v1786 = vpack.c.b16 %v1728, %v1726
  %v1787 = vpack.c.b16 %v1729, %v1727
  %v1788 = vpack.c.b16 %v1732, %v1730
  %v1789 = vpack.c.b16 %v1733, %v1731
  %v1790 = vpack.c.b16 %v1736, %v1734
  %v1791 = vpack.c.b16 %v1737, %v1735
  %v1792 = vpack.c.b16 %v1740, %v1738
  %v1793 = vpack.c.b16 %v1741, %v1739
  %v1794 = vpack.c.b16 %v1744, %v1742
  %v1795 = vpack.c.b16 %v1745, %v1743
  %v1796 = vpack.c.b16 %v1748, %v1746
  %v1797 = vpack.c.b16 %v1749, %v1747
  %v1798 = vpack.c.b16 %v1752, %v1750
  %v1799 = vpack.c.b16 %v1753, %v1751
  %v1800 = vpack.c.b16 %v1756, %v1754
  %v1801 = vpack.c.b16 %v1757, %v1755
  %v1802 = vpack.c.b16 %v1760, %v1758
  %v1803 = vpack.c.b16 %v1761, %v1759
  %v1804 = vpack.c.b16 %v1764, %v1762
  %v1805 = vpack.c.b16 %v1765, %v1763
  %v1806 = vpack.c.b16 %v1768, %v1766
  %v1807 = vpack.c.b16 %v1769, %v1767
  %v1808 = vpack.c.b16 %v1772, %v1770
  %v1809 = vpack.c.b16 %v1773, %v1771
  %v1810 = vpack.c.b16 %v1776, %v1774
  %v1811 = vpack.c.b16 %v1777, %v1775
  %v1812 = vpack.c.b16 %v1780, %v1778
  %v1813 = vpack.c.b16 %v1781, %v1779
  %1846 = vmatpush.bf16.msra.mxu0 %v1796
  %1847 = vmatpush.bf16.msra.mxu0 %v1794
  %1848 = vmatpush.bf16.msra.mxu0 %v1792
  %1849 = vmatpush.bf16.msra.mxu0 %v1790
  %1850 = vmatpush.bf16.msra.mxu0 %v1788
  %1851 = vmatpush.bf16.msra.mxu0 %v1786
  %1852 = vmatpush.bf16.msra.mxu0 %v1784
  %1853 = vmatpush.bf16.msra.mxu0 %v1782
  %1854 = vmatmul.bf16.gmra.mxu0 %v1652
  %v1855 = vpop.f32.mrf.mxu0
  %v1856 = vadd.f32 0.0, %v1855
  %v1857 = vpop.f32.mrf.mxu0
  %1858 = vdwg.mxu0
  %1859 = vmatpush.bf16.msra.mxu0 %v1812
  %1860 = vmatpush.bf16.msra.mxu0 %v1810
  %1861 = vmatpush.bf16.msra.mxu0 %v1808
  %1862 = vmatpush.bf16.msra.mxu0 %v1806
  %1863 = vmatpush.bf16.msra.mxu0 %v1804
  %1864 = vmatpush.bf16.msra.mxu0 %v1802
  %1865 = vmatpush.bf16.msra.mxu0 %v1800
  %1866 = vmatpush.bf16.msra.mxu0 %v1798
  %1867 = vmatmul.bf16.gmra.mxu0 %v1653
  %v1868 = vpop.f32.mrf.mxu0
  %v1869 = vadd.f32 %v1856, %v1868
  %v1870 = vpop.f32.mrf.mxu0
  %1871 = vdwg.mxu0
  %1872 = vmatpush.bf16.msra.mxu0 %v1797
  %1873 = vmatpush.bf16.msra.mxu0 %v1795
  %1874 = vmatpush.bf16.msra.mxu0 %v1793
  %1875 = vmatpush.bf16.msra.mxu0 %v1791
  %1876 = vmatpush.bf16.msra.mxu0 %v1789
  %1877 = vmatpush.bf16.msra.mxu0 %v1787
  %1878 = vmatpush.bf16.msra.mxu0 %v1785
  %1879 = vmatpush.bf16.msra.mxu0 %v1783
  %1880 = vmatmul.bf16.gmra.mxu0 %v1652
  %v1881 = vpop.f32.mrf.mxu0
  %v1882 = vadd.f32 0.0, %v1881
  %v1883 = vpop.f32.mrf.mxu0
  %1884 = vdwg.mxu0
  %1885 = vmatpush.bf16.msra.mxu0 %v1813
  %1886 = vmatpush.bf16.msra.mxu0 %v1811
  %1887 = vmatpush.bf16.msra.mxu0 %v1809
  %1888 = vmatpush.bf16.msra.mxu0 %v1807
  %1889 = vmatpush.bf16.msra.mxu0 %v1805
  %1890 = vmatpush.bf16.msra.mxu0 %v1803
  %1891 = vmatpush.bf16.msra.mxu0 %v1801
  %1892 = vmatpush.bf16.msra.mxu0 %v1799
  %1893 = vmatmul.bf16.gmra.mxu0 %v1653
  %v1894 = vpop.f32.mrf.mxu0
  %v1895 = vadd.f32 %v1882, %v1894
  %v1896 = vpop.f32.mrf.mxu0
  %1897 = vdwg.mxu0
  %v1898 = vld [vmem:[%s4] sm:$0xff]
  %v1899 = vld [vmem:[%s4 + $0x8] sm:$0x3]
  %vm1900 = vcmask 15360
  %v1902 = vsel %vm1900, %v1898, 0
  %v1905 = vsel %vm1900, %v1899, 0
  %v1908 = vsel %vm90, %v1869, 0
  %v1911 = vsel %vm90, %v1895, 0
  %1913 = vmatpush.msra.mxu0 0.0
  %1914 = vmatpush.msra.mxu0 0.0
  %1915 = vmatpush.msra.mxu0 0.0
  %1916 = vmatpush.msra.mxu0 0.0
  %1917 = vmatpush.msra.mxu0 0.0
  %1918 = vmatpush.msra.mxu0 0.0
  %1919 = vmatpush.msra.mxu0 0.0
  %1920 = vmatpush.msra.mxu0 0.0
  %1921 = vmatpush.msra.mxu0 0.0
  %1922 = vmatpush.msra.mxu0 0.0
  %1923 = vmatpush.msra.mxu0 0.0
  %1924 = vmatpush.msra.mxu0 0.0
  %1925 = vmatpush.msra.mxu0 0.0
  %1926 = vmatpush.msra.mxu0 0.0
  %1927 = vmatpush.msra.mxu0 0.0
  %1928 = vmatpush.msra.mxu0 %v1908
  %1929 = vmatmul.f32.gmra.mxu0 %v1902
  %v1930 = vpop.f32.mrf.mxu0
  %v1931 = vadd.f32 0.0, %v1930
  %1932 = vmatmul.f32.gmra.mxu0 %v1905
  %v1933 = vpop.f32.mrf.mxu0
  %v1934 = vadd.f32 0.0, %v1933
  %1935 = vdwg.mxu0
  %1936 = vmatpush.msra.mxu0 0.0
  %1937 = vmatpush.msra.mxu0 0.0
  %1938 = vmatpush.msra.mxu0 0.0
  %1939 = vmatpush.msra.mxu0 0.0
  %1940 = vmatpush.msra.mxu0 0.0
  %1941 = vmatpush.msra.mxu0 0.0
  %1942 = vmatpush.msra.mxu0 0.0
  %1943 = vmatpush.msra.mxu0 0.0
  %1944 = vmatpush.msra.mxu0 0.0
  %1945 = vmatpush.msra.mxu0 0.0
  %1946 = vmatpush.msra.mxu0 0.0
  %1947 = vmatpush.msra.mxu0 0.0
  %1948 = vmatpush.msra.mxu0 0.0
  %1949 = vmatpush.msra.mxu0 0.0
  %1950 = vmatpush.msra.mxu0 0.0
  %1951 = vmatpush.msra.mxu0 %v1911
  %1952 = vmatmul.f32.gmra.mxu0 %v1902
  %v1953 = vpop.f32.mrf.mxu0
  %v1954 = vadd.f32 0.0, %v1953
  %1955 = vmatmul.f32.gmra.mxu0 %v1905
  %v1956 = vpop.f32.mrf.mxu0
  %v1957 = vadd.f32 0.0, %v1956
  %1958 = vdwg.mxu0
  %v1959 = vld [vmem:[%s14] sm:$0xff]
  %v1960 = vld [vmem:[%s14 + $0x8] sm:$0xff]
  %v1961 = vld [vmem:[%s14 + $0x10] sm:$0xff]
  %v1962 = vld [vmem:[%s14 + $0x18] sm:$0xff]
  %v1963 = vld [vmem:[%s14 + $0x20] sm:$0xff]
  %v1964 = vld [vmem:[%s14 + $0x28] sm:$0xff]
  %v1965 = vld [vmem:[%s14 + $0x30] sm:$0xff]
  %v1966 = vld [vmem:[%s14 + $0x38] sm:$0xff]
  %v1967 = vld [vmem:[%s14 + $0x40] sm:$0xff]
  %v1968 = vld [vmem:[%s14 + $0x48] sm:$0xff]
  %v1969 = vld [vmem:[%s14 + $0x50] sm:$0xff]
  %v1970 = vld [vmem:[%s14 + $0x58] sm:$0xff]
  %v1971 = vld [vmem:[%s14 + $0x60] sm:$0xff]
  %v1972 = vld [vmem:[%s14 + $0x68] sm:$0xff]
  %v1973 = vld [vmem:[%s14 + $0x70] sm:$0xff]
  %v1974 = vld [vmem:[%s14 + $0x78] sm:$0xff]
  %v1975 = vld [vmem:[%s14 + $0x80] sm:$0xff]
  %v1976 = vld [vmem:[%s14 + $0x88] sm:$0xff]
  %v1977 = vld [vmem:[%s14 + $0x90] sm:$0xff]
  %v1978 = vld [vmem:[%s14 + $0x98] sm:$0xff]
  %v1979 = vld [vmem:[%s14 + $0xa0] sm:$0xff]
  %v1980 = vld [vmem:[%s14 + $0xa8] sm:$0xff]
  %v1981 = vld [vmem:[%s14 + $0xb0] sm:$0xff]
  %v1982 = vld [vmem:[%s14 + $0xb8] sm:$0xff]
  %v1983 = vld [vmem:[%s14 + $0xc0] sm:$0xff]
  %v1984 = vld [vmem:[%s14 + $0xc8] sm:$0xff]
  %v1985 = vld [vmem:[%s14 + $0xd0] sm:$0xff]
  %v1986 = vld [vmem:[%s14 + $0xd8] sm:$0xff]
  %v1987 = vld [vmem:[%s14 + $0xe0] sm:$0xff]
  %v1988 = vld [vmem:[%s14 + $0xe8] sm:$0xff]
  %v1989 = vld [vmem:[%s14 + $0xf0] sm:$0xff]
  %v1990 = vld [vmem:[%s14 + $0xf8] sm:$0xff]
  %v1991 = vpack.c.bf16 %v1643, %v1641
  %v1992 = vpack.c.bf16 %v1644, %v1642
  %v1993 = vld [vmem:[%s16] sm:$0xff]
  %v1994 = vld [vmem:[%s16 + $0x8] sm:$0xff]
  %v1995 = vld [vmem:[%s16 + $0x10] sm:$0xff]
  %v1996 = vld [vmem:[%s16 + $0x18] sm:$0xff]
  %v1997 = vld [vmem:[%s16 + $0x20] sm:$0xff]
  %v1998 = vld [vmem:[%s16 + $0x28] sm:$0xff]
  %v1999 = vld [vmem:[%s16 + $0x30] sm:$0xff]
  %v2000 = vld [vmem:[%s16 + $0x38] sm:$0xff]
  %v2001 = vld [vmem:[%s16 + $0x40] sm:$0xff]
  %v2002 = vld [vmem:[%s16 + $0x48] sm:$0xff]
  %v2003 = vld [vmem:[%s16 + $0x50] sm:$0xff]
  %v2004 = vld [vmem:[%s16 + $0x58] sm:$0xff]
  %v2005 = vld [vmem:[%s16 + $0x60] sm:$0xff]
  %v2006 = vld [vmem:[%s16 + $0x68] sm:$0xff]
  %v2007 = vld [vmem:[%s16 + $0x70] sm:$0xff]
  %v2008 = vld [vmem:[%s16 + $0x78] sm:$0xff]
  %v2009 = vld [vmem:[%s16 + $0x80] sm:$0xff]
  %v2010 = vld [vmem:[%s16 + $0x88] sm:$0xff]
  %v2011 = vld [vmem:[%s16 + $0x90] sm:$0xff]
  %v2012 = vld [vmem:[%s16 + $0x98] sm:$0xff]
  %v2013 = vld [vmem:[%s16 + $0xa0] sm:$0xff]
  %v2014 = vld [vmem:[%s16 + $0xa8] sm:$0xff]
  %v2015 = vld [vmem:[%s16 + $0xb0] sm:$0xff]
  %v2016 = vld [vmem:[%s16 + $0xb8] sm:$0xff]
  %v2017 = vld [vmem:[%s16 + $0xc0] sm:$0xff]
  %v2018 = vld [vmem:[%s16 + $0xc8] sm:$0xff]
  %v2019 = vld [vmem:[%s16 + $0xd0] sm:$0xff]
  %v2020 = vld [vmem:[%s16 + $0xd8] sm:$0xff]
  %v2021 = vld [vmem:[%s16 + $0xe0] sm:$0xff]
  %v2022 = vld [vmem:[%s16 + $0xe8] sm:$0xff]
  %v2023 = vld [vmem:[%s16 + $0xf0] sm:$0xff]
  %v2024 = vld [vmem:[%s16 + $0xf8] sm:$0xff]
  %v2057 = vunpack.c.l.b16 %v1993
  %v2058 = vunpack.c.h.b16 %v1993
  %v2059 = vunpack.c.l.b16 %v1994
  %v2060 = vunpack.c.h.b16 %v1994
  %v2061 = vunpack.c.l.b16 %v1995
  %v2062 = vunpack.c.h.b16 %v1995
  %v2063 = vunpack.c.l.b16 %v1996
  %v2064 = vunpack.c.h.b16 %v1996
  %v2065 = vunpack.c.l.b16 %v1997
  %v2066 = vunpack.c.h.b16 %v1997
  %v2067 = vunpack.c.l.b16 %v1998
  %v2068 = vunpack.c.h.b16 %v1998
  %v2069 = vunpack.c.l.b16 %v1999
  %v2070 = vunpack.c.h.b16 %v1999
  %v2071 = vunpack.c.l.b16 %v2000
  %v2072 = vunpack.c.h.b16 %v2000
  %v2073 = vunpack.c.l.b16 %v2001
  %v2074 = vunpack.c.h.b16 %v2001
  %v2075 = vunpack.c.l.b16 %v2002
  %v2076 = vunpack.c.h.b16 %v2002
  %v2077 = vunpack.c.l.b16 %v2003
  %v2078 = vunpack.c.h.b16 %v2003
  %v2079 = vunpack.c.l.b16 %v2004
  %v2080 = vunpack.c.h.b16 %v2004
  %v2081 = vunpack.c.l.b16 %v2005
  %v2082 = vunpack.c.h.b16 %v2005
  %v2083 = vunpack.c.l.b16 %v2006
  %v2084 = vunpack.c.h.b16 %v2006
  %v2085 = vunpack.c.l.b16 %v2007
  %v2086 = vunpack.c.h.b16 %v2007
  %v2087 = vunpack.c.l.b16 %v2008
  %v2088 = vunpack.c.h.b16 %v2008
  %v2089 = vunpack.c.l.b16 %v2009
  %v2090 = vunpack.c.h.b16 %v2009
  %v2091 = vunpack.c.l.b16 %v2010
  %v2092 = vunpack.c.h.b16 %v2010
  %v2093 = vunpack.c.l.b16 %v2011
  %v2094 = vunpack.c.h.b16 %v2011
  %v2095 = vunpack.c.l.b16 %v2012
  %v2096 = vunpack.c.h.b16 %v2012
  %v2097 = vunpack.c.l.b16 %v2013
  %v2098 = vunpack.c.h.b16 %v2013
  %v2099 = vunpack.c.l.b16 %v2014
  %v2100 = vunpack.c.h.b16 %v2014
  %v2101 = vunpack.c.l.b16 %v2015
  %v2102 = vunpack.c.h.b16 %v2015
  %v2103 = vunpack.c.l.b16 %v2016
  %v2104 = vunpack.c.h.b16 %v2016
  %v2105 = vunpack.c.l.b16 %v2017
  %v2106 = vunpack.c.h.b16 %v2017
  %v2107 = vunpack.c.l.b16 %v2018
  %v2108 = vunpack.c.h.b16 %v2018
  %v2109 = vunpack.c.l.b16 %v2019
  %v2110 = vunpack.c.h.b16 %v2019
  %v2111 = vunpack.c.l.b16 %v2020
  %v2112 = vunpack.c.h.b16 %v2020
  %v2113 = vunpack.c.l.b16 %v2021
  %v2114 = vunpack.c.h.b16 %v2021
  %v2115 = vunpack.c.l.b16 %v2022
  %v2116 = vunpack.c.h.b16 %v2022
  %v2117 = vunpack.c.l.b16 %v2023
  %v2118 = vunpack.c.h.b16 %v2023
  %v2119 = vunpack.c.l.b16 %v2024
  %v2120 = vunpack.c.h.b16 %v2024
  %v2121 = vpack.c.b16 %v2059, %v2057
  %v2122 = vpack.c.b16 %v2060, %v2058
  %v2123 = vpack.c.b16 %v2063, %v2061
  %v2124 = vpack.c.b16 %v2064, %v2062
  %v2125 = vpack.c.b16 %v2067, %v2065
  %v2126 = vpack.c.b16 %v2068, %v2066
  %v2127 = vpack.c.b16 %v2071, %v2069
  %v2128 = vpack.c.b16 %v2072, %v2070
  %v2129 = vpack.c.b16 %v2075, %v2073
  %v2130 = vpack.c.b16 %v2076, %v2074
  %v2131 = vpack.c.b16 %v2079, %v2077
  %v2132 = vpack.c.b16 %v2080, %v2078
  %v2133 = vpack.c.b16 %v2083, %v2081
  %v2134 = vpack.c.b16 %v2084, %v2082
  %v2135 = vpack.c.b16 %v2087, %v2085
  %v2136 = vpack.c.b16 %v2088, %v2086
  %v2137 = vpack.c.b16 %v2091, %v2089
  %v2138 = vpack.c.b16 %v2092, %v2090
  %v2139 = vpack.c.b16 %v2095, %v2093
  %v2140 = vpack.c.b16 %v2096, %v2094
  %v2141 = vpack.c.b16 %v2099, %v2097
  %v2142 = vpack.c.b16 %v2100, %v2098
  %v2143 = vpack.c.b16 %v2103, %v2101
  %v2144 = vpack.c.b16 %v2104, %v2102
  %v2145 = vpack.c.b16 %v2107, %v2105
  %v2146 = vpack.c.b16 %v2108, %v2106
  %v2147 = vpack.c.b16 %v2111, %v2109
  %v2148 = vpack.c.b16 %v2112, %v2110
  %v2149 = vpack.c.b16 %v2115, %v2113
  %v2150 = vpack.c.b16 %v2116, %v2114
  %v2151 = vpack.c.b16 %v2119, %v2117
  %v2152 = vpack.c.b16 %v2120, %v2118
  %2185 = vmatpush.bf16.msra.mxu0 %v2135
  %2186 = vmatpush.bf16.msra.mxu0 %v2133
  %2187 = vmatpush.bf16.msra.mxu0 %v2131
  %2188 = vmatpush.bf16.msra.mxu0 %v2129
  %2189 = vmatpush.bf16.msra.mxu0 %v2127
  %2190 = vmatpush.bf16.msra.mxu0 %v2125
  %2191 = vmatpush.bf16.msra.mxu0 %v2123
  %2192 = vmatpush.bf16.msra.mxu0 %v2121
  %2193 = vmatmul.bf16.gmra.mxu0 %v1991
  %v2194 = vpop.f32.mrf.mxu0
  %v2195 = vadd.f32 0.0, %v2194
  %v2196 = vpop.f32.mrf.mxu0
  %v2197 = vadd.f32 0.0, %v2196
  %2198 = vdwg.mxu0
  %2199 = vmatpush.bf16.msra.mxu0 %v2151
  %2200 = vmatpush.bf16.msra.mxu0 %v2149
  %2201 = vmatpush.bf16.msra.mxu0 %v2147
  %2202 = vmatpush.bf16.msra.mxu0 %v2145
  %2203 = vmatpush.bf16.msra.mxu0 %v2143
  %2204 = vmatpush.bf16.msra.mxu0 %v2141
  %2205 = vmatpush.bf16.msra.mxu0 %v2139
  %2206 = vmatpush.bf16.msra.mxu0 %v2137
  %2207 = vmatmul.bf16.gmra.mxu0 %v1992
  %v2208 = vpop.f32.mrf.mxu0
  %v2209 = vadd.f32 %v2195, %v2208
  %v2210 = vpop.f32.mrf.mxu0
  %v2211 = vadd.f32 %v2197, %v2210
  %2212 = vdwg.mxu0
  %2213 = vmatpush.bf16.msra.mxu0 %v2136
  %2214 = vmatpush.bf16.msra.mxu0 %v2134
  %2215 = vmatpush.bf16.msra.mxu0 %v2132
  %2216 = vmatpush.bf16.msra.mxu0 %v2130
  %2217 = vmatpush.bf16.msra.mxu0 %v2128
  %2218 = vmatpush.bf16.msra.mxu0 %v2126
  %2219 = vmatpush.bf16.msra.mxu0 %v2124
  %2220 = vmatpush.bf16.msra.mxu0 %v2122
  %2221 = vmatmul.bf16.gmra.mxu0 %v1991
  %v2222 = vpop.f32.mrf.mxu0
  %v2223 = vadd.f32 0.0, %v2222
  %v2224 = vpop.f32.mrf.mxu0
  %v2225 = vadd.f32 0.0, %v2224
  %2226 = vdwg.mxu0
  %2227 = vmatpush.bf16.msra.mxu0 %v2152
  %2228 = vmatpush.bf16.msra.mxu0 %v2150
  %2229 = vmatpush.bf16.msra.mxu0 %v2148
  %2230 = vmatpush.bf16.msra.mxu0 %v2146
  %2231 = vmatpush.bf16.msra.mxu0 %v2144
  %2232 = vmatpush.bf16.msra.mxu0 %v2142
  %2233 = vmatpush.bf16.msra.mxu0 %v2140
  %2234 = vmatpush.bf16.msra.mxu0 %v2138
  %2235 = vmatmul.bf16.gmra.mxu0 %v1992
  %v2236 = vpop.f32.mrf.mxu0
  %v2237 = vadd.f32 %v2223, %v2236
  %v2238 = vpop.f32.mrf.mxu0
  %v2239 = vadd.f32 %v2225, %v2238
  %2240 = vdwg.mxu0
  %v2273 = vunpack.c.l.b16 %v1959
  %v2274 = vunpack.c.h.b16 %v1959
  %v2275 = vunpack.c.l.b16 %v1960
  %v2276 = vunpack.c.h.b16 %v1960
  %v2277 = vunpack.c.l.b16 %v1961
  %v2278 = vunpack.c.h.b16 %v1961
  %v2279 = vunpack.c.l.b16 %v1962
  %v2280 = vunpack.c.h.b16 %v1962
  %v2281 = vunpack.c.l.b16 %v1963
  %v2282 = vunpack.c.h.b16 %v1963
  %v2283 = vunpack.c.l.b16 %v1964
  %v2284 = vunpack.c.h.b16 %v1964
  %v2285 = vunpack.c.l.b16 %v1965
  %v2286 = vunpack.c.h.b16 %v1965
  %v2287 = vunpack.c.l.b16 %v1966
  %v2288 = vunpack.c.h.b16 %v1966
  %v2289 = vunpack.c.l.b16 %v1967
  %v2290 = vunpack.c.h.b16 %v1967
  %v2291 = vunpack.c.l.b16 %v1968
  %v2292 = vunpack.c.h.b16 %v1968
  %v2293 = vunpack.c.l.b16 %v1969
  %v2294 = vunpack.c.h.b16 %v1969
  %v2295 = vunpack.c.l.b16 %v1970
  %v2296 = vunpack.c.h.b16 %v1970
  %v2297 = vunpack.c.l.b16 %v1971
  %v2298 = vunpack.c.h.b16 %v1971
  %v2299 = vunpack.c.l.b16 %v1972
  %v2300 = vunpack.c.h.b16 %v1972
  %v2301 = vunpack.c.l.b16 %v1973
  %v2302 = vunpack.c.h.b16 %v1973
  %v2303 = vunpack.c.l.b16 %v1974
  %v2304 = vunpack.c.h.b16 %v1974
  %v2305 = vunpack.c.l.b16 %v1975
  %v2306 = vunpack.c.h.b16 %v1975
  %v2307 = vunpack.c.l.b16 %v1976
  %v2308 = vunpack.c.h.b16 %v1976
  %v2309 = vunpack.c.l.b16 %v1977
  %v2310 = vunpack.c.h.b16 %v1977
  %v2311 = vunpack.c.l.b16 %v1978
  %v2312 = vunpack.c.h.b16 %v1978
  %v2313 = vunpack.c.l.b16 %v1979
  %v2314 = vunpack.c.h.b16 %v1979
  %v2315 = vunpack.c.l.b16 %v1980
  %v2316 = vunpack.c.h.b16 %v1980
  %v2317 = vunpack.c.l.b16 %v1981
  %v2318 = vunpack.c.h.b16 %v1981
  %v2319 = vunpack.c.l.b16 %v1982
  %v2320 = vunpack.c.h.b16 %v1982
  %v2321 = vunpack.c.l.b16 %v1983
  %v2322 = vunpack.c.h.b16 %v1983
  %v2323 = vunpack.c.l.b16 %v1984
  %v2324 = vunpack.c.h.b16 %v1984
  %v2325 = vunpack.c.l.b16 %v1985
  %v2326 = vunpack.c.h.b16 %v1985
  %v2327 = vunpack.c.l.b16 %v1986
  %v2328 = vunpack.c.h.b16 %v1986
  %v2329 = vunpack.c.l.b16 %v1987
  %v2330 = vunpack.c.h.b16 %v1987
  %v2331 = vunpack.c.l.b16 %v1988
  %v2332 = vunpack.c.h.b16 %v1988
  %v2333 = vunpack.c.l.b16 %v1989
  %v2334 = vunpack.c.h.b16 %v1989
  %v2335 = vunpack.c.l.b16 %v1990
  %v2336 = vunpack.c.h.b16 %v1990
  %v2337 = vpack.c.b16 %v2275, %v2273
  %v2338 = vpack.c.b16 %v2276, %v2274
  %v2339 = vpack.c.b16 %v2279, %v2277
  %v2340 = vpack.c.b16 %v2280, %v2278
  %v2341 = vpack.c.b16 %v2283, %v2281
  %v2342 = vpack.c.b16 %v2284, %v2282
  %v2343 = vpack.c.b16 %v2287, %v2285
  %v2344 = vpack.c.b16 %v2288, %v2286
  %v2345 = vpack.c.b16 %v2291, %v2289
  %v2346 = vpack.c.b16 %v2292, %v2290
  %v2347 = vpack.c.b16 %v2295, %v2293
  %v2348 = vpack.c.b16 %v2296, %v2294
  %v2349 = vpack.c.b16 %v2299, %v2297
  %v2350 = vpack.c.b16 %v2300, %v2298
  %v2351 = vpack.c.b16 %v2303, %v2301
  %v2352 = vpack.c.b16 %v2304, %v2302
  %v2353 = vpack.c.b16 %v2307, %v2305
  %v2354 = vpack.c.b16 %v2308, %v2306
  %v2355 = vpack.c.b16 %v2311, %v2309
  %v2356 = vpack.c.b16 %v2312, %v2310
  %v2357 = vpack.c.b16 %v2315, %v2313
  %v2358 = vpack.c.b16 %v2316, %v2314
  %v2359 = vpack.c.b16 %v2319, %v2317
  %v2360 = vpack.c.b16 %v2320, %v2318
  %v2361 = vpack.c.b16 %v2323, %v2321
  %v2362 = vpack.c.b16 %v2324, %v2322
  %v2363 = vpack.c.b16 %v2327, %v2325
  %v2364 = vpack.c.b16 %v2328, %v2326
  %v2365 = vpack.c.b16 %v2331, %v2329
  %v2366 = vpack.c.b16 %v2332, %v2330
  %v2367 = vpack.c.b16 %v2335, %v2333
  %v2368 = vpack.c.b16 %v2336, %v2334
  %2401 = vmatpush.bf16.msra.mxu0 %v2351
  %2402 = vmatpush.bf16.msra.mxu0 %v2349
  %2403 = vmatpush.bf16.msra.mxu0 %v2347
  %2404 = vmatpush.bf16.msra.mxu0 %v2345
  %2405 = vmatpush.bf16.msra.mxu0 %v2343
  %2406 = vmatpush.bf16.msra.mxu0 %v2341
  %2407 = vmatpush.bf16.msra.mxu0 %v2339
  %2408 = vmatpush.bf16.msra.mxu0 %v2337
  %2409 = vmatmul.bf16.gmra.mxu0 %v143
  %v2410 = vpop.f32.mrf.mxu0
  %v2411 = vadd.f32 %v2209, %v2410
  %v2412 = vpop.f32.mrf.mxu0
  %v2413 = vadd.f32 %v2211, %v2412
  %2414 = vdwg.mxu0
  %2415 = vmatpush.bf16.msra.mxu0 %v2367
  %2416 = vmatpush.bf16.msra.mxu0 %v2365
  %2417 = vmatpush.bf16.msra.mxu0 %v2363
  %2418 = vmatpush.bf16.msra.mxu0 %v2361
  %2419 = vmatpush.bf16.msra.mxu0 %v2359
  %2420 = vmatpush.bf16.msra.mxu0 %v2357
  %2421 = vmatpush.bf16.msra.mxu0 %v2355
  %2422 = vmatpush.bf16.msra.mxu0 %v2353
  %2423 = vmatmul.bf16.gmra.mxu0 %v144
  %v2424 = vpop.f32.mrf.mxu0
  %v2425 = vadd.f32 %v2411, %v2424
  %v2426 = vpop.f32.mrf.mxu0
  %v2427 = vadd.f32 %v2413, %v2426
  %2428 = vdwg.mxu0
  %2429 = vmatpush.bf16.msra.mxu0 %v2352
  %2430 = vmatpush.bf16.msra.mxu0 %v2350
  %2431 = vmatpush.bf16.msra.mxu0 %v2348
  %2432 = vmatpush.bf16.msra.mxu0 %v2346
  %2433 = vmatpush.bf16.msra.mxu0 %v2344
  %2434 = vmatpush.bf16.msra.mxu0 %v2342
  %2435 = vmatpush.bf16.msra.mxu0 %v2340
  %2436 = vmatpush.bf16.msra.mxu0 %v2338
  %2437 = vmatmul.bf16.gmra.mxu0 %v143
  %v2438 = vpop.f32.mrf.mxu0
  %v2439 = vadd.f32 %v2237, %v2438
  %v2440 = vpop.f32.mrf.mxu0
  %v2441 = vadd.f32 %v2239, %v2440
  %2442 = vdwg.mxu0
  %2443 = vmatpush.bf16.msra.mxu0 %v2368
  %2444 = vmatpush.bf16.msra.mxu0 %v2366
  %2445 = vmatpush.bf16.msra.mxu0 %v2364
  %2446 = vmatpush.bf16.msra.mxu0 %v2362
  %2447 = vmatpush.bf16.msra.mxu0 %v2360
  %2448 = vmatpush.bf16.msra.mxu0 %v2358
  %2449 = vmatpush.bf16.msra.mxu0 %v2356
  %2450 = vmatpush.bf16.msra.mxu0 %v2354
  %2451 = vmatmul.bf16.gmra.mxu0 %v144
  %v2452 = vpop.f32.mrf.mxu0
  %v2453 = vadd.f32 %v2439, %v2452
  %v2454 = vpop.f32.mrf.mxu0
  %v2455 = vadd.f32 %v2441, %v2454
  %2456 = vdwg.mxu0
  %v2457 = vadd.f32 %v2425, %v1931
  %v2458 = vadd.f32 %v2453, %v1954
  %v2459 = vadd.f32 %v2427, %v1934
  %v2460 = vadd.f32 %v2455, %v1957
  %v2461 = vld [vmem:[%s17] sm:$0x3]
  %v2463 = vperm.slane %v2461, 0
  %v2464 = vperm.slane %v2461, 1
  %v2467 = vadd.f32 %v2457, %v2463
  %v2468 = vadd.f32 %v2458, %v2464
  %v2469 = vadd.f32 %v2459, %v2463
  %v2470 = vadd.f32 %v2460, %v2464
  %v2471 = vmax.f32 %v2467, 0.0
  %v2472 = vmax.f32 %v2468, 0.0
  %v2473 = vmax.f32 %v2469, 0.0
  %v2474 = vmax.f32 %v2470, 0.0
  %v2475 = vpack.c.bf16 %v2473, %v2471
  %v2476 = vpack.c.bf16 %v2474, %v2472
  %v2477 = vld [vmem:[%s18] sm:$0xff]
  %v2478 = vld [vmem:[%s18 + $0x8] sm:$0xff]
  %v2479 = vld [vmem:[%s18 + $0x10] sm:$0xff]
  %v2480 = vld [vmem:[%s18 + $0x18] sm:$0xff]
  %v2481 = vld [vmem:[%s18 + $0x20] sm:$0xff]
  %v2482 = vld [vmem:[%s18 + $0x28] sm:$0xff]
  %v2483 = vld [vmem:[%s18 + $0x30] sm:$0xff]
  %v2484 = vld [vmem:[%s18 + $0x38] sm:$0xff]
  %v2485 = vld [vmem:[%s18 + $0x40] sm:$0xff]
  %v2486 = vld [vmem:[%s18 + $0x48] sm:$0xff]
  %v2487 = vld [vmem:[%s18 + $0x50] sm:$0xff]
  %v2488 = vld [vmem:[%s18 + $0x58] sm:$0xff]
  %v2489 = vld [vmem:[%s18 + $0x60] sm:$0xff]
  %v2490 = vld [vmem:[%s18 + $0x68] sm:$0xff]
  %v2491 = vld [vmem:[%s18 + $0x70] sm:$0xff]
  %v2492 = vld [vmem:[%s18 + $0x78] sm:$0xff]
  %v2493 = vld [vmem:[%s18 + $0x80] sm:$0xff]
  %v2494 = vld [vmem:[%s18 + $0x88] sm:$0xff]
  %v2495 = vld [vmem:[%s18 + $0x90] sm:$0xff]
  %v2496 = vld [vmem:[%s18 + $0x98] sm:$0xff]
  %v2497 = vld [vmem:[%s18 + $0xa0] sm:$0xff]
  %v2498 = vld [vmem:[%s18 + $0xa8] sm:$0xff]
  %v2499 = vld [vmem:[%s18 + $0xb0] sm:$0xff]
  %v2500 = vld [vmem:[%s18 + $0xb8] sm:$0xff]
  %v2501 = vld [vmem:[%s18 + $0xc0] sm:$0xff]
  %v2502 = vld [vmem:[%s18 + $0xc8] sm:$0xff]
  %v2503 = vld [vmem:[%s18 + $0xd0] sm:$0xff]
  %v2504 = vld [vmem:[%s18 + $0xd8] sm:$0xff]
  %v2505 = vld [vmem:[%s18 + $0xe0] sm:$0xff]
  %v2506 = vld [vmem:[%s18 + $0xe8] sm:$0xff]
  %v2507 = vld [vmem:[%s18 + $0xf0] sm:$0xff]
  %v2508 = vld [vmem:[%s18 + $0xf8] sm:$0xff]
  %v2509 = vld [vmem:[%s19] sm:$0x3]
  %v2511 = vperm.slane %v2509, 0
  %v2512 = vperm.slane %v2509, 1
  %v2547 = vunpack.c.l.b16 %v2477
  %v2548 = vunpack.c.h.b16 %v2477
  %v2549 = vunpack.c.l.b16 %v2478
  %v2550 = vunpack.c.h.b16 %v2478
  %v2551 = vunpack.c.l.b16 %v2479
  %v2552 = vunpack.c.h.b16 %v2479
  %v2553 = vunpack.c.l.b16 %v2480
  %v2554 = vunpack.c.h.b16 %v2480
  %v2555 = vunpack.c.l.b16 %v2481
  %v2556 = vunpack.c.h.b16 %v2481
  %v2557 = vunpack.c.l.b16 %v2482
  %v2558 = vunpack.c.h.b16 %v2482
  %v2559 = vunpack.c.l.b16 %v2483
  %v2560 = vunpack.c.h.b16 %v2483
  %v2561 = vunpack.c.l.b16 %v2484
  %v2562 = vunpack.c.h.b16 %v2484
  %v2563 = vunpack.c.l.b16 %v2485
  %v2564 = vunpack.c.h.b16 %v2485
  %v2565 = vunpack.c.l.b16 %v2486
  %v2566 = vunpack.c.h.b16 %v2486
  %v2567 = vunpack.c.l.b16 %v2487
  %v2568 = vunpack.c.h.b16 %v2487
  %v2569 = vunpack.c.l.b16 %v2488
  %v2570 = vunpack.c.h.b16 %v2488
  %v2571 = vunpack.c.l.b16 %v2489
  %v2572 = vunpack.c.h.b16 %v2489
  %v2573 = vunpack.c.l.b16 %v2490
  %v2574 = vunpack.c.h.b16 %v2490
  %v2575 = vunpack.c.l.b16 %v2491
  %v2576 = vunpack.c.h.b16 %v2491
  %v2577 = vunpack.c.l.b16 %v2492
  %v2578 = vunpack.c.h.b16 %v2492
  %v2579 = vunpack.c.l.b16 %v2493
  %v2580 = vunpack.c.h.b16 %v2493
  %v2581 = vunpack.c.l.b16 %v2494
  %v2582 = vunpack.c.h.b16 %v2494
  %v2583 = vunpack.c.l.b16 %v2495
  %v2584 = vunpack.c.h.b16 %v2495
  %v2585 = vunpack.c.l.b16 %v2496
  %v2586 = vunpack.c.h.b16 %v2496
  %v2587 = vunpack.c.l.b16 %v2497
  %v2588 = vunpack.c.h.b16 %v2497
  %v2589 = vunpack.c.l.b16 %v2498
  %v2590 = vunpack.c.h.b16 %v2498
  %v2591 = vunpack.c.l.b16 %v2499
  %v2592 = vunpack.c.h.b16 %v2499
  %v2593 = vunpack.c.l.b16 %v2500
  %v2594 = vunpack.c.h.b16 %v2500
  %v2595 = vunpack.c.l.b16 %v2501
  %v2596 = vunpack.c.h.b16 %v2501
  %v2597 = vunpack.c.l.b16 %v2502
  %v2598 = vunpack.c.h.b16 %v2502
  %v2599 = vunpack.c.l.b16 %v2503
  %v2600 = vunpack.c.h.b16 %v2503
  %v2601 = vunpack.c.l.b16 %v2504
  %v2602 = vunpack.c.h.b16 %v2504
  %v2603 = vunpack.c.l.b16 %v2505
  %v2604 = vunpack.c.h.b16 %v2505
  %v2605 = vunpack.c.l.b16 %v2506
  %v2606 = vunpack.c.h.b16 %v2506
  %v2607 = vunpack.c.l.b16 %v2507
  %v2608 = vunpack.c.h.b16 %v2507
  %v2609 = vunpack.c.l.b16 %v2508
  %v2610 = vunpack.c.h.b16 %v2508
  %v2611 = vpack.c.b16 %v2549, %v2547
  %v2612 = vpack.c.b16 %v2550, %v2548
  %v2613 = vpack.c.b16 %v2553, %v2551
  %v2614 = vpack.c.b16 %v2554, %v2552
  %v2615 = vpack.c.b16 %v2557, %v2555
  %v2616 = vpack.c.b16 %v2558, %v2556
  %v2617 = vpack.c.b16 %v2561, %v2559
  %v2618 = vpack.c.b16 %v2562, %v2560
  %v2619 = vpack.c.b16 %v2565, %v2563
  %v2620 = vpack.c.b16 %v2566, %v2564
  %v2621 = vpack.c.b16 %v2569, %v2567
  %v2622 = vpack.c.b16 %v2570, %v2568
  %v2623 = vpack.c.b16 %v2573, %v2571
  %v2624 = vpack.c.b16 %v2574, %v2572
  %v2625 = vpack.c.b16 %v2577, %v2575
  %v2626 = vpack.c.b16 %v2578, %v2576
  %v2627 = vpack.c.b16 %v2581, %v2579
  %v2628 = vpack.c.b16 %v2582, %v2580
  %v2629 = vpack.c.b16 %v2585, %v2583
  %v2630 = vpack.c.b16 %v2586, %v2584
  %v2631 = vpack.c.b16 %v2589, %v2587
  %v2632 = vpack.c.b16 %v2590, %v2588
  %v2633 = vpack.c.b16 %v2593, %v2591
  %v2634 = vpack.c.b16 %v2594, %v2592
  %v2635 = vpack.c.b16 %v2597, %v2595
  %v2636 = vpack.c.b16 %v2598, %v2596
  %v2637 = vpack.c.b16 %v2601, %v2599
  %v2638 = vpack.c.b16 %v2602, %v2600
  %v2639 = vpack.c.b16 %v2605, %v2603
  %v2640 = vpack.c.b16 %v2606, %v2604
  %v2641 = vpack.c.b16 %v2609, %v2607
  %v2642 = vpack.c.b16 %v2610, %v2608
  %2675 = vmatpush.bf16.msra.mxu0 %v2625
  %2676 = vmatpush.bf16.msra.mxu0 %v2623
  %2677 = vmatpush.bf16.msra.mxu0 %v2621
  %2678 = vmatpush.bf16.msra.mxu0 %v2619
  %2679 = vmatpush.bf16.msra.mxu0 %v2617
  %2680 = vmatpush.bf16.msra.mxu0 %v2615
  %2681 = vmatpush.bf16.msra.mxu0 %v2613
  %2682 = vmatpush.bf16.msra.mxu0 %v2611
  %2683 = vmatmul.bf16.gmra.mxu0 %v2475
  %v2684 = vpop.f32.mrf.mxu0
  %v2685 = vadd.f32 %v2511, %v2684
  %v2686 = vpop.f32.mrf.mxu0
  %v2687 = vadd.f32 %v2511, %v2686
  %2688 = vdwg.mxu0
  %2689 = vmatpush.bf16.msra.mxu0 %v2641
  %2690 = vmatpush.bf16.msra.mxu0 %v2639
  %2691 = vmatpush.bf16.msra.mxu0 %v2637
  %2692 = vmatpush.bf16.msra.mxu0 %v2635
  %2693 = vmatpush.bf16.msra.mxu0 %v2633
  %2694 = vmatpush.bf16.msra.mxu0 %v2631
  %2695 = vmatpush.bf16.msra.mxu0 %v2629
  %2696 = vmatpush.bf16.msra.mxu0 %v2627
  %2697 = vmatmul.bf16.gmra.mxu0 %v2476
  %v2698 = vpop.f32.mrf.mxu0
  %v2699 = vadd.f32 %v2685, %v2698
  %v2700 = vpop.f32.mrf.mxu0
  %v2701 = vadd.f32 %v2687, %v2700
  %2702 = vdwg.mxu0
  %2703 = vmatpush.bf16.msra.mxu0 %v2626
  %2704 = vmatpush.bf16.msra.mxu0 %v2624
  %2705 = vmatpush.bf16.msra.mxu0 %v2622
  %2706 = vmatpush.bf16.msra.mxu0 %v2620
  %2707 = vmatpush.bf16.msra.mxu0 %v2618
  %2708 = vmatpush.bf16.msra.mxu0 %v2616
  %2709 = vmatpush.bf16.msra.mxu0 %v2614
  %2710 = vmatpush.bf16.msra.mxu0 %v2612
  %2711 = vmatmul.bf16.gmra.mxu0 %v2475
  %v2712 = vpop.f32.mrf.mxu0
  %v2713 = vadd.f32 %v2512, %v2712
  %v2714 = vpop.f32.mrf.mxu0
  %v2715 = vadd.f32 %v2512, %v2714
  %2716 = vdwg.mxu0
  %2717 = vmatpush.bf16.msra.mxu0 %v2642
  %2718 = vmatpush.bf16.msra.mxu0 %v2640
  %2719 = vmatpush.bf16.msra.mxu0 %v2638
  %2720 = vmatpush.bf16.msra.mxu0 %v2636
  %2721 = vmatpush.bf16.msra.mxu0 %v2634
  %2722 = vmatpush.bf16.msra.mxu0 %v2632
  %2723 = vmatpush.bf16.msra.mxu0 %v2630
  %2724 = vmatpush.bf16.msra.mxu0 %v2628
  %2725 = vmatmul.bf16.gmra.mxu0 %v2476
  %v2726 = vpop.f32.mrf.mxu0
  %v2727 = vadd.f32 %v2713, %v2726
  %v2728 = vpop.f32.mrf.mxu0
  %v2729 = vadd.f32 %v2715, %v2728
  %2730 = vdwg.mxu0
  %v2731 = vadd.f32 %v2699, %v2727
  %2732 = vadd.xlane.f32.xlu0 %v2731
  %v2733 = vpop.xlane.xlu0 %2732
  %v2734 = vsel %vm90, %v2701, 0.0
  %v2735 = vsel %vm90, %v2729, 0.0
  %v2736 = vadd.f32 %v2734, %v2735
  %2737 = vadd.xlane.f32.xlu0 %v2736
  %v2738 = vpop.xlane.xlu0 %2737
  %v2739 = vmul.f32 %v2733, %v1146
  %v2740 = vmul.f32 %v2738, %v1146
  %v2741 = vmul.f32 %v2699, %v2699
  %v2742 = vmul.f32 %v2727, %v2727
  %v2743 = vmul.f32 %v2701, %v2701
  %v2744 = vmul.f32 %v2729, %v2729
  %v2745 = vadd.f32 %v2741, %v2742
  %2746 = vadd.xlane.f32.xlu0 %v2745
  %v2747 = vpop.xlane.xlu0 %2746
  %v2748 = vsel %vm90, %v2743, 0.0
  %v2749 = vsel %vm90, %v2744, 0.0
  %v2750 = vadd.f32 %v2748, %v2749
  %2751 = vadd.xlane.f32.xlu0 %v2750
  %v2752 = vpop.xlane.xlu0 %2751
  %v2753 = vmul.f32 %v2747, %v1146
  %v2754 = vmul.f32 %v2752, %v1146
  %v2755 = vmul.f32 %v2739, %v2739
  %v2756 = vmul.f32 %v2740, %v2740
  %v2757 = vsub.f32 %v2753, %v2755
  %v2758 = vsub.f32 %v2754, %v2756
  %v2759 = vsub.f32 %v2699, %v2739
  %v2760 = vsub.f32 %v2727, %v2739
  %v2761 = vsub.f32 %v2701, %v2740
  %v2762 = vsub.f32 %v2729, %v2740
  %v2763 = vadd.f32 %v2757, 1e-05
  %v2764 = vadd.f32 %v2758, 1e-05
  %v2765 = vrsqrt.pop %v2763
  %v2766 = vmul.f32 %v2765, %v2763
  %v2767 = vmul.f32 %v2766, %v2765
  %v2768 = vmul.f32 0.5, %v2767
  %v2769 = vsub.f32 1.5, %v2768
  %v2770 = vmul.f32 %v2765, %v2769
  %vm2771 = vweird.f32 %v2763
  %vm2772 = vweird.f32 %v2765
  %vm2773 = vmor %vm2771, %vm2772
  %v2774 = vsel %vm2773, %v2765, %v2770
  %v2775 = vrsqrt.pop %v2764
  %v2776 = vmul.f32 %v2775, %v2764
  %v2777 = vmul.f32 %v2776, %v2775
  %v2778 = vmul.f32 0.5, %v2777
  %v2779 = vsub.f32 1.5, %v2778
  %v2780 = vmul.f32 %v2775, %v2779
  %vm2781 = vweird.f32 %v2764
  %vm2782 = vweird.f32 %v2775
  %vm2783 = vmor %vm2781, %vm2782
  %v2784 = vsel %vm2783, %v2775, %v2780
  %v2785 = vmul.f32 %v2759, %v2774
  %v2786 = vmul.f32 %v2760, %v2774
  %v2787 = vmul.f32 %v2761, %v2784
  %v2788 = vmul.f32 %v2762, %v2784
  %v2789 = vld [vmem:[%s20] sm:$0x3]
  %v2791 = vperm.slane %v2789, 0
  %v2792 = vperm.slane %v2789, 1
  %v2795 = vmul.f32 %v2785, %v2791
  %v2796 = vmul.f32 %v2786, %v2792
  %v2797 = vmul.f32 %v2787, %v2791
  %v2798 = vmul.f32 %v2788, %v2792
  %v2799 = vld [vmem:[%s21] sm:$0x3]
  %v2801 = vperm.slane %v2799, 0
  %v2802 = vperm.slane %v2799, 1
  %v2805 = vadd.f32 %v2795, %v2801
  %v2806 = vadd.f32 %v2796, %v2802
  %v2807 = vadd.f32 %v2797, %v2801
  %v2808 = vadd.f32 %v2798, %v2802
  %v2809 = vpack.c.bf16 %v2807, %v2805
  %v2810 = vpack.c.bf16 %v2808, %v2806
  %v2811 = vld [vmem:[%s22] sm:$0xff]
  %v2812 = vld [vmem:[%s22 + $0x8] sm:$0xff]
  %v2813 = vld [vmem:[%s22 + $0x10] sm:$0xff]
  %v2814 = vld [vmem:[%s22 + $0x18] sm:$0xff]
  %v2815 = vld [vmem:[%s22 + $0x20] sm:$0xff]
  %v2816 = vld [vmem:[%s22 + $0x28] sm:$0xff]
  %v2817 = vld [vmem:[%s22 + $0x30] sm:$0xff]
  %v2818 = vld [vmem:[%s22 + $0x38] sm:$0xff]
  %v2819 = vld [vmem:[%s22 + $0x40] sm:$0xff]
  %v2820 = vld [vmem:[%s22 + $0x48] sm:$0xff]
  %v2821 = vld [vmem:[%s22 + $0x50] sm:$0xff]
  %v2822 = vld [vmem:[%s22 + $0x58] sm:$0xff]
  %v2823 = vld [vmem:[%s22 + $0x60] sm:$0xff]
  %v2824 = vld [vmem:[%s22 + $0x68] sm:$0xff]
  %v2825 = vld [vmem:[%s22 + $0x70] sm:$0xff]
  %v2826 = vld [vmem:[%s22 + $0x78] sm:$0xff]
  %v2827 = vld [vmem:[%s22 + $0x80] sm:$0xff]
  %v2828 = vld [vmem:[%s22 + $0x88] sm:$0xff]
  %v2829 = vld [vmem:[%s22 + $0x90] sm:$0xff]
  %v2830 = vld [vmem:[%s22 + $0x98] sm:$0xff]
  %v2831 = vld [vmem:[%s22 + $0xa0] sm:$0xff]
  %v2832 = vld [vmem:[%s22 + $0xa8] sm:$0xff]
  %v2833 = vld [vmem:[%s22 + $0xb0] sm:$0xff]
  %v2834 = vld [vmem:[%s22 + $0xb8] sm:$0xff]
  %v2835 = vld [vmem:[%s22 + $0xc0] sm:$0xff]
  %v2836 = vld [vmem:[%s22 + $0xc8] sm:$0xff]
  %v2837 = vld [vmem:[%s22 + $0xd0] sm:$0xff]
  %v2838 = vld [vmem:[%s22 + $0xd8] sm:$0xff]
  %v2839 = vld [vmem:[%s22 + $0xe0] sm:$0xff]
  %v2840 = vld [vmem:[%s22 + $0xe8] sm:$0xff]
  %v2841 = vld [vmem:[%s22 + $0xf0] sm:$0xff]
  %v2842 = vld [vmem:[%s22 + $0xf8] sm:$0xff]
  %v2843 = vld [vmem:[%s23] sm:$0x3]
  %v2845 = vperm.slane %v2843, 0
  %v2846 = vperm.slane %v2843, 1
  %v2881 = vunpack.c.l.b16 %v2811
  %v2882 = vunpack.c.h.b16 %v2811
  %v2883 = vunpack.c.l.b16 %v2812
  %v2884 = vunpack.c.h.b16 %v2812
  %v2885 = vunpack.c.l.b16 %v2813
  %v2886 = vunpack.c.h.b16 %v2813
  %v2887 = vunpack.c.l.b16 %v2814
  %v2888 = vunpack.c.h.b16 %v2814
  %v2889 = vunpack.c.l.b16 %v2815
  %v2890 = vunpack.c.h.b16 %v2815
  %v2891 = vunpack.c.l.b16 %v2816
  %v2892 = vunpack.c.h.b16 %v2816
  %v2893 = vunpack.c.l.b16 %v2817
  %v2894 = vunpack.c.h.b16 %v2817
  %v2895 = vunpack.c.l.b16 %v2818
  %v2896 = vunpack.c.h.b16 %v2818
  %v2897 = vunpack.c.l.b16 %v2819
  %v2898 = vunpack.c.h.b16 %v2819
  %v2899 = vunpack.c.l.b16 %v2820
  %v2900 = vunpack.c.h.b16 %v2820
  %v2901 = vunpack.c.l.b16 %v2821
  %v2902 = vunpack.c.h.b16 %v2821
  %v2903 = vunpack.c.l.b16 %v2822
  %v2904 = vunpack.c.h.b16 %v2822
  %v2905 = vunpack.c.l.b16 %v2823
  %v2906 = vunpack.c.h.b16 %v2823
  %v2907 = vunpack.c.l.b16 %v2824
  %v2908 = vunpack.c.h.b16 %v2824
  %v2909 = vunpack.c.l.b16 %v2825
  %v2910 = vunpack.c.h.b16 %v2825
  %v2911 = vunpack.c.l.b16 %v2826
  %v2912 = vunpack.c.h.b16 %v2826
  %v2913 = vunpack.c.l.b16 %v2827
  %v2914 = vunpack.c.h.b16 %v2827
  %v2915 = vunpack.c.l.b16 %v2828
  %v2916 = vunpack.c.h.b16 %v2828
  %v2917 = vunpack.c.l.b16 %v2829
  %v2918 = vunpack.c.h.b16 %v2829
  %v2919 = vunpack.c.l.b16 %v2830
  %v2920 = vunpack.c.h.b16 %v2830
  %v2921 = vunpack.c.l.b16 %v2831
  %v2922 = vunpack.c.h.b16 %v2831
  %v2923 = vunpack.c.l.b16 %v2832
  %v2924 = vunpack.c.h.b16 %v2832
  %v2925 = vunpack.c.l.b16 %v2833
  %v2926 = vunpack.c.h.b16 %v2833
  %v2927 = vunpack.c.l.b16 %v2834
  %v2928 = vunpack.c.h.b16 %v2834
  %v2929 = vunpack.c.l.b16 %v2835
  %v2930 = vunpack.c.h.b16 %v2835
  %v2931 = vunpack.c.l.b16 %v2836
  %v2932 = vunpack.c.h.b16 %v2836
  %v2933 = vunpack.c.l.b16 %v2837
  %v2934 = vunpack.c.h.b16 %v2837
  %v2935 = vunpack.c.l.b16 %v2838
  %v2936 = vunpack.c.h.b16 %v2838
  %v2937 = vunpack.c.l.b16 %v2839
  %v2938 = vunpack.c.h.b16 %v2839
  %v2939 = vunpack.c.l.b16 %v2840
  %v2940 = vunpack.c.h.b16 %v2840
  %v2941 = vunpack.c.l.b16 %v2841
  %v2942 = vunpack.c.h.b16 %v2841
  %v2943 = vunpack.c.l.b16 %v2842
  %v2944 = vunpack.c.h.b16 %v2842
  %v2945 = vpack.c.b16 %v2883, %v2881
  %v2946 = vpack.c.b16 %v2884, %v2882
  %v2947 = vpack.c.b16 %v2887, %v2885
  %v2948 = vpack.c.b16 %v2888, %v2886
  %v2949 = vpack.c.b16 %v2891, %v2889
  %v2950 = vpack.c.b16 %v2892, %v2890
  %v2951 = vpack.c.b16 %v2895, %v2893
  %v2952 = vpack.c.b16 %v2896, %v2894
  %v2953 = vpack.c.b16 %v2899, %v2897
  %v2954 = vpack.c.b16 %v2900, %v2898
  %v2955 = vpack.c.b16 %v2903, %v2901
  %v2956 = vpack.c.b16 %v2904, %v2902
  %v2957 = vpack.c.b16 %v2907, %v2905
  %v2958 = vpack.c.b16 %v2908, %v2906
  %v2959 = vpack.c.b16 %v2911, %v2909
  %v2960 = vpack.c.b16 %v2912, %v2910
  %v2961 = vpack.c.b16 %v2915, %v2913
  %v2962 = vpack.c.b16 %v2916, %v2914
  %v2963 = vpack.c.b16 %v2919, %v2917
  %v2964 = vpack.c.b16 %v2920, %v2918
  %v2965 = vpack.c.b16 %v2923, %v2921
  %v2966 = vpack.c.b16 %v2924, %v2922
  %v2967 = vpack.c.b16 %v2927, %v2925
  %v2968 = vpack.c.b16 %v2928, %v2926
  %v2969 = vpack.c.b16 %v2931, %v2929
  %v2970 = vpack.c.b16 %v2932, %v2930
  %v2971 = vpack.c.b16 %v2935, %v2933
  %v2972 = vpack.c.b16 %v2936, %v2934
  %v2973 = vpack.c.b16 %v2939, %v2937
  %v2974 = vpack.c.b16 %v2940, %v2938
  %v2975 = vpack.c.b16 %v2943, %v2941
  %v2976 = vpack.c.b16 %v2944, %v2942
  %3009 = vmatpush.bf16.msra.mxu0 %v2959
  %3010 = vmatpush.bf16.msra.mxu0 %v2957
  %3011 = vmatpush.bf16.msra.mxu0 %v2955
  %3012 = vmatpush.bf16.msra.mxu0 %v2953
  %3013 = vmatpush.bf16.msra.mxu0 %v2951
  %3014 = vmatpush.bf16.msra.mxu0 %v2949
  %3015 = vmatpush.bf16.msra.mxu0 %v2947
  %3016 = vmatpush.bf16.msra.mxu0 %v2945
  %3017 = vmatmul.bf16.gmra.mxu0 %v2809
  %v3018 = vpop.f32.mrf.mxu0
  %v3019 = vadd.f32 %v2845, %v3018
  %v3020 = vpop.f32.mrf.mxu0
  %v3021 = vadd.f32 %v2845, %v3020
  %3022 = vdwg.mxu0
  %3023 = vmatpush.bf16.msra.mxu0 %v2975
  %3024 = vmatpush.bf16.msra.mxu0 %v2973
  %3025 = vmatpush.bf16.msra.mxu0 %v2971
  %3026 = vmatpush.bf16.msra.mxu0 %v2969
  %3027 = vmatpush.bf16.msra.mxu0 %v2967
  %3028 = vmatpush.bf16.msra.mxu0 %v2965
  %3029 = vmatpush.bf16.msra.mxu0 %v2963
  %3030 = vmatpush.bf16.msra.mxu0 %v2961
  %3031 = vmatmul.bf16.gmra.mxu0 %v2810
  %v3032 = vpop.f32.mrf.mxu0
  %v3033 = vadd.f32 %v3019, %v3032
  %v3034 = vpop.f32.mrf.mxu0
  %v3035 = vadd.f32 %v3021, %v3034
  %3036 = vdwg.mxu0
  %3037 = vmatpush.bf16.msra.mxu0 %v2960
  %3038 = vmatpush.bf16.msra.mxu0 %v2958
  %3039 = vmatpush.bf16.msra.mxu0 %v2956
  %3040 = vmatpush.bf16.msra.mxu0 %v2954
  %3041 = vmatpush.bf16.msra.mxu0 %v2952
  %3042 = vmatpush.bf16.msra.mxu0 %v2950
  %3043 = vmatpush.bf16.msra.mxu0 %v2948
  %3044 = vmatpush.bf16.msra.mxu0 %v2946
  %3045 = vmatmul.bf16.gmra.mxu0 %v2809
  %v3046 = vpop.f32.mrf.mxu0
  %v3047 = vadd.f32 %v2846, %v3046
  %v3048 = vpop.f32.mrf.mxu0
  %v3049 = vadd.f32 %v2846, %v3048
  %3050 = vdwg.mxu0
  %3051 = vmatpush.bf16.msra.mxu0 %v2976
  %3052 = vmatpush.bf16.msra.mxu0 %v2974
  %3053 = vmatpush.bf16.msra.mxu0 %v2972
  %3054 = vmatpush.bf16.msra.mxu0 %v2970
  %3055 = vmatpush.bf16.msra.mxu0 %v2968
  %3056 = vmatpush.bf16.msra.mxu0 %v2966
  %3057 = vmatpush.bf16.msra.mxu0 %v2964
  %3058 = vmatpush.bf16.msra.mxu0 %v2962
  %3059 = vmatmul.bf16.gmra.mxu0 %v2810
  %v3060 = vpop.f32.mrf.mxu0
  %v3061 = vadd.f32 %v3047, %v3060
  %v3062 = vpop.f32.mrf.mxu0
  %v3063 = vadd.f32 %v3049, %v3062
  %3064 = vdwg.mxu0
  %v3065 = vld [vmem:[%s3] sm:$0xff]
  %v3066 = vld [vmem:[%s3 + $0x8] sm:$0x3]
  %v3068 = vsel %vm83, %v3065, 0
  %v3071 = vsel %vm83, %v3066, 0
  %v3074 = vsel %vm90, %v3035, 0
  %v3077 = vsel %vm90, %v3063, 0
  %3079 = vmatpush.msra.mxu0 0.0
  %3080 = vmatpush.msra.mxu0 0.0
  %3081 = vmatpush.msra.mxu0 0.0
  %3082 = vmatpush.msra.mxu0 0.0
  %3083 = vmatpush.msra.mxu0 0.0
  %3084 = vmatpush.msra.mxu0 0.0
  %3085 = vmatpush.msra.mxu0 0.0
  %3086 = vmatpush.msra.mxu0 0.0
  %3087 = vmatpush.msra.mxu0 0.0
  %3088 = vmatpush.msra.mxu0 0.0
  %3089 = vmatpush.msra.mxu0 0.0
  %3090 = vmatpush.msra.mxu0 0.0
  %3091 = vmatpush.msra.mxu0 0.0
  %3092 = vmatpush.msra.mxu0 0.0
  %3093 = vmatpush.msra.mxu0 %v3074
  %3094 = vmatpush.msra.mxu0 %v3033
  %3095 = vmatmul.f32.gmra.mxu0 %v3068
  %v3096 = vpop.f32.mrf.mxu0
  %v3097 = vadd.f32 0.0, %v3096
  %3098 = vmatmul.f32.gmra.mxu0 %v3071
  %v3099 = vpop.f32.mrf.mxu0
  %v3100 = vadd.f32 0.0, %v3099
  %3101 = vdwg.mxu0
  %3102 = vmatpush.msra.mxu0 0.0
  %3103 = vmatpush.msra.mxu0 0.0
  %3104 = vmatpush.msra.mxu0 0.0
  %3105 = vmatpush.msra.mxu0 0.0
  %3106 = vmatpush.msra.mxu0 0.0
  %3107 = vmatpush.msra.mxu0 0.0
  %3108 = vmatpush.msra.mxu0 0.0
  %3109 = vmatpush.msra.mxu0 0.0
  %3110 = vmatpush.msra.mxu0 0.0
  %3111 = vmatpush.msra.mxu0 0.0
  %3112 = vmatpush.msra.mxu0 0.0
  %3113 = vmatpush.msra.mxu0 0.0
  %3114 = vmatpush.msra.mxu0 0.0
  %3115 = vmatpush.msra.mxu0 0.0
  %3116 = vmatpush.msra.mxu0 %v3077
  %3117 = vmatpush.msra.mxu0 %v3061
  %3118 = vmatmul.f32.gmra.mxu0 %v3068
  %v3119 = vpop.f32.mrf.mxu0
  %v3120 = vadd.f32 0.0, %v3119
  %3121 = vmatmul.f32.gmra.mxu0 %v3071
  %v3122 = vpop.f32.mrf.mxu0
  %v3123 = vadd.f32 0.0, %v3122
  %3124 = vdwg.mxu0
  %3125 = vst [vmem:[%s24] sm:$0xff] %v3097
  %3126 = vst [vmem:[%s24 + $0x8] sm:$0xff] %v3120
  %3127 = vst [vmem:[%s24 + $0x10] sm:$0x3] %v3100
  %3128 = vst [vmem:[%s24 + $0x18] sm:$0x3] %v3123
  // Predicated region
  $region98: #{transition_forward.1} parent=0 // pred_check
    _
  $region99: #{transition_forward.1} parent=0 // pred_check_branch
    %3130 = sbr.rel (0) target = $region101
  $region100: #{transition_forward.1} parent=0 // pred_region
    _
  $region101: #{transition_forward.1} parent=0 // pred_fallthru
    _
  // Predicated region
  $region102: #{transition_forward.1} parent=0 // pred_check
    _
  $region103: #{transition_forward.1} parent=0 // pred_check_branch
    %3132 = sbr.rel (0) target = $region105
  $region104: #{transition_forward.1} parent=0 // pred_region
    _
  $region105: #{transition_forward.1} parent=0 // pred_fallthru
    _

</llo_original>
